<compile_context>
chip_gen: v6e
topology: v6e:2x2x1
jax: 0.10.0
libtpu: 0.0.40
codegen_flags: <defaults>
</compile_context>

<pallas_src>
import functools

import jax
import jax.numpy as jnp
from jax.experimental import pallas as pl
from jax.experimental.pallas import tpu as pltpu


# ----------------------------- kernel helpers ------------------------------ #
def _group_norm_silu(h, m, gamma, beta):
    """GroupNorm(eps=1e-5, affine) + SiLU on a (C, HW) f32 tile.

    m: (C, C) host-precomputed "same group" averaging matrix, already scaled
       by 1/(HW * channels_per_group).  One-pass stats: one (C,C)x(C,2) dot
       yields [mean, E[x^2]] per channel; var = E[x^2] - mean^2 (f32).
    """
    stats = jnp.concatenate(
        [jnp.sum(h, axis=1, keepdims=True),
         jnp.sum(h * h, axis=1, keepdims=True)], axis=1)            # (C, 2)
    gstats = jnp.dot(m, stats,
                     precision=jax.lax.Precision.HIGHEST,           # keep f32
                     preferred_element_type=jnp.float32)            # (C, 2)
    mean = gstats[:, 0:1]
    var = jnp.maximum(gstats[:, 1:2] - mean * mean, 0.0)
    hn = (h - mean) * jax.lax.rsqrt(var + 1e-5) * gamma + beta
    return hn * jax.nn.sigmoid(hn)                                   # SiLU (f32)


def _conv3x3_same(h, w_ref, bias, masks, W):
    """3x3 conv, padding=1, on a (Cin, HW) f32 tile -> (Cout, HW) f32.

    Accumulated as 3 row-group matmuls of K = 3*Cin (one per ky): the 3
    column-shifted copies of the row-shifted input are lane-rolled (XLU),
    boundary-masked in f32, cast to bf16 and concatenated along the channel
    axis; w_ref is the host-packed bf16 (3, Cout, 3*Cin) weight with tap
    order [kx=0 | kx=1 | kx=2] channels inside each row group.
    """
    HW = h.shape[1]
    mt, mb, ml, mr = masks                                           # (1, HW) f32
    out = None
    for ky in range(3):
        dy = ky - 1
        if dy == 0:
            base = h
        else:
            # base[:, r] = h[:, (r + dy*W) mod HW]; wrapped rows masked to 0.
            base = pltpu.roll(h, shift=(-dy * W) % HW, axis=1)
            base = base * (mt if dy < 0 else mb)
        parts = []
        for kx in range(3):
            dx = kx - 1
            if dx == 0:
                p = base
            else:
                # Horizontal mask also zeroes every lane where the vertical
                # mask index shifted by dx would disagree, so masking
                # vertical-then-horizontal is exactly the per-tap mask.
                p = pltpu.roll(base, shift=(-dx) % HW, axis=1)
                p = p * (ml if dx < 0 else mr)
            parts.append(p.astype(jnp.bfloat16))                    # MXU operand
        patches = jnp.concatenate(parts, axis=0)                    # (3*Cin, HW) bf16
        d = jnp.dot(w_ref[ky], patches,
                    preferred_element_type=jnp.float32)             # f32 accumulate
        out = d if out is None else out + d
    return out + bias


# --------------------------------- kernel ---------------------------------- #
def _resnet_block_kernel(*refs, W, has_skip):
    if has_skip:
        (x_ref, cp_ref, mk_ref, m1_ref, g1_ref, b1_ref, w1_ref, cb1_ref,
         m2_ref, g2_ref, b2_ref, w2_ref, cb2_ref, ws_ref, bs_ref, o_ref) = refs
    else:
        (x_ref, cp_ref, mk_ref, m1_ref, g1_ref, b1_ref, w1_ref, cb1_ref,
         m2_ref, g2_ref, b2_ref, w2_ref, cb2_ref, o_ref) = refs
        ws_ref = bs_ref = None

    x2 = x_ref[0].astype(jnp.float32)                                # (Cin, HW)

    # host-precomputed boundary masks (fetched once; constant block index)
    mk = mk_ref[...]                                                 # (4, HW) f32
    masks = (mk[0:1, :], mk[1:2, :], mk[2:3, :], mk[3:4, :])

    # net1: GroupNorm -> SiLU -> Conv3x3
    h = _group_norm_silu(x2, m1_ref[...], g1_ref[...], b1_ref[...])
    h = _conv3x3_same(h, w1_ref, cb1_ref[...], masks, W)             # (Cout, HW)

    # conditioning: Linear(D -> Cout, bias=False) precomputed in the wrapper
    h = h + cp_ref[0]                                                # (Cout, 1) broadcast

    # net2: GroupNorm -> SiLU -> Conv3x3 (dropout_prob == 0.0 -> no dropout layer)
    h = _group_norm_silu(h, m2_ref[...], g2_ref[...], b2_ref[...])
    h = _conv3x3_same(h, w2_ref, cb2_ref[...], masks, W)             # (Cout, HW)

    # skip path: identity when Cin == Cout (module creates no skip_conv),
    # else a 1x1 conv as one bf16 matmul with f32 accumulate.
    if has_skip:
        skip = jnp.dot(ws_ref[...], x2.astype(jnp.bfloat16),
                       preferred_element_type=jnp.float32) + bs_ref[...]
    else:
        skip = x2

    o_ref[0] = (skip + h).astype(o_ref.dtype)


# -------------------------------- wrapper ----------------------------------- #
def _group_avg_matrix(C, groups, hw):
    cpg = C // groups
    gid = jnp.arange(C, dtype=jnp.int32) // cpg
    return (gid[:, None] == gid[None, :]).astype(jnp.float32) / float(hw * cpg)


def _boundary_masks(H, W):
    r = jnp.arange(H * W, dtype=jnp.int32)
    xi, yi = r % W, r // W
    return jnp.stack([(yi >= 1), (yi < H - 1), (xi >= 1), (xi < W - 1)]
                     ).astype(jnp.float32)                           # (4, HW)


def _pack3x3_bf16(w_oihw):
    """(Co, Ci, 3, 3) -> bf16 (3, Co, 3*Ci): row group ky leading, taps [kx|Ci]."""
    co, ci = w_oihw.shape[0], w_oihw.shape[1]
    return jnp.transpose(w_oihw, (2, 0, 3, 1)).reshape(3, co, 3 * ci
                                                       ).astype(jnp.bfloat16)


def _vmem_budget_bytes():
    """Generation-aware scoped-VMEM budget (~75% of physical, capped)."""
    try:
        cap = int(pltpu.get_tpu_info().vmem_capacity_bytes)
    except Exception:
        cap = 64 * 1024 * 1024          # conservative (v7x-sized) fallback
    return max(32 * 1024 * 1024, min(100 * 1024 * 1024, (cap * 3) // 4))


def resnet_block_forward(x_nchw, condition, params, *, norm_groups):
    """x_nchw: (N, Cin, H, W), condition: (N, D). Returns (N, Cout, H, W)."""
    N, Cin, H, W = x_nchw.shape
    HW = H * W
    Cout = params["w1_oihw"].shape[0]
    has_skip = Cin != Cout

    # --- plain-JAX glue: flatten spatial, pack weights, project condition ---
    x3 = x_nchw.reshape(N, Cin, HW)                                  # NCHW -> (N, C, HW)
    condp = (condition @ params["wc_torch"].T).reshape(N, Cout, 1)   # batched cond_proj
    condp = condp.astype(jnp.float32)

    masks = _boundary_masks(H, W)
    m1 = _group_avg_matrix(Cin, norm_groups, HW)
    m2 = _group_avg_matrix(Cout, norm_groups, HW)
    g1 = params["g1"].reshape(Cin, 1)
    b1 = params["b1"].reshape(Cin, 1)
    w1 = _pack3x3_bf16(params["w1_oihw"])                            # bf16 MXU weights
    cb1 = params["cb1"].reshape(Cout, 1)
    g2 = params["g2"].reshape(Cout, 1)
    b2 = params["b2"].reshape(Cout, 1)
    w2 = _pack3x3_bf16(params["w2_oihw"])
    cb2 = params["cb2"].reshape(Cout, 1)

    operands = [x3, condp, masks, m1, g1, b1, w1, cb1, m2, g2, b2, w2, cb2]
    if has_skip:
        operands += [params["ws_oihw"][:, :, 0, 0].astype(jnp.bfloat16),
                     params["bs"].reshape(Cout, 1)]

    kernel = functools.partial(_resnet_block_kernel, W=W, has_skip=has_skip)

    # Advisory cost estimate (per whole call): two 3x3 convs (+ optional 1x1
    # skip) dominate; two SiLU sigmoids are the transcendentals.
    flops = 2 * N * HW * Cout * 9 * (Cin + Cout)
    if has_skip:
        flops += 2 * N * HW * Cout * Cin
    transcendentals = N * HW * (Cin + Cout)
    bytes_accessed = N * Cout * HW * x_nchw.dtype.itemsize
    bytes_accessed += sum(int(op.size) * op.dtype.itemsize for op in operands)
    cost = pl.CostEstimate(flops=int(flops),
                           transcendentals=int(transcendentals),
                           bytes_accessed=int(bytes_accessed))

    def _call(single_buffer_consts):
        def const(shape):
            idx = lambda b, _z=(0,) * len(shape): _z
            if single_buffer_consts:
                # constant index_map -> fetched once; one buffer halves the
                # weight-side VMEM footprint (most valuable on v7x's 64 MiB).
                return pl.BlockSpec(shape, idx, pipeline_mode=pl.Buffered(1))
            return pl.BlockSpec(shape, idx)

        in_specs = [
            pl.BlockSpec((1, Cin, HW), lambda b: (b, 0, 0)),         # x (lane-dense)
            pl.BlockSpec((1, Cout, 1), lambda b: (b, 0, 0)),         # projected condition
            const((4, HW)),                                          # boundary masks
            const((Cin, Cin)), const((Cin, 1)), const((Cin, 1)),     # M1, g1, b1
            const((3, Cout, 3 * Cin)), const((Cout, 1)),             # w1 (row groups), cb1
            const((Cout, Cout)), const((Cout, 1)), const((Cout, 1)), # M2, g2, b2
            const((3, Cout, 3 * Cout)), const((Cout, 1)),            # w2 (row groups), cb2
        ]
        if has_skip:
            in_specs += [const((Cout, Cin)), const((Cout, 1))]       # ws, bs

        return pl.pallas_call(
            kernel,
            out_shape=jax.ShapeDtypeStruct((N, Cout, HW), x_nchw.dtype),
            grid=(N,),
            in_specs=in_specs,
            out_specs=pl.BlockSpec((1, Cout, HW), lambda b: (b, 0, 0)),
            compiler_params=pltpu.CompilerParams(
                dimension_semantics=("parallel",),
                vmem_limit_bytes=_vmem_budget_bytes(),
            ),
            cost_estimate=cost,
        )(*operands)

    try:
        out = _call(True)
    except Exception:
        # pl.Buffered(1) single-buffering not available on this jax version:
        # fall back to default double-buffered constant operands.
        out = _call(False)

    return out.reshape(N, Cout, H, W)


# --------------------------- pure-JAX reference ----------------------------- #
def ref_forward(x, cond, p, groups):
    eps = 1e-5

    def gn(h, gamma, beta):
        N, C, H, W = h.shape
        hg = h.reshape(N, groups, -1)
        m = jnp.mean(hg, axis=-1, keepdims=True)
        v = jnp.mean((hg - m) ** 2, axis=-1, keepdims=True)
        hn = ((hg - m) * jax.lax.rsqrt(v + eps)).reshape(N, C, H, W)
        return hn * gamma[None, :, None, None] + beta[None, :, None, None]

    silu = lambda t: t * jax.nn.sigmoid(t)

    def conv(h, w, b, pad):
        o = jax.lax.conv_general_dilated(h, w, (1, 1), [(pad, pad), (pad, pad)],
                                         dimension_numbers=("NCHW", "OIHW", "NCHW"))
        return o + b[None, :, None, None]

    h = conv(silu(gn(x, p["g1"], p["b1"])), p["w1_oihw"], p["cb1"], 1)
    h = h + (cond @ p["wc_torch"].T)[:, :, None, None]
    h = conv(silu(gn(h, p["g2"], p["b2"])), p["w2_oihw"], p["cb2"], 1)
    xs = conv(x, p["ws_oihw"], p["bs"], 0) if x.shape[1] != h.shape[1] else x
    return xs + h


# ----------------------------------- test ----------------------------------- #
def _make_params(key, Cin, Cout, D):
    # Deterministic synthetic parameters (shapes from the module __init__).
    # NOTE: the PyTorch module zero-inits cond_proj and the second conv
    # (zero_init); we use small nonzero values so every branch of the kernel
    # is numerically exercised.
    ks = jax.random.split(key, 11)
    p = dict(
        g1=1.0 + 0.1 * jax.random.normal(ks[0], (Cin,), jnp.float32),
        b1=0.1 * jax.random.normal(ks[1], (Cin,), jnp.float32),
        w1_oihw=0.1 * jax.random.normal(ks[2], (Cout, Cin, 3, 3), jnp.float32),
        cb1=0.1 * jax.random.normal(ks[3], (Cout,), jnp.float32),
        wc_torch=0.1 * jax.random.normal(ks[4], (Cout, D), jnp.float32),
        g2=1.0 + 0.1 * jax.random.normal(ks[5], (Cout,), jnp.float32),
        b2=0.1 * jax.random.normal(ks[6], (Cout,), jnp.float32),
        w2_oihw=0.1 * jax.random.normal(ks[7], (Cout, Cout, 3, 3), jnp.float32),
        cb2=0.1 * jax.random.normal(ks[8], (Cout,), jnp.float32),
    )
    if Cin != Cout:
        p["ws_oihw"] = 0.1 * jax.random.normal(ks[9], (Cout, Cin, 1, 1), jnp.float32)
        p["bs"] = 0.1 * jax.random.normal(ks[10], (Cout,), jnp.float32)
    return p


if __name__ == "__main__":
    key = jax.random.PRNGKey(0)
    # case 1: Cin != Cout -> exercises the 1x1-conv skip path
    # case 2: Cin == Cout -> identity skip (module creates no skip_conv)
    cases = [(2, 8, 16, 16, 16, 16, 4),
             (2, 16, 16, 16, 16, 16, 4)]
    for (N, Cin, Cout, H, W, D, G) in cases:
        key, kx, kc, kp = jax.random.split(key, 4)
        x = jax.random.normal(kx, (N, Cin, H, W), jnp.float32)
        condition = jax.random.normal(kc, (N, D), jnp.float32)
        params = _make_params(kp, Cin, Cout, D)

        out = jax.block_until_ready(
            resnet_block_forward(x, condition, params, norm_groups=G))
        ref = ref_forward(x, condition, params, G)

        err = float(jnp.max(jnp.abs(out - ref)))
        assert out.shape == (N, Cout, H, W), out.shape
        # bf16 MXU operands -> expect ~1e-2 max abs error vs the f32 reference;
        # a dropped/reordered boundary mask would show up as ~3e-1 here, an
        # order of magnitude above this tolerance.
        assert err < 5e-2, f"max abs err {err}"
    print("KERNEL_OK")
</pallas_src>

<mosaic_0001>
module attributes {stable_mosaic.version = 11 : i64} {
  func.func @_resnet_block_kernel(%arg0: i32, %arg1: memref<1x8x256xf32, #tpu.memory_space<vmem>>, %arg2: memref<1x16x1xf32, #tpu.memory_space<vmem>>, %arg3: memref<4x256xf32, #tpu.memory_space<vmem>>, %arg4: memref<8x8xf32, #tpu.memory_space<vmem>>, %arg5: memref<8x1xf32, #tpu.memory_space<vmem>>, %arg6: memref<8x1xf32, #tpu.memory_space<vmem>>, %arg7: memref<3x16x24xbf16, #tpu.memory_space<vmem>>, %arg8: memref<16x1xf32, #tpu.memory_space<vmem>>, %arg9: memref<16x16xf32, #tpu.memory_space<vmem>>, %arg10: memref<16x1xf32, #tpu.memory_space<vmem>>, %arg11: memref<16x1xf32, #tpu.memory_space<vmem>>, %arg12: memref<3x16x48xbf16, #tpu.memory_space<vmem>>, %arg13: memref<16x1xf32, #tpu.memory_space<vmem>>, %arg14: memref<16x8xbf16, #tpu.memory_space<vmem>>, %arg15: memref<16x1xf32, #tpu.memory_space<vmem>>, %arg16: memref<1x16x256xf32, #tpu.memory_space<vmem>>) attributes {dimension_semantics = [#tpu.dimension_semantics<parallel>], iteration_bounds = array<i64: 2>, scalar_prefetch = 0 : i64, scratch_operands = 0 : i64, tpu.core_type = #tpu.core_type<tc>, window_params = [{transform_indices = @transform_0, window_bounds = array<i64: 1, 8, 256>}, {transform_indices = @transform_1, window_bounds = array<i64: 1, 16, 1>}, {pipeline_mode = #tpu.pipeline_mode<synchronous>, transform_indices = @transform_2, window_bounds = array<i64: 4, 256>}, {pipeline_mode = #tpu.pipeline_mode<synchronous>, transform_indices = @transform_3, window_bounds = array<i64: 8, 8>}, {pipeline_mode = #tpu.pipeline_mode<synchronous>, transform_indices = @transform_4, window_bounds = array<i64: 8, 1>}, {pipeline_mode = #tpu.pipeline_mode<synchronous>, transform_indices = @transform_5, window_bounds = array<i64: 8, 1>}, {pipeline_mode = #tpu.pipeline_mode<synchronous>, transform_indices = @transform_6, window_bounds = array<i64: 3, 16, 24>}, {pipeline_mode = #tpu.pipeline_mode<synchronous>, transform_indices = @transform_7, window_bounds = array<i64: 16, 1>}, {pipeline_mode = #tpu.pipeline_mode<synchronous>, transform_indices = @transform_8, window_bounds = array<i64: 16, 16>}, {pipeline_mode = #tpu.pipeline_mode<synchronous>, transform_indices = @transform_9, window_bounds = array<i64: 16, 1>}, {pipeline_mode = #tpu.pipeline_mode<synchronous>, transform_indices = @transform_10, window_bounds = array<i64: 16, 1>}, {pipeline_mode = #tpu.pipeline_mode<synchronous>, transform_indices = @transform_11, window_bounds = array<i64: 3, 16, 48>}, {pipeline_mode = #tpu.pipeline_mode<synchronous>, transform_indices = @transform_12, window_bounds = array<i64: 16, 1>}, {pipeline_mode = #tpu.pipeline_mode<synchronous>, transform_indices = @transform_13, window_bounds = array<i64: 16, 8>}, {pipeline_mode = #tpu.pipeline_mode<synchronous>, transform_indices = @transform_14, window_bounds = array<i64: 16, 1>}, {transform_indices = @transform_15, window_bounds = array<i64: 1, 16, 256>}]} {
    %c0 = arith.constant 0 : index
    %c0_0 = arith.constant 0 : index
    %c0_1 = arith.constant 0 : index
    %0 = vector.load %arg1[%c0, %c0_0, %c0_1] : memref<1x8x256xf32, #tpu.memory_space<vmem>>, vector<1x8x256xf32>
    %1 = vector.shape_cast %0 : vector<1x8x256xf32> to vector<8x256xf32>
    %c0_2 = arith.constant 0 : index
    %c0_3 = arith.constant 0 : index
    %2 = vector.load %arg3[%c0_2, %c0_3] : memref<4x256xf32, #tpu.memory_space<vmem>>, vector<4x256xf32>
    %3 = vector.extract_strided_slice %2 {offsets = [0, 0], sizes = [1, 256], strides = [1, 1]} : vector<4x256xf32> to vector<1x256xf32>
    %4 = vector.extract_strided_slice %2 {offsets = [1, 0], sizes = [1, 256], strides = [1, 1]} : vector<4x256xf32> to vector<1x256xf32>
    %5 = vector.extract_strided_slice %2 {offsets = [2, 0], sizes = [1, 256], strides = [1, 1]} : vector<4x256xf32> to vector<1x256xf32>
    %6 = vector.extract_strided_slice %2 {offsets = [3, 0], sizes = [1, 256], strides = [1, 1]} : vector<4x256xf32> to vector<1x256xf32>
    %c0_4 = arith.constant 0 : index
    %c0_5 = arith.constant 0 : index
    %7 = vector.load %arg4[%c0_4, %c0_5] : memref<8x8xf32, #tpu.memory_space<vmem>>, vector<8x8xf32>
    %c0_6 = arith.constant 0 : index
    %c0_7 = arith.constant 0 : index
    %8 = vector.load %arg5[%c0_6, %c0_7] : memref<8x1xf32, #tpu.memory_space<vmem>>, vector<8x1xf32>
    %c0_8 = arith.constant 0 : index
    %c0_9 = arith.constant 0 : index
    %9 = vector.load %arg6[%c0_8, %c0_9] : memref<8x1xf32, #tpu.memory_space<vmem>>, vector<8x1xf32>
    %cst = arith.constant dense<0.000000e+00> : vector<8xf32>
    %10 = vector.multi_reduction <add>, %1, %cst [1] : vector<8x256xf32> to vector<8xf32>
    %11 = vector.shape_cast %10 : vector<8xf32> to vector<8x1xf32>
    %12 = arith.mulf %1, %1 : vector<8x256xf32>
    %cst_10 = arith.constant dense<0.000000e+00> : vector<8xf32>
    %13 = vector.multi_reduction <add>, %12, %cst_10 [1] : vector<8x256xf32> to vector<8xf32>
    %14 = vector.shape_cast %13 : vector<8xf32> to vector<8x1xf32>
    %15 = tpu.concatenate %11, %14 in 1 : vector<8x1xf32>, vector<8x1xf32> -> vector<8x2xf32>
    %cst_11 = arith.constant dense<0.000000e+00> : vector<8x2xf32>
    %16 = tpu.matmul %7, %15, %cst_11 {dimension_numbers = #tpu.dot_dimension_numbers<[1], [0], [0], [1], [0, 0, 1, 1], [], []>, precision = #tpu.contract_precision<fp32>} : vector<8x8xf32>, vector<8x2xf32>, vector<8x2xf32> -> vector<8x2xf32>
    %17 = vector.extract_strided_slice %16 {offsets = [0, 0], sizes = [8, 1], strides = [1, 1]} : vector<8x2xf32> to vector<8x1xf32>
    %18 = vector.extract_strided_slice %16 {offsets = [0, 1], sizes = [8, 1], strides = [1, 1]} : vector<8x2xf32> to vector<8x1xf32>
    %19 = arith.mulf %17, %17 : vector<8x1xf32>
    %20 = arith.subf %18, %19 : vector<8x1xf32>
    %cst_12 = arith.constant 0.000000e+00 : f32
    %21 = vector.broadcast %cst_12 : f32 to vector<8x1xf32>
    %22 = arith.maximumf %20, %21 : vector<8x1xf32>
    %23 = vector.broadcast %17 : vector<8x1xf32> to vector<8x256xf32>
    %24 = arith.subf %1, %23 : vector<8x256xf32>
    %cst_13 = arith.constant 9.99999974E-6 : f32
    %25 = vector.broadcast %cst_13 : f32 to vector<8x1xf32>
    %26 = arith.addf %22, %25 : vector<8x1xf32>
    %27 = math.rsqrt %26 : vector<8x1xf32>
    %28 = vector.broadcast %27 : vector<8x1xf32> to vector<8x256xf32>
    %29 = arith.mulf %24, %28 : vector<8x256xf32>
    %30 = vector.broadcast %8 : vector<8x1xf32> to vector<8x256xf32>
    %31 = arith.mulf %29, %30 : vector<8x256xf32>
    %32 = vector.broadcast %9 : vector<8x1xf32> to vector<8x256xf32>
    %33 = arith.addf %31, %32 : vector<8x256xf32>
    %34 = arith.negf %33 : vector<8x256xf32>
    %35 = math.exp %34 : vector<8x256xf32>
    %cst_14 = arith.constant 1.000000e+00 : f32
    %36 = vector.broadcast %cst_14 : f32 to vector<8x256xf32>
    %37 = arith.addf %36, %35 : vector<8x256xf32>
    %38 = arith.divf %36, %37 : vector<8x256xf32>
    %39 = arith.mulf %33, %38 : vector<8x256xf32>
    %c0_15 = arith.constant 0 : index
    %c0_16 = arith.constant 0 : index
    %40 = vector.load %arg8[%c0_15, %c0_16] : memref<16x1xf32, #tpu.memory_space<vmem>>, vector<16x1xf32>
    %c16_i32 = arith.constant 16 : i32
    %41 = tpu.dynamic_rotate %39 by %c16_i32 dim 1 : vector<8x256xf32>, i32 -> vector<8x256xf32>
    %42 = vector.broadcast %3 : vector<1x256xf32> to vector<8x256xf32>
    %43 = arith.mulf %41, %42 : vector<8x256xf32>
    %c1_i32 = arith.constant 1 : i32
    %44 = tpu.dynamic_rotate %43 by %c1_i32 dim 1 : vector<8x256xf32>, i32 -> vector<8x256xf32>
    %45 = vector.broadcast %5 : vector<1x256xf32> to vector<8x256xf32>
    %46 = arith.mulf %44, %45 : vector<8x256xf32>
    %47 = arith.truncf %46 : vector<8x256xf32> to vector<8x256xbf16>
    %48 = arith.truncf %43 : vector<8x256xf32> to vector<8x256xbf16>
    %c255_i32 = arith.constant 255 : i32
    %49 = tpu.dynamic_rotate %43 by %c255_i32 dim 1 : vector<8x256xf32>, i32 -> vector<8x256xf32>
    %50 = vector.broadcast %6 : vector<1x256xf32> to vector<8x256xf32>
    %51 = arith.mulf %49, %50 : vector<8x256xf32>
    %52 = arith.truncf %51 : vector<8x256xf32> to vector<8x256xbf16>
    %53 = tpu.concatenate %47, %48, %52 in 0 : vector<8x256xbf16>, vector<8x256xbf16>, vector<8x256xbf16> -> vector<24x256xbf16>
    %c0_17 = arith.constant 0 : index
    %c0_18 = arith.constant 0 : index
    %c0_19 = arith.constant 0 : index
    %54 = vector.load %arg7[%c0_17, %c0_18, %c0_19] : memref<3x16x24xbf16, #tpu.memory_space<vmem>>, vector<1x16x24xbf16>
    %55 = vector.shape_cast %54 : vector<1x16x24xbf16> to vector<16x24xbf16>
    %cst_20 = arith.constant dense<0.000000e+00> : vector<16x256xf32>
    %56 = tpu.matmul %55, %53, %cst_20 {dimension_numbers = #tpu.dot_dimension_numbers<[1], [0], [0], [1], [0, 0, 1, 1], [], []>} : vector<16x24xbf16>, vector<24x256xbf16>, vector<16x256xf32> -> vector<16x256xf32>
    %c1_i32_21 = arith.constant 1 : i32
    %57 = tpu.dynamic_rotate %39 by %c1_i32_21 dim 1 : vector<8x256xf32>, i32 -> vector<8x256xf32>
    %58 = vector.broadcast %5 : vector<1x256xf32> to vector<8x256xf32>
    %59 = arith.mulf %57, %58 : vector<8x256xf32>
    %60 = arith.truncf %59 : vector<8x256xf32> to vector<8x256xbf16>
    %61 = arith.truncf %39 : vector<8x256xf32> to vector<8x256xbf16>
    %c255_i32_22 = arith.constant 255 : i32
    %62 = tpu.dynamic_rotate %39 by %c255_i32_22 dim 1 : vector<8x256xf32>, i32 -> vector<8x256xf32>
    %63 = vector.broadcast %6 : vector<1x256xf32> to vector<8x256xf32>
    %64 = arith.mulf %62, %63 : vector<8x256xf32>
    %65 = arith.truncf %64 : vector<8x256xf32> to vector<8x256xbf16>
    %66 = tpu.concatenate %60, %61, %65 in 0 : vector<8x256xbf16>, vector<8x256xbf16>, vector<8x256xbf16> -> vector<24x256xbf16>
    %c1 = arith.constant 1 : index
    %c0_23 = arith.constant 0 : index
    %c0_24 = arith.constant 0 : index
    %67 = vector.load %arg7[%c1, %c0_23, %c0_24] : memref<3x16x24xbf16, #tpu.memory_space<vmem>>, vector<1x16x24xbf16>
    %68 = vector.shape_cast %67 : vector<1x16x24xbf16> to vector<16x24xbf16>
    %cst_25 = arith.constant dense<0.000000e+00> : vector<16x256xf32>
    %69 = tpu.matmul %68, %66, %cst_25 {dimension_numbers = #tpu.dot_dimension_numbers<[1], [0], [0], [1], [0, 0, 1, 1], [], []>} : vector<16x24xbf16>, vector<24x256xbf16>, vector<16x256xf32> -> vector<16x256xf32>
    %70 = arith.addf %56, %69 : vector<16x256xf32>
    %c240_i32 = arith.constant 240 : i32
    %71 = tpu.dynamic_rotate %39 by %c240_i32 dim 1 : vector<8x256xf32>, i32 -> vector<8x256xf32>
    %72 = vector.broadcast %4 : vector<1x256xf32> to vector<8x256xf32>
    %73 = arith.mulf %71, %72 : vector<8x256xf32>
    %c1_i32_26 = arith.constant 1 : i32
    %74 = tpu.dynamic_rotate %73 by %c1_i32_26 dim 1 : vector<8x256xf32>, i32 -> vector<8x256xf32>
    %75 = vector.broadcast %5 : vector<1x256xf32> to vector<8x256xf32>
    %76 = arith.mulf %74, %75 : vector<8x256xf32>
    %77 = arith.truncf %76 : vector<8x256xf32> to vector<8x256xbf16>
    %78 = arith.truncf %73 : vector<8x256xf32> to vector<8x256xbf16>
    %c255_i32_27 = arith.constant 255 : i32
    %79 = tpu.dynamic_rotate %73 by %c255_i32_27 dim 1 : vector<8x256xf32>, i32 -> vector<8x256xf32>
    %80 = vector.broadcast %6 : vector<1x256xf32> to vector<8x256xf32>
    %81 = arith.mulf %79, %80 : vector<8x256xf32>
    %82 = arith.truncf %81 : vector<8x256xf32> to vector<8x256xbf16>
    %83 = tpu.concatenate %77, %78, %82 in 0 : vector<8x256xbf16>, vector<8x256xbf16>, vector<8x256xbf16> -> vector<24x256xbf16>
    %c2 = arith.constant 2 : index
    %c0_28 = arith.constant 0 : index
    %c0_29 = arith.constant 0 : index
    %84 = vector.load %arg7[%c2, %c0_28, %c0_29] : memref<3x16x24xbf16, #tpu.memory_space<vmem>>, vector<1x16x24xbf16>
    %85 = vector.shape_cast %84 : vector<1x16x24xbf16> to vector<16x24xbf16>
    %cst_30 = arith.constant dense<0.000000e+00> : vector<16x256xf32>
    %86 = tpu.matmul %85, %83, %cst_30 {dimension_numbers = #tpu.dot_dimension_numbers<[1], [0], [0], [1], [0, 0, 1, 1], [], []>} : vector<16x24xbf16>, vector<24x256xbf16>, vector<16x256xf32> -> vector<16x256xf32>
    %87 = arith.addf %70, %86 : vector<16x256xf32>
    %88 = vector.broadcast %40 : vector<16x1xf32> to vector<16x256xf32>
    %89 = arith.addf %87, %88 : vector<16x256xf32>
    %c0_31 = arith.constant 0 : index
    %c0_32 = arith.constant 0 : index
    %c0_33 = arith.constant 0 : index
    %90 = vector.load %arg2[%c0_31, %c0_32, %c0_33] : memref<1x16x1xf32, #tpu.memory_space<vmem>>, vector<1x16x1xf32>
    %91 = vector.shape_cast %90 : vector<1x16x1xf32> to vector<16x1xf32>
    %92 = vector.broadcast %91 : vector<16x1xf32> to vector<16x256xf32>
    %93 = arith.addf %89, %92 : vector<16x256xf32>
    %c0_34 = arith.constant 0 : index
    %c0_35 = arith.constant 0 : index
    %94 = vector.load %arg9[%c0_34, %c0_35] : memref<16x16xf32, #tpu.memory_space<vmem>>, vector<16x16xf32>
    %c0_36 = arith.constant 0 : index
    %c0_37 = arith.constant 0 : index
    %95 = vector.load %arg10[%c0_36, %c0_37] : memref<16x1xf32, #tpu.memory_space<vmem>>, vector<16x1xf32>
    %c0_38 = arith.constant 0 : index
    %c0_39 = arith.constant 0 : index
    %96 = vector.load %arg11[%c0_38, %c0_39] : memref<16x1xf32, #tpu.memory_space<vmem>>, vector<16x1xf32>
    %cst_40 = arith.constant dense<0.000000e+00> : vector<16xf32>
    %97 = vector.multi_reduction <add>, %93, %cst_40 [1] : vector<16x256xf32> to vector<16xf32>
    %98 = vector.shape_cast %97 : vector<16xf32> to vector<16x1xf32>
    %99 = arith.mulf %93, %93 : vector<16x256xf32>
    %cst_41 = arith.constant dense<0.000000e+00> : vector<16xf32>
    %100 = vector.multi_reduction <add>, %99, %cst_41 [1] : vector<16x256xf32> to vector<16xf32>
    %101 = vector.shape_cast %100 : vector<16xf32> to vector<16x1xf32>
    %102 = tpu.concatenate %98, %101 in 1 : vector<16x1xf32>, vector<16x1xf32> -> vector<16x2xf32>
    %cst_42 = arith.constant dense<0.000000e+00> : vector<16x2xf32>
    %103 = tpu.matmul %94, %102, %cst_42 {dimension_numbers = #tpu.dot_dimension_numbers<[1], [0], [0], [1], [0, 0, 1, 1], [], []>, precision = #tpu.contract_precision<fp32>} : vector<16x16xf32>, vector<16x2xf32>, vector<16x2xf32> -> vector<16x2xf32>
    %104 = vector.extract_strided_slice %103 {offsets = [0, 0], sizes = [16, 1], strides = [1, 1]} : vector<16x2xf32> to vector<16x1xf32>
    %105 = vector.extract_strided_slice %103 {offsets = [0, 1], sizes = [16, 1], strides = [1, 1]} : vector<16x2xf32> to vector<16x1xf32>
    %106 = arith.mulf %104, %104 : vector<16x1xf32>
    %107 = arith.subf %105, %106 : vector<16x1xf32>
    %cst_43 = arith.constant 0.000000e+00 : f32
    %108 = vector.broadcast %cst_43 : f32 to vector<16x1xf32>
    %109 = arith.maximumf %107, %108 : vector<16x1xf32>
    %110 = vector.broadcast %104 : vector<16x1xf32> to vector<16x256xf32>
    %111 = arith.subf %93, %110 : vector<16x256xf32>
    %cst_44 = arith.constant 9.99999974E-6 : f32
    %112 = vector.broadcast %cst_44 : f32 to vector<16x1xf32>
    %113 = arith.addf %109, %112 : vector<16x1xf32>
    %114 = math.rsqrt %113 : vector<16x1xf32>
    %115 = vector.broadcast %114 : vector<16x1xf32> to vector<16x256xf32>
    %116 = arith.mulf %111, %115 : vector<16x256xf32>
    %117 = vector.broadcast %95 : vector<16x1xf32> to vector<16x256xf32>
    %118 = arith.mulf %116, %117 : vector<16x256xf32>
    %119 = vector.broadcast %96 : vector<16x1xf32> to vector<16x256xf32>
    %120 = arith.addf %118, %119 : vector<16x256xf32>
    %121 = arith.negf %120 : vector<16x256xf32>
    %122 = math.exp %121 : vector<16x256xf32>
    %cst_45 = arith.constant 1.000000e+00 : f32
    %123 = vector.broadcast %cst_45 : f32 to vector<16x256xf32>
    %124 = arith.addf %123, %122 : vector<16x256xf32>
    %125 = arith.divf %123, %124 : vector<16x256xf32>
    %126 = arith.mulf %120, %125 : vector<16x256xf32>
    %c0_46 = arith.constant 0 : index
    %c0_47 = arith.constant 0 : index
    %127 = vector.load %arg13[%c0_46, %c0_47] : memref<16x1xf32, #tpu.memory_space<vmem>>, vector<16x1xf32>
    %c16_i32_48 = arith.constant 16 : i32
    %128 = tpu.dynamic_rotate %126 by %c16_i32_48 dim 1 : vector<16x256xf32>, i32 -> vector<16x256xf32>
    %129 = vector.broadcast %3 : vector<1x256xf32> to vector<16x256xf32>
    %130 = arith.mulf %128, %129 : vector<16x256xf32>
    %c1_i32_49 = arith.constant 1 : i32
    %131 = tpu.dynamic_rotate %130 by %c1_i32_49 dim 1 : vector<16x256xf32>, i32 -> vector<16x256xf32>
    %132 = vector.broadcast %5 : vector<1x256xf32> to vector<16x256xf32>
    %133 = arith.mulf %131, %132 : vector<16x256xf32>
    %134 = arith.truncf %133 : vector<16x256xf32> to vector<16x256xbf16>
    %135 = arith.truncf %130 : vector<16x256xf32> to vector<16x256xbf16>
    %c255_i32_50 = arith.constant 255 : i32
    %136 = tpu.dynamic_rotate %130 by %c255_i32_50 dim 1 : vector<16x256xf32>, i32 -> vector<16x256xf32>
    %137 = vector.broadcast %6 : vector<1x256xf32> to vector<16x256xf32>
    %138 = arith.mulf %136, %137 : vector<16x256xf32>
    %139 = arith.truncf %138 : vector<16x256xf32> to vector<16x256xbf16>
    %140 = tpu.concatenate %134, %135, %139 in 0 : vector<16x256xbf16>, vector<16x256xbf16>, vector<16x256xbf16> -> vector<48x256xbf16>
    %c0_51 = arith.constant 0 : index
    %c0_52 = arith.constant 0 : index
    %c0_53 = arith.constant 0 : index
    %141 = vector.load %arg12[%c0_51, %c0_52, %c0_53] : memref<3x16x48xbf16, #tpu.memory_space<vmem>>, vector<1x16x48xbf16>
    %142 = vector.shape_cast %141 : vector<1x16x48xbf16> to vector<16x48xbf16>
    %cst_54 = arith.constant dense<0.000000e+00> : vector<16x256xf32>
    %143 = tpu.matmul %142, %140, %cst_54 {dimension_numbers = #tpu.dot_dimension_numbers<[1], [0], [0], [1], [0, 0, 1, 1], [], []>} : vector<16x48xbf16>, vector<48x256xbf16>, vector<16x256xf32> -> vector<16x256xf32>
    %c1_i32_55 = arith.constant 1 : i32
    %144 = tpu.dynamic_rotate %126 by %c1_i32_55 dim 1 : vector<16x256xf32>, i32 -> vector<16x256xf32>
    %145 = vector.broadcast %5 : vector<1x256xf32> to vector<16x256xf32>
    %146 = arith.mulf %144, %145 : vector<16x256xf32>
    %147 = arith.truncf %146 : vector<16x256xf32> to vector<16x256xbf16>
    %148 = arith.truncf %126 : vector<16x256xf32> to vector<16x256xbf16>
    %c255_i32_56 = arith.constant 255 : i32
    %149 = tpu.dynamic_rotate %126 by %c255_i32_56 dim 1 : vector<16x256xf32>, i32 -> vector<16x256xf32>
    %150 = vector.broadcast %6 : vector<1x256xf32> to vector<16x256xf32>
    %151 = arith.mulf %149, %150 : vector<16x256xf32>
    %152 = arith.truncf %151 : vector<16x256xf32> to vector<16x256xbf16>
    %153 = tpu.concatenate %147, %148, %152 in 0 : vector<16x256xbf16>, vector<16x256xbf16>, vector<16x256xbf16> -> vector<48x256xbf16>
    %c1_57 = arith.constant 1 : index
    %c0_58 = arith.constant 0 : index
    %c0_59 = arith.constant 0 : index
    %154 = vector.load %arg12[%c1_57, %c0_58, %c0_59] : memref<3x16x48xbf16, #tpu.memory_space<vmem>>, vector<1x16x48xbf16>
    %155 = vector.shape_cast %154 : vector<1x16x48xbf16> to vector<16x48xbf16>
    %cst_60 = arith.constant dense<0.000000e+00> : vector<16x256xf32>
    %156 = tpu.matmul %155, %153, %cst_60 {dimension_numbers = #tpu.dot_dimension_numbers<[1], [0], [0], [1], [0, 0, 1, 1], [], []>} : vector<16x48xbf16>, vector<48x256xbf16>, vector<16x256xf32> -> vector<16x256xf32>
    %157 = arith.addf %143, %156 : vector<16x256xf32>
    %c240_i32_61 = arith.constant 240 : i32
    %158 = tpu.dynamic_rotate %126 by %c240_i32_61 dim 1 : vector<16x256xf32>, i32 -> vector<16x256xf32>
    %159 = vector.broadcast %4 : vector<1x256xf32> to vector<16x256xf32>
    %160 = arith.mulf %158, %159 : vector<16x256xf32>
    %c1_i32_62 = arith.constant 1 : i32
    %161 = tpu.dynamic_rotate %160 by %c1_i32_62 dim 1 : vector<16x256xf32>, i32 -> vector<16x256xf32>
    %162 = vector.broadcast %5 : vector<1x256xf32> to vector<16x256xf32>
    %163 = arith.mulf %161, %162 : vector<16x256xf32>
    %164 = arith.truncf %163 : vector<16x256xf32> to vector<16x256xbf16>
    %165 = arith.truncf %160 : vector<16x256xf32> to vector<16x256xbf16>
    %c255_i32_63 = arith.constant 255 : i32
    %166 = tpu.dynamic_rotate %160 by %c255_i32_63 dim 1 : vector<16x256xf32>, i32 -> vector<16x256xf32>
    %167 = vector.broadcast %6 : vector<1x256xf32> to vector<16x256xf32>
    %168 = arith.mulf %166, %167 : vector<16x256xf32>
    %169 = arith.truncf %168 : vector<16x256xf32> to vector<16x256xbf16>
    %170 = tpu.concatenate %164, %165, %169 in 0 : vector<16x256xbf16>, vector<16x256xbf16>, vector<16x256xbf16> -> vector<48x256xbf16>
    %c2_64 = arith.constant 2 : index
    %c0_65 = arith.constant 0 : index
    %c0_66 = arith.constant 0 : index
    %171 = vector.load %arg12[%c2_64, %c0_65, %c0_66] : memref<3x16x48xbf16, #tpu.memory_space<vmem>>, vector<1x16x48xbf16>
    %172 = vector.shape_cast %171 : vector<1x16x48xbf16> to vector<16x48xbf16>
    %cst_67 = arith.constant dense<0.000000e+00> : vector<16x256xf32>
    %173 = tpu.matmul %172, %170, %cst_67 {dimension_numbers = #tpu.dot_dimension_numbers<[1], [0], [0], [1], [0, 0, 1, 1], [], []>} : vector<16x48xbf16>, vector<48x256xbf16>, vector<16x256xf32> -> vector<16x256xf32>
    %174 = arith.addf %157, %173 : vector<16x256xf32>
    %175 = vector.broadcast %127 : vector<16x1xf32> to vector<16x256xf32>
    %176 = arith.addf %174, %175 : vector<16x256xf32>
    %c0_68 = arith.constant 0 : index
    %c0_69 = arith.constant 0 : index
    %177 = vector.load %arg14[%c0_68, %c0_69] : memref<16x8xbf16, #tpu.memory_space<vmem>>, vector<16x8xbf16>
    %178 = arith.truncf %1 : vector<8x256xf32> to vector<8x256xbf16>
    %cst_70 = arith.constant dense<0.000000e+00> : vector<16x256xf32>
    %179 = tpu.matmul %177, %178, %cst_70 {dimension_numbers = #tpu.dot_dimension_numbers<[1], [0], [0], [1], [0, 0, 1, 1], [], []>} : vector<16x8xbf16>, vector<8x256xbf16>, vector<16x256xf32> -> vector<16x256xf32>
    %c0_71 = arith.constant 0 : index
    %c0_72 = arith.constant 0 : index
    %180 = vector.load %arg15[%c0_71, %c0_72] : memref<16x1xf32, #tpu.memory_space<vmem>>, vector<16x1xf32>
    %181 = vector.broadcast %180 : vector<16x1xf32> to vector<16x256xf32>
    %182 = arith.addf %179, %181 : vector<16x256xf32>
    %183 = arith.addf %182, %176 : vector<16x256xf32>
    %c0_73 = arith.constant 0 : index
    %c0_74 = arith.constant 0 : index
    %c0_75 = arith.constant 0 : index
    %184 = vector.load %arg16[%c0_73, %c0_74, %c0_75] : memref<1x16x256xf32, #tpu.memory_space<vmem>>, vector<1x16x256xf32>
    %185 = vector.shape_cast %184 : vector<1x16x256xf32> to vector<16x256xf32>
    %186 = vector.shape_cast %183 : vector<16x256xf32> to vector<1x16x256xf32>
    tpu.vector_store %arg16[%c0_73, %c0_74, %c0_75], %186 {strides = array<i32>} : memref<1x16x256xf32, #tpu.memory_space<vmem>>, vector<1x16x256xf32>,
    return
  }
  func.func @transform_0(%arg0: i32) -> (i32, i32, i32) {
    %c0_i32 = arith.constant 0 : i32
    %c0_i32_0 = arith.constant 0 : i32
    %c0_i32_1 = arith.constant 0 : i32
    return %arg0, %c0_i32, %c0_i32_0 : i32, i32, i32
  }
  func.func @transform_1(%arg0: i32) -> (i32, i32, i32) {
    %c0_i32 = arith.constant 0 : i32
    %c0_i32_0 = arith.constant 0 : i32
    %c0_i32_1 = arith.constant 0 : i32
    return %arg0, %c0_i32, %c0_i32_0 : i32, i32, i32
  }
  func.func @transform_2(%arg0: i32) -> (i32, i32) {
    %c0_i32 = arith.constant 0 : i32
    %c0_i32_0 = arith.constant 0 : i32
    %c0_i32_1 = arith.constant 0 : i32
    return %c0_i32, %c0_i32_0 : i32, i32
  }
  func.func @transform_3(%arg0: i32) -> (i32, i32) {
    %c0_i32 = arith.constant 0 : i32
    %c0_i32_0 = arith.constant 0 : i32
    %c0_i32_1 = arith.constant 0 : i32
    return %c0_i32, %c0_i32_0 : i32, i32
  }
  func.func @transform_4(%arg0: i32) -> (i32, i32) {
    %c0_i32 = arith.constant 0 : i32
    %c0_i32_0 = arith.constant 0 : i32
    %c0_i32_1 = arith.constant 0 : i32
    return %c0_i32, %c0_i32_0 : i32, i32
  }
  func.func @transform_5(%arg0: i32) -> (i32, i32) {
    %c0_i32 = arith.constant 0 : i32
    %c0_i32_0 = arith.constant 0 : i32
    %c0_i32_1 = arith.constant 0 : i32
    return %c0_i32, %c0_i32_0 : i32, i32
  }
  func.func @transform_6(%arg0: i32) -> (i32, i32, i32) {
    %c0_i32 = arith.constant 0 : i32
    %c0_i32_0 = arith.constant 0 : i32
    %c0_i32_1 = arith.constant 0 : i32
    %c0_i32_2 = arith.constant 0 : i32
    return %c0_i32, %c0_i32_0, %c0_i32_1 : i32, i32, i32
  }
  func.func @transform_7(%arg0: i32) -> (i32, i32) {
    %c0_i32 = arith.constant 0 : i32
    %c0_i32_0 = arith.constant 0 : i32
    %c0_i32_1 = arith.constant 0 : i32
    return %c0_i32, %c0_i32_0 : i32, i32
  }
  func.func @transform_8(%arg0: i32) -> (i32, i32) {
    %c0_i32 = arith.constant 0 : i32
    %c0_i32_0 = arith.constant 0 : i32
    %c0_i32_1 = arith.constant 0 : i32
    return %c0_i32, %c0_i32_0 : i32, i32
  }
  func.func @transform_9(%arg0: i32) -> (i32, i32) {
    %c0_i32 = arith.constant 0 : i32
    %c0_i32_0 = arith.constant 0 : i32
    %c0_i32_1 = arith.constant 0 : i32
    return %c0_i32, %c0_i32_0 : i32, i32
  }
  func.func @transform_10(%arg0: i32) -> (i32, i32) {
    %c0_i32 = arith.constant 0 : i32
    %c0_i32_0 = arith.constant 0 : i32
    %c0_i32_1 = arith.constant 0 : i32
    return %c0_i32, %c0_i32_0 : i32, i32
  }
  func.func @transform_11(%arg0: i32) -> (i32, i32, i32) {
    %c0_i32 = arith.constant 0 : i32
    %c0_i32_0 = arith.constant 0 : i32
    %c0_i32_1 = arith.constant 0 : i32
    %c0_i32_2 = arith.constant 0 : i32
    return %c0_i32, %c0_i32_0, %c0_i32_1 : i32, i32, i32
  }
  func.func @transform_12(%arg0: i32) -> (i32, i32) {
    %c0_i32 = arith.constant 0 : i32
    %c0_i32_0 = arith.constant 0 : i32
    %c0_i32_1 = arith.constant 0 : i32
    return %c0_i32, %c0_i32_0 : i32, i32
  }
  func.func @transform_13(%arg0: i32) -> (i32, i32) {
    %c0_i32 = arith.constant 0 : i32
    %c0_i32_0 = arith.constant 0 : i32
    %c0_i32_1 = arith.constant 0 : i32
    return %c0_i32, %c0_i32_0 : i32, i32
  }
  func.func @transform_14(%arg0: i32) -> (i32, i32) {
    %c0_i32 = arith.constant 0 : i32
    %c0_i32_0 = arith.constant 0 : i32
    %c0_i32_1 = arith.constant 0 : i32
    return %c0_i32, %c0_i32_0 : i32, i32
  }
  func.func @transform_15(%arg0: i32) -> (i32, i32, i32) {
    %c0_i32 = arith.constant 0 : i32
    %c0_i32_0 = arith.constant 0 : i32
    %c0_i32_1 = arith.constant 0 : i32
    return %arg0, %c0_i32, %c0_i32_0 : i32, i32, i32
  }
}

module attributes {stable_mosaic.version = 11 : i64} {
  func.func @_resnet_block_kernel(%arg0: i32, %arg1: memref<1x8x256xf32, #tpu.memory_space<vmem>>, %arg2: memref<1x16x1xf32, #tpu.memory_space<vmem>>, %arg3: memref<4x256xf32, #tpu.memory_space<vmem>>, %arg4: memref<8x8xf32, #tpu.memory_space<vmem>>, %arg5: memref<8x1xf32, #tpu.memory_space<vmem>>, %arg6: memref<8x1xf32, #tpu.memory_space<vmem>>, %arg7: memref<3x16x24xbf16, #tpu.memory_space<vmem>>, %arg8: memref<16x1xf32, #tpu.memory_space<vmem>>, %arg9: memref<16x16xf32, #tpu.memory_space<vmem>>, %arg10: memref<16x1xf32, #tpu.memory_space<vmem>>, %arg11: memref<16x1xf32, #tpu.memory_space<vmem>>, %arg12: memref<3x16x48xbf16, #tpu.memory_space<vmem>>, %arg13: memref<16x1xf32, #tpu.memory_space<vmem>>, %arg14: memref<16x8xbf16, #tpu.memory_space<vmem>>, %arg15: memref<16x1xf32, #tpu.memory_space<vmem>>, %arg16: memref<1x16x256xf32, #tpu.memory_space<vmem>>) attributes {dimension_semantics = [#tpu.dimension_semantics<parallel>], iteration_bounds = array<i64: 2>, scalar_prefetch = 0 : i64, scratch_operands = 0 : i64, tpu.core_type = #tpu.core_type<tc>, window_params = [{transform_indices = @transform_0, window_bounds = array<i64: 1, 8, 256>}, {transform_indices = @transform_1, window_bounds = array<i64: 1, 16, 1>}, {pipeline_mode = #tpu.pipeline_mode<synchronous>, transform_indices = @transform_2, window_bounds = array<i64: 4, 256>}, {pipeline_mode = #tpu.pipeline_mode<synchronous>, transform_indices = @transform_3, window_bounds = array<i64: 8, 8>}, {pipeline_mode = #tpu.pipeline_mode<synchronous>, transform_indices = @transform_4, window_bounds = array<i64: 8, 1>}, {pipeline_mode = #tpu.pipeline_mode<synchronous>, transform_indices = @transform_5, window_bounds = array<i64: 8, 1>}, {pipeline_mode = #tpu.pipeline_mode<synchronous>, transform_indices = @transform_6, window_bounds = array<i64: 3, 16, 24>}, {pipeline_mode = #tpu.pipeline_mode<synchronous>, transform_indices = @transform_7, window_bounds = array<i64: 16, 1>}, {pipeline_mode = #tpu.pipeline_mode<synchronous>, transform_indices = @transform_8, window_bounds = array<i64: 16, 16>}, {pipeline_mode = #tpu.pipeline_mode<synchronous>, transform_indices = @transform_9, window_bounds = array<i64: 16, 1>}, {pipeline_mode = #tpu.pipeline_mode<synchronous>, transform_indices = @transform_10, window_bounds = array<i64: 16, 1>}, {pipeline_mode = #tpu.pipeline_mode<synchronous>, transform_indices = @transform_11, window_bounds = array<i64: 3, 16, 48>}, {pipeline_mode = #tpu.pipeline_mode<synchronous>, transform_indices = @transform_12, window_bounds = array<i64: 16, 1>}, {pipeline_mode = #tpu.pipeline_mode<synchronous>, transform_indices = @transform_13, window_bounds = array<i64: 16, 8>}, {pipeline_mode = #tpu.pipeline_mode<synchronous>, transform_indices = @transform_14, window_bounds = array<i64: 16, 1>}, {transform_indices = @transform_15, window_bounds = array<i64: 1, 16, 256>}]} {
    %c0 = arith.constant 0 : index
    %c0_0 = arith.constant 0 : index
    %c0_1 = arith.constant 0 : index
    %0 = vector.load %arg1[%c0, %c0_0, %c0_1] : memref<1x8x256xf32, #tpu.memory_space<vmem>>, vector<1x8x256xf32>
    %1 = vector.shape_cast %0 : vector<1x8x256xf32> to vector<8x256xf32>
    %c0_2 = arith.constant 0 : index
    %c0_3 = arith.constant 0 : index
    %2 = vector.load %arg3[%c0_2, %c0_3] : memref<4x256xf32, #tpu.memory_space<vmem>>, vector<4x256xf32>
    %3 = vector.extract_strided_slice %2 {offsets = [0, 0], sizes = [1, 256], strides = [1, 1]} : vector<4x256xf32> to vector<1x256xf32>
    %4 = vector.extract_strided_slice %2 {offsets = [1, 0], sizes = [1, 256], strides = [1, 1]} : vector<4x256xf32> to vector<1x256xf32>
    %5 = vector.extract_strided_slice %2 {offsets = [2, 0], sizes = [1, 256], strides = [1, 1]} : vector<4x256xf32> to vector<1x256xf32>
    %6 = vector.extract_strided_slice %2 {offsets = [3, 0], sizes = [1, 256], strides = [1, 1]} : vector<4x256xf32> to vector<1x256xf32>
    %c0_4 = arith.constant 0 : index
    %c0_5 = arith.constant 0 : index
    %7 = vector.load %arg4[%c0_4, %c0_5] : memref<8x8xf32, #tpu.memory_space<vmem>>, vector<8x8xf32>
    %c0_6 = arith.constant 0 : index
    %c0_7 = arith.constant 0 : index
    %8 = vector.load %arg5[%c0_6, %c0_7] : memref<8x1xf32, #tpu.memory_space<vmem>>, vector<8x1xf32>
    %c0_8 = arith.constant 0 : index
    %c0_9 = arith.constant 0 : index
    %9 = vector.load %arg6[%c0_8, %c0_9] : memref<8x1xf32, #tpu.memory_space<vmem>>, vector<8x1xf32>
    %cst = arith.constant dense<0.000000e+00> : vector<8xf32>
    %10 = vector.multi_reduction <add>, %1, %cst [1] : vector<8x256xf32> to vector<8xf32>
    %11 = vector.shape_cast %10 : vector<8xf32> to vector<8x1xf32>
    %12 = arith.mulf %1, %1 : vector<8x256xf32>
    %cst_10 = arith.constant dense<0.000000e+00> : vector<8xf32>
    %13 = vector.multi_reduction <add>, %12, %cst_10 [1] : vector<8x256xf32> to vector<8xf32>
    %14 = vector.shape_cast %13 : vector<8xf32> to vector<8x1xf32>
    %15 = tpu.concatenate %11, %14 in 1 : vector<8x1xf32>, vector<8x1xf32> -> vector<8x2xf32>
    %cst_11 = arith.constant dense<0.000000e+00> : vector<8x2xf32>
    %16 = tpu.matmul %7, %15, %cst_11 {dimension_numbers = #tpu.dot_dimension_numbers<[1], [0], [0], [1], [0, 0, 1, 1], [], []>, precision = #tpu.contract_precision<fp32>} : vector<8x8xf32>, vector<8x2xf32>, vector<8x2xf32> -> vector<8x2xf32>
    %17 = vector.extract_strided_slice %16 {offsets = [0, 0], sizes = [8, 1], strides = [1, 1]} : vector<8x2xf32> to vector<8x1xf32>
    %18 = vector.extract_strided_slice %16 {offsets = [0, 1], sizes = [8, 1], strides = [1, 1]} : vector<8x2xf32> to vector<8x1xf32>
    %19 = arith.mulf %17, %17 : vector<8x1xf32>
    %20 = arith.subf %18, %19 : vector<8x1xf32>
    %cst_12 = arith.constant 0.000000e+00 : f32
    %21 = vector.broadcast %cst_12 : f32 to vector<8x1xf32>
    %22 = arith.maximumf %20, %21 : vector<8x1xf32>
    %23 = vector.broadcast %17 : vector<8x1xf32> to vector<8x256xf32>
    %24 = arith.subf %1, %23 : vector<8x256xf32>
    %cst_13 = arith.constant 9.99999974E-6 : f32
    %25 = vector.broadcast %cst_13 : f32 to vector<8x1xf32>
    %26 = arith.addf %22, %25 : vector<8x1xf32>
    %27 = math.rsqrt %26 : vector<8x1xf32>
    %28 = vector.broadcast %27 : vector<8x1xf32> to vector<8x256xf32>
    %29 = arith.mulf %24, %28 : vector<8x256xf32>
    %30 = vector.broadcast %8 : vector<8x1xf32> to vector<8x256xf32>
    %31 = arith.mulf %29, %30 : vector<8x256xf32>
    %32 = vector.broadcast %9 : vector<8x1xf32> to vector<8x256xf32>
    %33 = arith.addf %31, %32 : vector<8x256xf32>
    %34 = arith.negf %33 : vector<8x256xf32>
    %35 = math.exp %34 : vector<8x256xf32>
    %cst_14 = arith.constant 1.000000e+00 : f32
    %36 = vector.broadcast %cst_14 : f32 to vector<8x256xf32>
    %37 = arith.addf %36, %35 : vector<8x256xf32>
    %38 = arith.divf %36, %37 : vector<8x256xf32>
    %39 = arith.mulf %33, %38 : vector<8x256xf32>
    %c0_15 = arith.constant 0 : index
    %c0_16 = arith.constant 0 : index
    %40 = vector.load %arg8[%c0_15, %c0_16] : memref<16x1xf32, #tpu.memory_space<vmem>>, vector<16x1xf32>
    %c16_i32 = arith.constant 16 : i32
    %41 = tpu.dynamic_rotate %39 by %c16_i32 dim 1 : vector<8x256xf32>, i32 -> vector<8x256xf32>
    %42 = vector.broadcast %3 : vector<1x256xf32> to vector<8x256xf32>
    %43 = arith.mulf %41, %42 : vector<8x256xf32>
    %c1_i32 = arith.constant 1 : i32
    %44 = tpu.dynamic_rotate %43 by %c1_i32 dim 1 : vector<8x256xf32>, i32 -> vector<8x256xf32>
    %45 = vector.broadcast %5 : vector<1x256xf32> to vector<8x256xf32>
    %46 = arith.mulf %44, %45 : vector<8x256xf32>
    %47 = arith.truncf %46 : vector<8x256xf32> to vector<8x256xbf16>
    %48 = arith.truncf %43 : vector<8x256xf32> to vector<8x256xbf16>
    %c255_i32 = arith.constant 255 : i32
    %49 = tpu.dynamic_rotate %43 by %c255_i32 dim 1 : vector<8x256xf32>, i32 -> vector<8x256xf32>
    %50 = vector.broadcast %6 : vector<1x256xf32> to vector<8x256xf32>
    %51 = arith.mulf %49, %50 : vector<8x256xf32>
    %52 = arith.truncf %51 : vector<8x256xf32> to vector<8x256xbf16>
    %53 = tpu.concatenate %47, %48, %52 in 0 : vector<8x256xbf16>, vector<8x256xbf16>, vector<8x256xbf16> -> vector<24x256xbf16>
    %c0_17 = arith.constant 0 : index
    %c0_18 = arith.constant 0 : index
    %c0_19 = arith.constant 0 : index
    %54 = vector.load %arg7[%c0_17, %c0_18, %c0_19] : memref<3x16x24xbf16, #tpu.memory_space<vmem>>, vector<1x16x24xbf16>
    %55 = vector.shape_cast %54 : vector<1x16x24xbf16> to vector<16x24xbf16>
    %cst_20 = arith.constant dense<0.000000e+00> : vector<16x256xf32>
    %56 = tpu.matmul %55, %53, %cst_20 {dimension_numbers = #tpu.dot_dimension_numbers<[1], [0], [0], [1], [0, 0, 1, 1], [], []>} : vector<16x24xbf16>, vector<24x256xbf16>, vector<16x256xf32> -> vector<16x256xf32>
    %c1_i32_21 = arith.constant 1 : i32
    %57 = tpu.dynamic_rotate %39 by %c1_i32_21 dim 1 : vector<8x256xf32>, i32 -> vector<8x256xf32>
    %58 = vector.broadcast %5 : vector<1x256xf32> to vector<8x256xf32>
    %59 = arith.mulf %57, %58 : vector<8x256xf32>
    %60 = arith.truncf %59 : vector<8x256xf32> to vector<8x256xbf16>
    %61 = arith.truncf %39 : vector<8x256xf32> to vector<8x256xbf16>
    %c255_i32_22 = arith.constant 255 : i32
    %62 = tpu.dynamic_rotate %39 by %c255_i32_22 dim 1 : vector<8x256xf32>, i32 -> vector<8x256xf32>
    %63 = vector.broadcast %6 : vector<1x256xf32> to vector<8x256xf32>
    %64 = arith.mulf %62, %63 : vector<8x256xf32>
    %65 = arith.truncf %64 : vector<8x256xf32> to vector<8x256xbf16>
    %66 = tpu.concatenate %60, %61, %65 in 0 : vector<8x256xbf16>, vector<8x256xbf16>, vector<8x256xbf16> -> vector<24x256xbf16>
    %c1 = arith.constant 1 : index
    %c0_23 = arith.constant 0 : index
    %c0_24 = arith.constant 0 : index
    %67 = vector.load %arg7[%c1, %c0_23, %c0_24] : memref<3x16x24xbf16, #tpu.memory_space<vmem>>, vector<1x16x24xbf16>
    %68 = vector.shape_cast %67 : vector<1x16x24xbf16> to vector<16x24xbf16>
    %cst_25 = arith.constant dense<0.000000e+00> : vector<16x256xf32>
    %69 = tpu.matmul %68, %66, %cst_25 {dimension_numbers = #tpu.dot_dimension_numbers<[1], [0], [0], [1], [0, 0, 1, 1], [], []>} : vector<16x24xbf16>, vector<24x256xbf16>, vector<16x256xf32> -> vector<16x256xf32>
    %70 = arith.addf %56, %69 : vector<16x256xf32>
    %c240_i32 = arith.constant 240 : i32
    %71 = tpu.dynamic_rotate %39 by %c240_i32 dim 1 : vector<8x256xf32>, i32 -> vector<8x256xf32>
    %72 = vector.broadcast %4 : vector<1x256xf32> to vector<8x256xf32>
    %73 = arith.mulf %71, %72 : vector<8x256xf32>
    %c1_i32_26 = arith.constant 1 : i32
    %74 = tpu.dynamic_rotate %73 by %c1_i32_26 dim 1 : vector<8x256xf32>, i32 -> vector<8x256xf32>
    %75 = vector.broadcast %5 : vector<1x256xf32> to vector<8x256xf32>
    %76 = arith.mulf %74, %75 : vector<8x256xf32>
    %77 = arith.truncf %76 : vector<8x256xf32> to vector<8x256xbf16>
    %78 = arith.truncf %73 : vector<8x256xf32> to vector<8x256xbf16>
    %c255_i32_27 = arith.constant 255 : i32
    %79 = tpu.dynamic_rotate %73 by %c255_i32_27 dim 1 : vector<8x256xf32>, i32 -> vector<8x256xf32>
    %80 = vector.broadcast %6 : vector<1x256xf32> to vector<8x256xf32>
    %81 = arith.mulf %79, %80 : vector<8x256xf32>
    %82 = arith.truncf %81 : vector<8x256xf32> to vector<8x256xbf16>
    %83 = tpu.concatenate %77, %78, %82 in 0 : vector<8x256xbf16>, vector<8x256xbf16>, vector<8x256xbf16> -> vector<24x256xbf16>
    %c2 = arith.constant 2 : index
    %c0_28 = arith.constant 0 : index
    %c0_29 = arith.constant 0 : index
    %84 = vector.load %arg7[%c2, %c0_28, %c0_29] : memref<3x16x24xbf16, #tpu.memory_space<vmem>>, vector<1x16x24xbf16>
    %85 = vector.shape_cast %84 : vector<1x16x24xbf16> to vector<16x24xbf16>
    %cst_30 = arith.constant dense<0.000000e+00> : vector<16x256xf32>
    %86 = tpu.matmul %85, %83, %cst_30 {dimension_numbers = #tpu.dot_dimension_numbers<[1], [0], [0], [1], [0, 0, 1, 1], [], []>} : vector<16x24xbf16>, vector<24x256xbf16>, vector<16x256xf32> -> vector<16x256xf32>
    %87 = arith.addf %70, %86 : vector<16x256xf32>
    %88 = vector.broadcast %40 : vector<16x1xf32> to vector<16x256xf32>
    %89 = arith.addf %87, %88 : vector<16x256xf32>
    %c0_31 = arith.constant 0 : index
    %c0_32 = arith.constant 0 : index
    %c0_33 = arith.constant 0 : index
    %90 = vector.load %arg2[%c0_31, %c0_32, %c0_33] : memref<1x16x1xf32, #tpu.memory_space<vmem>>, vector<1x16x1xf32>
    %91 = vector.shape_cast %90 : vector<1x16x1xf32> to vector<16x1xf32>
    %92 = vector.broadcast %91 : vector<16x1xf32> to vector<16x256xf32>
    %93 = arith.addf %89, %92 : vector<16x256xf32>
    %c0_34 = arith.constant 0 : index
    %c0_35 = arith.constant 0 : index
    %94 = vector.load %arg9[%c0_34, %c0_35] : memref<16x16xf32, #tpu.memory_space<vmem>>, vector<16x16xf32>
    %c0_36 = arith.constant 0 : index
    %c0_37 = arith.constant 0 : index
    %95 = vector.load %arg10[%c0_36, %c0_37] : memref<16x1xf32, #tpu.memory_space<vmem>>, vector<16x1xf32>
    %c0_38 = arith.constant 0 : index
    %c0_39 = arith.constant 0 : index
    %96 = vector.load %arg11[%c0_38, %c0_39] : memref<16x1xf32, #tpu.memory_space<vmem>>, vector<16x1xf32>
    %cst_40 = arith.constant dense<0.000000e+00> : vector<16xf32>
    %97 = vector.multi_reduction <add>, %93, %cst_40 [1] : vector<16x256xf32> to vector<16xf32>
    %98 = vector.shape_cast %97 : vector<16xf32> to vector<16x1xf32>
    %99 = arith.mulf %93, %93 : vector<16x256xf32>
    %cst_41 = arith.constant dense<0.000000e+00> : vector<16xf32>
    %100 = vector.multi_reduction <add>, %99, %cst_41 [1] : vector<16x256xf32> to vector<16xf32>
    %101 = vector.shape_cast %100 : vector<16xf32> to vector<16x1xf32>
    %102 = tpu.concatenate %98, %101 in 1 : vector<16x1xf32>, vector<16x1xf32> -> vector<16x2xf32>
    %cst_42 = arith.constant dense<0.000000e+00> : vector<16x2xf32>
    %103 = tpu.matmul %94, %102, %cst_42 {dimension_numbers = #tpu.dot_dimension_numbers<[1], [0], [0], [1], [0, 0, 1, 1], [], []>, precision = #tpu.contract_precision<fp32>} : vector<16x16xf32>, vector<16x2xf32>, vector<16x2xf32> -> vector<16x2xf32>
    %104 = vector.extract_strided_slice %103 {offsets = [0, 0], sizes = [16, 1], strides = [1, 1]} : vector<16x2xf32> to vector<16x1xf32>
    %105 = vector.extract_strided_slice %103 {offsets = [0, 1], sizes = [16, 1], strides = [1, 1]} : vector<16x2xf32> to vector<16x1xf32>
    %106 = arith.mulf %104, %104 : vector<16x1xf32>
    %107 = arith.subf %105, %106 : vector<16x1xf32>
    %cst_43 = arith.constant 0.000000e+00 : f32
    %108 = vector.broadcast %cst_43 : f32 to vector<16x1xf32>
    %109 = arith.maximumf %107, %108 : vector<16x1xf32>
    %110 = vector.broadcast %104 : vector<16x1xf32> to vector<16x256xf32>
    %111 = arith.subf %93, %110 : vector<16x256xf32>
    %cst_44 = arith.constant 9.99999974E-6 : f32
    %112 = vector.broadcast %cst_44 : f32 to vector<16x1xf32>
    %113 = arith.addf %109, %112 : vector<16x1xf32>
    %114 = math.rsqrt %113 : vector<16x1xf32>
    %115 = vector.broadcast %114 : vector<16x1xf32> to vector<16x256xf32>
    %116 = arith.mulf %111, %115 : vector<16x256xf32>
    %117 = vector.broadcast %95 : vector<16x1xf32> to vector<16x256xf32>
    %118 = arith.mulf %116, %117 : vector<16x256xf32>
    %119 = vector.broadcast %96 : vector<16x1xf32> to vector<16x256xf32>
    %120 = arith.addf %118, %119 : vector<16x256xf32>
    %121 = arith.negf %120 : vector<16x256xf32>
    %122 = math.exp %121 : vector<16x256xf32>
    %cst_45 = arith.constant 1.000000e+00 : f32
    %123 = vector.broadcast %cst_45 : f32 to vector<16x256xf32>
    %124 = arith.addf %123, %122 : vector<16x256xf32>
    %125 = arith.divf %123, %124 : vector<16x256xf32>
    %126 = arith.mulf %120, %125 : vector<16x256xf32>
    %c0_46 = arith.constant 0 : index
    %c0_47 = arith.constant 0 : index
    %127 = vector.load %arg13[%c0_46, %c0_47] : memref<16x1xf32, #tpu.memory_space<vmem>>, vector<16x1xf32>
    %c16_i32_48 = arith.constant 16 : i32
    %128 = tpu.dynamic_rotate %126 by %c16_i32_48 dim 1 : vector<16x256xf32>, i32 -> vector<16x256xf32>
    %129 = vector.broadcast %3 : vector<1x256xf32> to vector<16x256xf32>
    %130 = arith.mulf %128, %129 : vector<16x256xf32>
    %c1_i32_49 = arith.constant 1 : i32
    %131 = tpu.dynamic_rotate %130 by %c1_i32_49 dim 1 : vector<16x256xf32>, i32 -> vector<16x256xf32>
    %132 = vector.broadcast %5 : vector<1x256xf32> to vector<16x256xf32>
    %133 = arith.mulf %131, %132 : vector<16x256xf32>
    %134 = arith.truncf %133 : vector<16x256xf32> to vector<16x256xbf16>
    %135 = arith.truncf %130 : vector<16x256xf32> to vector<16x256xbf16>
    %c255_i32_50 = arith.constant 255 : i32
    %136 = tpu.dynamic_rotate %130 by %c255_i32_50 dim 1 : vector<16x256xf32>, i32 -> vector<16x256xf32>
    %137 = vector.broadcast %6 : vector<1x256xf32> to vector<16x256xf32>
    %138 = arith.mulf %136, %137 : vector<16x256xf32>
    %139 = arith.truncf %138 : vector<16x256xf32> to vector<16x256xbf16>
    %140 = tpu.concatenate %134, %135, %139 in 0 : vector<16x256xbf16>, vector<16x256xbf16>, vector<16x256xbf16> -> vector<48x256xbf16>
    %c0_51 = arith.constant 0 : index
    %c0_52 = arith.constant 0 : index
    %c0_53 = arith.constant 0 : index
    %141 = vector.load %arg12[%c0_51, %c0_52, %c0_53] : memref<3x16x48xbf16, #tpu.memory_space<vmem>>, vector<1x16x48xbf16>
    %142 = vector.shape_cast %141 : vector<1x16x48xbf16> to vector<16x48xbf16>
    %cst_54 = arith.constant dense<0.000000e+00> : vector<16x256xf32>
    %143 = tpu.matmul %142, %140, %cst_54 {dimension_numbers = #tpu.dot_dimension_numbers<[1], [0], [0], [1], [0, 0, 1, 1], [], []>} : vector<16x48xbf16>, vector<48x256xbf16>, vector<16x256xf32> -> vector<16x256xf32>
    %c1_i32_55 = arith.constant 1 : i32
    %144 = tpu.dynamic_rotate %126 by %c1_i32_55 dim 1 : vector<16x256xf32>, i32 -> vector<16x256xf32>
    %145 = vector.broadcast %5 : vector<1x256xf32> to vector<16x256xf32>
    %146 = arith.mulf %144, %145 : vector<16x256xf32>
    %147 = arith.truncf %146 : vector<16x256xf32> to vector<16x256xbf16>
    %148 = arith.truncf %126 : vector<16x256xf32> to vector<16x256xbf16>
    %c255_i32_56 = arith.constant 255 : i32
    %149 = tpu.dynamic_rotate %126 by %c255_i32_56 dim 1 : vector<16x256xf32>, i32 -> vector<16x256xf32>
    %150 = vector.broadcast %6 : vector<1x256xf32> to vector<16x256xf32>
    %151 = arith.mulf %149, %150 : vector<16x256xf32>
    %152 = arith.truncf %151 : vector<16x256xf32> to vector<16x256xbf16>
    %153 = tpu.concatenate %147, %148, %152 in 0 : vector<16x256xbf16>, vector<16x256xbf16>, vector<16x256xbf16> -> vector<48x256xbf16>
    %c1_57 = arith.constant 1 : index
    %c0_58 = arith.constant 0 : index
    %c0_59 = arith.constant 0 : index
    %154 = vector.load %arg12[%c1_57, %c0_58, %c0_59] : memref<3x16x48xbf16, #tpu.memory_space<vmem>>, vector<1x16x48xbf16>
    %155 = vector.shape_cast %154 : vector<1x16x48xbf16> to vector<16x48xbf16>
    %cst_60 = arith.constant dense<0.000000e+00> : vector<16x256xf32>
    %156 = tpu.matmul %155, %153, %cst_60 {dimension_numbers = #tpu.dot_dimension_numbers<[1], [0], [0], [1], [0, 0, 1, 1], [], []>} : vector<16x48xbf16>, vector<48x256xbf16>, vector<16x256xf32> -> vector<16x256xf32>
    %157 = arith.addf %143, %156 : vector<16x256xf32>
    %c240_i32_61 = arith.constant 240 : i32
    %158 = tpu.dynamic_rotate %126 by %c240_i32_61 dim 1 : vector<16x256xf32>, i32 -> vector<16x256xf32>
    %159 = vector.broadcast %4 : vector<1x256xf32> to vector<16x256xf32>
    %160 = arith.mulf %158, %159 : vector<16x256xf32>
    %c1_i32_62 = arith.constant 1 : i32
    %161 = tpu.dynamic_rotate %160 by %c1_i32_62 dim 1 : vector<16x256xf32>, i32 -> vector<16x256xf32>
    %162 = vector.broadcast %5 : vector<1x256xf32> to vector<16x256xf32>
    %163 = arith.mulf %161, %162 : vector<16x256xf32>
    %164 = arith.truncf %163 : vector<16x256xf32> to vector<16x256xbf16>
    %165 = arith.truncf %160 : vector<16x256xf32> to vector<16x256xbf16>
    %c255_i32_63 = arith.constant 255 : i32
    %166 = tpu.dynamic_rotate %160 by %c255_i32_63 dim 1 : vector<16x256xf32>, i32 -> vector<16x256xf32>
    %167 = vector.broadcast %6 : vector<1x256xf32> to vector<16x256xf32>
    %168 = arith.mulf %166, %167 : vector<16x256xf32>
    %169 = arith.truncf %168 : vector<16x256xf32> to vector<16x256xbf16>
    %170 = tpu.concatenate %164, %165, %169 in 0 : vector<16x256xbf16>, vector<16x256xbf16>, vector<16x256xbf16> -> vector<48x256xbf16>
    %c2_64 = arith.constant 2 : index
    %c0_65 = arith.constant 0 : index
    %c0_66 = arith.constant 0 : index
    %171 = vector.load %arg12[%c2_64, %c0_65, %c0_66] : memref<3x16x48xbf16, #tpu.memory_space<vmem>>, vector<1x16x48xbf16>
    %172 = vector.shape_cast %171 : vector<1x16x48xbf16> to vector<16x48xbf16>
    %cst_67 = arith.constant dense<0.000000e+00> : vector<16x256xf32>
    %173 = tpu.matmul %172, %170, %cst_67 {dimension_numbers = #tpu.dot_dimension_numbers<[1], [0], [0], [1], [0, 0, 1, 1], [], []>} : vector<16x48xbf16>, vector<48x256xbf16>, vector<16x256xf32> -> vector<16x256xf32>
    %174 = arith.addf %157, %173 : vector<16x256xf32>
    %175 = vector.broadcast %127 : vector<16x1xf32> to vector<16x256xf32>
    %176 = arith.addf %174, %175 : vector<16x256xf32>
    %c0_68 = arith.constant 0 : index
    %c0_69 = arith.constant 0 : index
    %177 = vector.load %arg14[%c0_68, %c0_69] : memref<16x8xbf16, #tpu.memory_space<vmem>>, vector<16x8xbf16>
    %178 = arith.truncf %1 : vector<8x256xf32> to vector<8x256xbf16>
    %cst_70 = arith.constant dense<0.000000e+00> : vector<16x256xf32>
    %179 = tpu.matmul %177, %178, %cst_70 {dimension_numbers = #tpu.dot_dimension_numbers<[1], [0], [0], [1], [0, 0, 1, 1], [], []>} : vector<16x8xbf16>, vector<8x256xbf16>, vector<16x256xf32> -> vector<16x256xf32>
    %c0_71 = arith.constant 0 : index
    %c0_72 = arith.constant 0 : index
    %180 = vector.load %arg15[%c0_71, %c0_72] : memref<16x1xf32, #tpu.memory_space<vmem>>, vector<16x1xf32>
    %181 = vector.broadcast %180 : vector<16x1xf32> to vector<16x256xf32>
    %182 = arith.addf %179, %181 : vector<16x256xf32>
    %183 = arith.addf %182, %176 : vector<16x256xf32>
    %c0_73 = arith.constant 0 : index
    %c0_74 = arith.constant 0 : index
    %c0_75 = arith.constant 0 : index
    %184 = vector.load %arg16[%c0_73, %c0_74, %c0_75] : memref<1x16x256xf32, #tpu.memory_space<vmem>>, vector<1x16x256xf32>
    %185 = vector.shape_cast %184 : vector<1x16x256xf32> to vector<16x256xf32>
    %186 = vector.shape_cast %183 : vector<16x256xf32> to vector<1x16x256xf32>
    tpu.vector_store %arg16[%c0_73, %c0_74, %c0_75], %186 {strides = array<i32>} : memref<1x16x256xf32, #tpu.memory_space<vmem>>, vector<1x16x256xf32>,
    return
  }
  func.func @transform_0(%arg0: i32) -> (i32, i32, i32) {
    %c0_i32 = arith.constant 0 : i32
    %c0_i32_0 = arith.constant 0 : i32
    %c0_i32_1 = arith.constant 0 : i32
    return %arg0, %c0_i32, %c0_i32_0 : i32, i32, i32
  }
  func.func @transform_1(%arg0: i32) -> (i32, i32, i32) {
    %c0_i32 = arith.constant 0 : i32
    %c0_i32_0 = arith.constant 0 : i32
    %c0_i32_1 = arith.constant 0 : i32
    return %arg0, %c0_i32, %c0_i32_0 : i32, i32, i32
  }
  func.func @transform_2(%arg0: i32) -> (i32, i32) {
    %c0_i32 = arith.constant 0 : i32
    %c0_i32_0 = arith.constant 0 : i32
    %c0_i32_1 = arith.constant 0 : i32
    return %c0_i32, %c0_i32_0 : i32, i32
  }
  func.func @transform_3(%arg0: i32) -> (i32, i32) {
    %c0_i32 = arith.constant 0 : i32
    %c0_i32_0 = arith.constant 0 : i32
    %c0_i32_1 = arith.constant 0 : i32
    return %c0_i32, %c0_i32_0 : i32, i32
  }
  func.func @transform_4(%arg0: i32) -> (i32, i32) {
    %c0_i32 = arith.constant 0 : i32
    %c0_i32_0 = arith.constant 0 : i32
    %c0_i32_1 = arith.constant 0 : i32
    return %c0_i32, %c0_i32_0 : i32, i32
  }
  func.func @transform_5(%arg0: i32) -> (i32, i32) {
    %c0_i32 = arith.constant 0 : i32
    %c0_i32_0 = arith.constant 0 : i32
    %c0_i32_1 = arith.constant 0 : i32
    return %c0_i32, %c0_i32_0 : i32, i32
  }
  func.func @transform_6(%arg0: i32) -> (i32, i32, i32) {
    %c0_i32 = arith.constant 0 : i32
    %c0_i32_0 = arith.constant 0 : i32
    %c0_i32_1 = arith.constant 0 : i32
    %c0_i32_2 = arith.constant 0 : i32
    return %c0_i32, %c0_i32_0, %c0_i32_1 : i32, i32, i32
  }
  func.func @transform_7(%arg0: i32) -> (i32, i32) {
    %c0_i32 = arith.constant 0 : i32
    %c0_i32_0 = arith.constant 0 : i32
    %c0_i32_1 = arith.constant 0 : i32
    return %c0_i32, %c0_i32_0 : i32, i32
  }
  func.func @transform_8(%arg0: i32) -> (i32, i32) {
    %c0_i32 = arith.constant 0 : i32
    %c0_i32_0 = arith.constant 0 : i32
    %c0_i32_1 = arith.constant 0 : i32
    return %c0_i32, %c0_i32_0 : i32, i32
  }
  func.func @transform_9(%arg0: i32) -> (i32, i32) {
    %c0_i32 = arith.constant 0 : i32
    %c0_i32_0 = arith.constant 0 : i32
    %c0_i32_1 = arith.constant 0 : i32
    return %c0_i32, %c0_i32_0 : i32, i32
  }
  func.func @transform_10(%arg0: i32) -> (i32, i32) {
    %c0_i32 = arith.constant 0 : i32
    %c0_i32_0 = arith.constant 0 : i32
    %c0_i32_1 = arith.constant 0 : i32
    return %c0_i32, %c0_i32_0 : i32, i32
  }
  func.func @transform_11(%arg0: i32) -> (i32, i32, i32) {
    %c0_i32 = arith.constant 0 : i32
    %c0_i32_0 = arith.constant 0 : i32
    %c0_i32_1 = arith.constant 0 : i32
    %c0_i32_2 = arith.constant 0 : i32
    return %c0_i32, %c0_i32_0, %c0_i32_1 : i32, i32, i32
  }
  func.func @transform_12(%arg0: i32) -> (i32, i32) {
    %c0_i32 = arith.constant 0 : i32
    %c0_i32_0 = arith.constant 0 : i32
    %c0_i32_1 = arith.constant 0 : i32
    return %c0_i32, %c0_i32_0 : i32, i32
  }
  func.func @transform_13(%arg0: i32) -> (i32, i32) {
    %c0_i32 = arith.constant 0 : i32
    %c0_i32_0 = arith.constant 0 : i32
    %c0_i32_1 = arith.constant 0 : i32
    return %c0_i32, %c0_i32_0 : i32, i32
  }
  func.func @transform_14(%arg0: i32) -> (i32, i32) {
    %c0_i32 = arith.constant 0 : i32
    %c0_i32_0 = arith.constant 0 : i32
    %c0_i32_1 = arith.constant 0 : i32
    return %c0_i32, %c0_i32_0 : i32, i32
  }
  func.func @transform_15(%arg0: i32) -> (i32, i32, i32) {
    %c0_i32 = arith.constant 0 : i32
    %c0_i32_0 = arith.constant 0 : i32
    %c0_i32_1 = arith.constant 0 : i32
    return %arg0, %c0_i32, %c0_i32_0 : i32, i32, i32
  }
}

</mosaic_0001>

<llo_original>
// kernel: tpu_custom_call.1
$region0: #{tpu_custom_call.1}
  #allocation0 [shape = 'u32[]', space=smem, size = 0x4, offset = 0x4, fixed_abs, tag = 'smem constant byte address 0x4 - core index']
  #allocation1 [shape = 'u32[144,128]{1,0:T(1,128)}', space=vmem, size = 0x12000, scoped, tag = 'internal scratch']
  %s0 = inlined_call_operand.vmem [shape: f32[2,8,256], index: 0, kind: input, shape index: {}]
  %s1 = inlined_call_operand.vmem [shape: f32[2,16,1], index: 1, kind: input, shape index: {}]
  %s2 = inlined_call_operand.vmem [shape: f32[4,256], index: 2, kind: input, shape index: {}]
  %s3 = inlined_call_operand.vmem [shape: f32[8,8], index: 3, kind: input, shape index: {}]
  %s4 = inlined_call_operand.vmem [shape: f32[8,1], index: 4, kind: input, shape index: {}]
  %s5 = inlined_call_operand.vmem [shape: f32[8,1], index: 5, kind: input, shape index: {}]
  %s6 = inlined_call_operand.vmem [shape: bf16[3,16,24], index: 6, kind: input, shape index: {}]
  %s7 = inlined_call_operand.vmem [shape: f32[16,1], index: 7, kind: input, shape index: {}]
  %s8 = inlined_call_operand.vmem [shape: f32[16,16], index: 8, kind: input, shape index: {}]
  %s9 = inlined_call_operand.vmem [shape: f32[16,1], index: 9, kind: input, shape index: {}]
  %s10 = inlined_call_operand.vmem [shape: f32[16,1], index: 10, kind: input, shape index: {}]
  %s11 = inlined_call_operand.vmem [shape: bf16[3,16,48], index: 11, kind: input, shape index: {}]
  %s12 = inlined_call_operand.vmem [shape: f32[16,1], index: 12, kind: input, shape index: {}]
  %s13 = inlined_call_operand.vmem [shape: bf16[16,8], index: 13, kind: input, shape index: {}]
  %s14 = inlined_call_operand.vmem [shape: f32[16,1], index: 14, kind: input, shape index: {}]
  %s15 = inlined_call_operand.hbm [shape: f32[2,16,256], index: 15, kind: output, shape index: {}]
  %s16 = sld [smem:[#allocation0]]
  $region93: #{tpu_custom_call.1} parent=0
    _
  %s18 = ssub.s32 1, %s16
  %s19 = scalar_select 0, %s18, %s16
  $region1: #{tpu_custom_call.1} parent=0
    #allocation2 [shape = 'u8[32768]{0}', space=vmem, size = 0x8000, scoped, tag = 'output window, operand 0']
    #allocation3 [shape = 's32[2]{0}', space=sflag, size = 0x8, scoped, tag = 'scoped memory for tpu_custom_call.1']
    %20 = vsyncpa [#allocation3], 0
    %s21 = scalar_lea.sflag [#allocation3], 1
    %22 = vsyncpa %s21, 0
    loop: start=0, step=1, limit=4
    $region2: #{tpu_custom_call.1} parent=1 // loop_pre_header
      _
    $region3: #{tpu_custom_call.1} parent=1 // loop_header
      %s24 = sphi 0, %s28
      %p25 = scmp.ge.s32.totalorder %s24, 4
      %s34 = sphi 0, %s36
      %s37 = sphi 0, %s34
      %s38 = sphi 0, %s37
      %s54 = sphi 0, %s38
      %s60 = sphi 0, %s62
      %s63 = sphi 0, %s60
      %s64 = sphi 0, %s63
      %s80 = sphi 0, %s64
      %s84 = sphi 0, %s84
      %s86 = sphi 0, %s84
      %s87 = sphi 0, %s86
      %s101 = sphi 0, %s87
      %s105 = sphi 0, %s105
      %s107 = sphi 0, %s105
      %s108 = sphi 0, %s107
      %s122 = sphi 0, %s108
      %s126 = sphi 0, %s126
      %s128 = sphi 0, %s126
      %s129 = sphi 0, %s128
      %s143 = sphi 0, %s129
      %s147 = sphi 0, %s147
      %s149 = sphi 0, %s147
      %s150 = sphi 0, %s149
      %s164 = sphi 0, %s150
      %s168 = sphi 0, %s168
      %s170 = sphi 0, %s168
      %s171 = sphi 0, %s170
      %s185 = sphi 0, %s171
      %s189 = sphi 0, %s189
      %s191 = sphi 0, %s189
      %s192 = sphi 0, %s191
      %s206 = sphi 0, %s192
      %s210 = sphi 0, %s210
      %s212 = sphi 0, %s210
      %s213 = sphi 0, %s212
      %s227 = sphi 0, %s213
      %s231 = sphi 0, %s231
      %s233 = sphi 0, %s231
      %s234 = sphi 0, %s233
      %s248 = sphi 0, %s234
      %s252 = sphi 0, %s252
      %s254 = sphi 0, %s252
      %s255 = sphi 0, %s254
      %s269 = sphi 0, %s255
      %s273 = sphi 0, %s273
      %s275 = sphi 0, %s273
      %s276 = sphi 0, %s275
      %s290 = sphi 0, %s276
      %s294 = sphi 0, %s294
      %s296 = sphi 0, %s294
      %s297 = sphi 0, %s296
      %s311 = sphi 0, %s297
      %s315 = sphi 0, %s315
      %s317 = sphi 0, %s315
      %s318 = sphi 0, %s317
      %s332 = sphi 0, %s318
      %s336 = sphi 0, %s336
      %s338 = sphi 0, %s336
      %s339 = sphi 0, %s338
      %s353 = sphi 0, %s339
      %s359 = sphi 0, %s361
      %s362 = sphi 0, %s359
      %s363 = sphi 0, %s362
      %s379 = sphi 0, %s363
    $region4: #{tpu_custom_call.1} parent=1 // loop_header_branch
      %27 = sbr.rel (%p25) target = $region8
    $region5: #{tpu_custom_call.1} parent=1 // loop_body
      %s29 = ssub.s32 %s24, 1
      %s30 = ssub.s32 %s24, 2
      %s31 = sadd.s32 %s24, 1
      %s32 = ssub.s32 %s24, %s31
      %p33 = scmp.eq.s32.totalorder %s32, 0
      %s35 = sadd.s32 %s34, 1
      %s36 = scalar_select %p33, %s34, %s35
      %p39 = pneg %p33
      %p40 = scmp.eq.s32.totalorder %s24, 1
      %p41 = por %p39, %p40
      %p42 = scmp.ne.s32.totalorder %s34, %s37
      %p43 = scmp.eq.s32.totalorder %s24, 0
      %p44 = por %p42, %p43
      %p45 = scmp.ne.s32.totalorder %s34, %s37
      %p46 = scmp.eq.s32.totalorder %s29, 1
      %p47 = por %p45, %p46
      %p48 = scmp.ne.s32.totalorder %s37, %s38
      %p49 = scmp.eq.s32.totalorder %s29, 0
      %p50 = por %p48, %p49
      %p51 = scmp.ne.s32.totalorder %s37, %s38
      %p52 = scmp.eq.s32.totalorder %s30, 1
      %p53 = por %p51, %p52
      %p55 = scmp.ne.s32.totalorder %s38, %s54
      %p56 = scmp.eq.s32.totalorder %s30, 0
      %p57 = por %p55, %p56
      %s58 = ssub.s32 %s24, %s31
      %p59 = scmp.eq.s32.totalorder %s58, 0
      %s61 = sadd.s32 %s60, 1
      %s62 = scalar_select %p59, %s60, %s61
      %p65 = pneg %p59
      %p66 = scmp.eq.s32.totalorder %s24, 1
      %p67 = por %p65, %p66
      %p68 = scmp.ne.s32.totalorder %s60, %s63
      %p69 = scmp.eq.s32.totalorder %s24, 0
      %p70 = por %p68, %p69
      %p71 = scmp.ne.s32.totalorder %s60, %s63
      %p72 = scmp.eq.s32.totalorder %s29, 1
      %p73 = por %p71, %p72
      %p74 = scmp.ne.s32.totalorder %s63, %s64
      %p75 = scmp.eq.s32.totalorder %s29, 0
      %p76 = por %p74, %p75
      %p77 = scmp.ne.s32.totalorder %s63, %s64
      %p78 = scmp.eq.s32.totalorder %s30, 1
      %p79 = por %p77, %p78
      %p81 = scmp.ne.s32.totalorder %s64, %s80
      %p82 = scmp.eq.s32.totalorder %s30, 0
      %p83 = por %p81, %p82
      %s85 = sadd.s32 %s84, 1
      %p88 = scmp.eq.s32.totalorder %s24, 1
      %p89 = scmp.ne.s32.totalorder %s84, %s86
      %p90 = scmp.eq.s32.totalorder %s24, 0
      %p91 = por %p89, %p90
      %p92 = scmp.ne.s32.totalorder %s84, %s86
      %p93 = scmp.eq.s32.totalorder %s29, 1
      %p94 = por %p92, %p93
      %p95 = scmp.ne.s32.totalorder %s86, %s87
      %p96 = scmp.eq.s32.totalorder %s29, 0
      %p97 = por %p95, %p96
      %p98 = scmp.ne.s32.totalorder %s86, %s87
      %p99 = scmp.eq.s32.totalorder %s30, 1
      %p100 = por %p98, %p99
      %p102 = scmp.ne.s32.totalorder %s87, %s101
      %p103 = scmp.eq.s32.totalorder %s30, 0
      %p104 = por %p102, %p103
      %s106 = sadd.s32 %s105, 1
      %p109 = scmp.eq.s32.totalorder %s24, 1
      %p110 = scmp.ne.s32.totalorder %s105, %s107
      %p111 = scmp.eq.s32.totalorder %s24, 0
      %p112 = por %p110, %p111
      %p113 = scmp.ne.s32.totalorder %s105, %s107
      %p114 = scmp.eq.s32.totalorder %s29, 1
      %p115 = por %p113, %p114
      %p116 = scmp.ne.s32.totalorder %s107, %s108
      %p117 = scmp.eq.s32.totalorder %s29, 0
      %p118 = por %p116, %p117
      %p119 = scmp.ne.s32.totalorder %s107, %s108
      %p120 = scmp.eq.s32.totalorder %s30, 1
      %p121 = por %p119, %p120
      %p123 = scmp.ne.s32.totalorder %s108, %s122
      %p124 = scmp.eq.s32.totalorder %s30, 0
      %p125 = por %p123, %p124
      %s127 = sadd.s32 %s126, 1
      %p130 = scmp.eq.s32.totalorder %s24, 1
      %p131 = scmp.ne.s32.totalorder %s126, %s128
      %p132 = scmp.eq.s32.totalorder %s24, 0
      %p133 = por %p131, %p132
      %p134 = scmp.ne.s32.totalorder %s126, %s128
      %p135 = scmp.eq.s32.totalorder %s29, 1
      %p136 = por %p134, %p135
      %p137 = scmp.ne.s32.totalorder %s128, %s129
      %p138 = scmp.eq.s32.totalorder %s29, 0
      %p139 = por %p137, %p138
      %p140 = scmp.ne.s32.totalorder %s128, %s129
      %p141 = scmp.eq.s32.totalorder %s30, 1
      %p142 = por %p140, %p141
      %p144 = scmp.ne.s32.totalorder %s129, %s143
      %p145 = scmp.eq.s32.totalorder %s30, 0
      %p146 = por %p144, %p145
      %s148 = sadd.s32 %s147, 1
      %p151 = scmp.eq.s32.totalorder %s24, 1
      %p152 = scmp.ne.s32.totalorder %s147, %s149
      %p153 = scmp.eq.s32.totalorder %s24, 0
      %p154 = por %p152, %p153
      %p155 = scmp.ne.s32.totalorder %s147, %s149
      %p156 = scmp.eq.s32.totalorder %s29, 1
      %p157 = por %p155, %p156
      %p158 = scmp.ne.s32.totalorder %s149, %s150
      %p159 = scmp.eq.s32.totalorder %s29, 0
      %p160 = por %p158, %p159
      %p161 = scmp.ne.s32.totalorder %s149, %s150
      %p162 = scmp.eq.s32.totalorder %s30, 1
      %p163 = por %p161, %p162
      %p165 = scmp.ne.s32.totalorder %s150, %s164
      %p166 = scmp.eq.s32.totalorder %s30, 0
      %p167 = por %p165, %p166
      %s169 = sadd.s32 %s168, 1
      %p172 = scmp.eq.s32.totalorder %s24, 1
      %p173 = scmp.ne.s32.totalorder %s168, %s170
      %p174 = scmp.eq.s32.totalorder %s24, 0
      %p175 = por %p173, %p174
      %p176 = scmp.ne.s32.totalorder %s168, %s170
      %p177 = scmp.eq.s32.totalorder %s29, 1
      %p178 = por %p176, %p177
      %p179 = scmp.ne.s32.totalorder %s170, %s171
      %p180 = scmp.eq.s32.totalorder %s29, 0
      %p181 = por %p179, %p180
      %p182 = scmp.ne.s32.totalorder %s170, %s171
      %p183 = scmp.eq.s32.totalorder %s30, 1
      %p184 = por %p182, %p183
      %p186 = scmp.ne.s32.totalorder %s171, %s185
      %p187 = scmp.eq.s32.totalorder %s30, 0
      %p188 = por %p186, %p187
      %s190 = sadd.s32 %s189, 1
      %p193 = scmp.eq.s32.totalorder %s24, 1
      %p194 = scmp.ne.s32.totalorder %s189, %s191
      %p195 = scmp.eq.s32.totalorder %s24, 0
      %p196 = por %p194, %p195
      %p197 = scmp.ne.s32.totalorder %s189, %s191
      %p198 = scmp.eq.s32.totalorder %s29, 1
      %p199 = por %p197, %p198
      %p200 = scmp.ne.s32.totalorder %s191, %s192
      %p201 = scmp.eq.s32.totalorder %s29, 0
      %p202 = por %p200, %p201
      %p203 = scmp.ne.s32.totalorder %s191, %s192
      %p204 = scmp.eq.s32.totalorder %s30, 1
      %p205 = por %p203, %p204
      %p207 = scmp.ne.s32.totalorder %s192, %s206
      %p208 = scmp.eq.s32.totalorder %s30, 0
      %p209 = por %p207, %p208
      %s211 = sadd.s32 %s210, 1
      %p214 = scmp.eq.s32.totalorder %s24, 1
      %p215 = scmp.ne.s32.totalorder %s210, %s212
      %p216 = scmp.eq.s32.totalorder %s24, 0
      %p217 = por %p215, %p216
      %p218 = scmp.ne.s32.totalorder %s210, %s212
      %p219 = scmp.eq.s32.totalorder %s29, 1
      %p220 = por %p218, %p219
      %p221 = scmp.ne.s32.totalorder %s212, %s213
      %p222 = scmp.eq.s32.totalorder %s29, 0
      %p223 = por %p221, %p222
      %p224 = scmp.ne.s32.totalorder %s212, %s213
      %p225 = scmp.eq.s32.totalorder %s30, 1
      %p226 = por %p224, %p225
      %p228 = scmp.ne.s32.totalorder %s213, %s227
      %p229 = scmp.eq.s32.totalorder %s30, 0
      %p230 = por %p228, %p229
      %s232 = sadd.s32 %s231, 1
      %p235 = scmp.eq.s32.totalorder %s24, 1
      %p236 = scmp.ne.s32.totalorder %s231, %s233
      %p237 = scmp.eq.s32.totalorder %s24, 0
      %p238 = por %p236, %p237
      %p239 = scmp.ne.s32.totalorder %s231, %s233
      %p240 = scmp.eq.s32.totalorder %s29, 1
      %p241 = por %p239, %p240
      %p242 = scmp.ne.s32.totalorder %s233, %s234
      %p243 = scmp.eq.s32.totalorder %s29, 0
      %p244 = por %p242, %p243
      %p245 = scmp.ne.s32.totalorder %s233, %s234
      %p246 = scmp.eq.s32.totalorder %s30, 1
      %p247 = por %p245, %p246
      %p249 = scmp.ne.s32.totalorder %s234, %s248
      %p250 = scmp.eq.s32.totalorder %s30, 0
      %p251 = por %p249, %p250
      %s253 = sadd.s32 %s252, 1
      %p256 = scmp.eq.s32.totalorder %s24, 1
      %p257 = scmp.ne.s32.totalorder %s252, %s254
      %p258 = scmp.eq.s32.totalorder %s24, 0
      %p259 = por %p257, %p258
      %p260 = scmp.ne.s32.totalorder %s252, %s254
      %p261 = scmp.eq.s32.totalorder %s29, 1
      %p262 = por %p260, %p261
      %p263 = scmp.ne.s32.totalorder %s254, %s255
      %p264 = scmp.eq.s32.totalorder %s29, 0
      %p265 = por %p263, %p264
      %p266 = scmp.ne.s32.totalorder %s254, %s255
      %p267 = scmp.eq.s32.totalorder %s30, 1
      %p268 = por %p266, %p267
      %p270 = scmp.ne.s32.totalorder %s255, %s269
      %p271 = scmp.eq.s32.totalorder %s30, 0
      %p272 = por %p270, %p271
      %s274 = sadd.s32 %s273, 1
      %p277 = scmp.eq.s32.totalorder %s24, 1
      %p278 = scmp.ne.s32.totalorder %s273, %s275
      %p279 = scmp.eq.s32.totalorder %s24, 0
      %p280 = por %p278, %p279
      %p281 = scmp.ne.s32.totalorder %s273, %s275
      %p282 = scmp.eq.s32.totalorder %s29, 1
      %p283 = por %p281, %p282
      %p284 = scmp.ne.s32.totalorder %s275, %s276
      %p285 = scmp.eq.s32.totalorder %s29, 0
      %p286 = por %p284, %p285
      %p287 = scmp.ne.s32.totalorder %s275, %s276
      %p288 = scmp.eq.s32.totalorder %s30, 1
      %p289 = por %p287, %p288
      %p291 = scmp.ne.s32.totalorder %s276, %s290
      %p292 = scmp.eq.s32.totalorder %s30, 0
      %p293 = por %p291, %p292
      %s295 = sadd.s32 %s294, 1
      %p298 = scmp.eq.s32.totalorder %s24, 1
      %p299 = scmp.ne.s32.totalorder %s294, %s296
      %p300 = scmp.eq.s32.totalorder %s24, 0
      %p301 = por %p299, %p300
      %p302 = scmp.ne.s32.totalorder %s294, %s296
      %p303 = scmp.eq.s32.totalorder %s29, 1
      %p304 = por %p302, %p303
      %p305 = scmp.ne.s32.totalorder %s296, %s297
      %p306 = scmp.eq.s32.totalorder %s29, 0
      %p307 = por %p305, %p306
      %p308 = scmp.ne.s32.totalorder %s296, %s297
      %p309 = scmp.eq.s32.totalorder %s30, 1
      %p310 = por %p308, %p309
      %p312 = scmp.ne.s32.totalorder %s297, %s311
      %p313 = scmp.eq.s32.totalorder %s30, 0
      %p314 = por %p312, %p313
      %s316 = sadd.s32 %s315, 1
      %p319 = scmp.eq.s32.totalorder %s24, 1
      %p320 = scmp.ne.s32.totalorder %s315, %s317
      %p321 = scmp.eq.s32.totalorder %s24, 0
      %p322 = por %p320, %p321
      %p323 = scmp.ne.s32.totalorder %s315, %s317
      %p324 = scmp.eq.s32.totalorder %s29, 1
      %p325 = por %p323, %p324
      %p326 = scmp.ne.s32.totalorder %s317, %s318
      %p327 = scmp.eq.s32.totalorder %s29, 0
      %p328 = por %p326, %p327
      %p329 = scmp.ne.s32.totalorder %s317, %s318
      %p330 = scmp.eq.s32.totalorder %s30, 1
      %p331 = por %p329, %p330
      %p333 = scmp.ne.s32.totalorder %s318, %s332
      %p334 = scmp.eq.s32.totalorder %s30, 0
      %p335 = por %p333, %p334
      %s337 = sadd.s32 %s336, 1
      %p340 = scmp.eq.s32.totalorder %s24, 1
      %p341 = scmp.ne.s32.totalorder %s336, %s338
      %p342 = scmp.eq.s32.totalorder %s24, 0
      %p343 = por %p341, %p342
      %p344 = scmp.ne.s32.totalorder %s336, %s338
      %p345 = scmp.eq.s32.totalorder %s29, 1
      %p346 = por %p344, %p345
      %p347 = scmp.ne.s32.totalorder %s338, %s339
      %p348 = scmp.eq.s32.totalorder %s29, 0
      %p349 = por %p347, %p348
      %p350 = scmp.ne.s32.totalorder %s338, %s339
      %p351 = scmp.eq.s32.totalorder %s30, 1
      %p352 = por %p350, %p351
      %p354 = scmp.ne.s32.totalorder %s339, %s353
      %p355 = scmp.eq.s32.totalorder %s30, 0
      %p356 = por %p354, %p355
      %s357 = ssub.s32 %s24, %s31
      %p358 = scmp.eq.s32.totalorder %s357, 0
      %s360 = sadd.s32 %s359, 1
      %s361 = scalar_select %p358, %s359, %s360
      %p364 = pneg %p358
      %p365 = scmp.eq.s32.totalorder %s24, 1
      %p366 = por %p364, %p365
      %p367 = scmp.ne.s32.totalorder %s359, %s362
      %p368 = scmp.eq.s32.totalorder %s24, 0
      %p369 = por %p367, %p368
      %p370 = scmp.ne.s32.totalorder %s359, %s362
      %p371 = scmp.eq.s32.totalorder %s29, 1
      %p372 = por %p370, %p371
      %p373 = scmp.ne.s32.totalorder %s362, %s363
      %p374 = scmp.eq.s32.totalorder %s29, 0
      %p375 = por %p373, %p374
      %p376 = scmp.ne.s32.totalorder %s362, %s363
      %p377 = scmp.eq.s32.totalorder %s30, 1
      %p378 = por %p376, %p377
      %p380 = scmp.ne.s32.totalorder %s363, %s379
      %p381 = scmp.eq.s32.totalorder %s30, 0
      %p382 = por %p380, %p381
      %p383 = scmp.le.s32.totalorder 1, %s24
      %p384 = scmp.lt.s32.totalorder %s24, 3
      %p385 = pnand %p383, %p384
      %p386 = pneg %p385
      // Predicated region
      $region9: #{tpu_custom_call.1} parent=5 // pred_check
        _
      $region10: #{tpu_custom_call.1} parent=5 // pred_check_branch
        %388 = sbr.rel (%p385) target = $region12
      $region11: #{tpu_custom_call.1} parent=5 // pred_region
        %s389 = ssub.s32 %s24, 1
        // Predicated region
        $region13: #{tpu_custom_call.1} parent=11 // pred_check
          %p390 = pneg %p97
        $region14: #{tpu_custom_call.1} parent=11 // pred_check_branch
          %392 = sbr.rel (%p390) target = $region16
        $region15: #{tpu_custom_call.1} parent=11 // pred_region
          _
        $region16: #{tpu_custom_call.1} parent=11 // pred_fallthru
          _
        // Predicated region
        $region17: #{tpu_custom_call.1} parent=11 // pred_check
          %p393 = pneg %p118
        $region18: #{tpu_custom_call.1} parent=11 // pred_check_branch
          %395 = sbr.rel (%p393) target = $region20
        $region19: #{tpu_custom_call.1} parent=11 // pred_region
          _
        $region20: #{tpu_custom_call.1} parent=11 // pred_fallthru
          _
        // Predicated region
        $region21: #{tpu_custom_call.1} parent=11 // pred_check
          %p396 = pneg %p139
        $region22: #{tpu_custom_call.1} parent=11 // pred_check_branch
          %398 = sbr.rel (%p396) target = $region24
        $region23: #{tpu_custom_call.1} parent=11 // pred_region
          _
        $region24: #{tpu_custom_call.1} parent=11 // pred_fallthru
          _
        // Predicated region
        $region25: #{tpu_custom_call.1} parent=11 // pred_check
          %p399 = pneg %p160
        $region26: #{tpu_custom_call.1} parent=11 // pred_check_branch
          %401 = sbr.rel (%p399) target = $region28
        $region27: #{tpu_custom_call.1} parent=11 // pred_region
          _
        $region28: #{tpu_custom_call.1} parent=11 // pred_fallthru
          _
        // Predicated region
        $region29: #{tpu_custom_call.1} parent=11 // pred_check
          %p402 = pneg %p181
        $region30: #{tpu_custom_call.1} parent=11 // pred_check_branch
          %404 = sbr.rel (%p402) target = $region32
        $region31: #{tpu_custom_call.1} parent=11 // pred_region
          _
        $region32: #{tpu_custom_call.1} parent=11 // pred_fallthru
          _
        // Predicated region
        $region33: #{tpu_custom_call.1} parent=11 // pred_check
          %p405 = pneg %p202
        $region34: #{tpu_custom_call.1} parent=11 // pred_check_branch
          %407 = sbr.rel (%p405) target = $region36
        $region35: #{tpu_custom_call.1} parent=11 // pred_region
          _
        $region36: #{tpu_custom_call.1} parent=11 // pred_fallthru
          _
        // Predicated region
        $region37: #{tpu_custom_call.1} parent=11 // pred_check
          %p408 = pneg %p223
        $region38: #{tpu_custom_call.1} parent=11 // pred_check_branch
          %410 = sbr.rel (%p408) target = $region40
        $region39: #{tpu_custom_call.1} parent=11 // pred_region
          _
        $region40: #{tpu_custom_call.1} parent=11 // pred_fallthru
          _
        // Predicated region
        $region41: #{tpu_custom_call.1} parent=11 // pred_check
          %p411 = pneg %p244
        $region42: #{tpu_custom_call.1} parent=11 // pred_check_branch
          %413 = sbr.rel (%p411) target = $region44
        $region43: #{tpu_custom_call.1} parent=11 // pred_region
          _
        $region44: #{tpu_custom_call.1} parent=11 // pred_fallthru
          _
        // Predicated region
        $region45: #{tpu_custom_call.1} parent=11 // pred_check
          %p414 = pneg %p265
        $region46: #{tpu_custom_call.1} parent=11 // pred_check_branch
          %416 = sbr.rel (%p414) target = $region48
        $region47: #{tpu_custom_call.1} parent=11 // pred_region
          _
        $region48: #{tpu_custom_call.1} parent=11 // pred_fallthru
          _
        // Predicated region
        $region49: #{tpu_custom_call.1} parent=11 // pred_check
          %p417 = pneg %p286
        $region50: #{tpu_custom_call.1} parent=11 // pred_check_branch
          %419 = sbr.rel (%p417) target = $region52
        $region51: #{tpu_custom_call.1} parent=11 // pred_region
          _
        $region52: #{tpu_custom_call.1} parent=11 // pred_fallthru
          _
        // Predicated region
        $region53: #{tpu_custom_call.1} parent=11 // pred_check
          %p420 = pneg %p307
        $region54: #{tpu_custom_call.1} parent=11 // pred_check_branch
          %422 = sbr.rel (%p420) target = $region56
        $region55: #{tpu_custom_call.1} parent=11 // pred_region
          _
        $region56: #{tpu_custom_call.1} parent=11 // pred_fallthru
          _
        // Predicated region
        $region57: #{tpu_custom_call.1} parent=11 // pred_check
          %p423 = pneg %p328
        $region58: #{tpu_custom_call.1} parent=11 // pred_check_branch
          %425 = sbr.rel (%p423) target = $region60
        $region59: #{tpu_custom_call.1} parent=11 // pred_region
          _
        $region60: #{tpu_custom_call.1} parent=11 // pred_fallthru
          _
        // Predicated region
        $region61: #{tpu_custom_call.1} parent=11 // pred_check
          %p426 = pneg %p349
        $region62: #{tpu_custom_call.1} parent=11 // pred_check_branch
          %428 = sbr.rel (%p426) target = $region64
        $region63: #{tpu_custom_call.1} parent=11 // pred_region
          _
        $region64: #{tpu_custom_call.1} parent=11 // pred_fallthru
          _
      $region12: #{tpu_custom_call.1} parent=5 // pred_fallthru
        _
      %p429 = scmp.lt.s32.totalorder %s24, 2
      // Predicated region
      $region65: #{tpu_custom_call.1} parent=5 // pred_check
        %p430 = pneg %p429
      $region66: #{tpu_custom_call.1} parent=5 // pred_check_branch
        %432 = sbr.rel (%p430) target = $region68
      $region67: #{tpu_custom_call.1} parent=5 // pred_region
        // Predicated region
        $region69: #{tpu_custom_call.1} parent=67 // pred_check
          %p433 = pneg %p44
        $region70: #{tpu_custom_call.1} parent=67 // pred_check_branch
          %435 = sbr.rel (%p433) target = $region72
        $region71: #{tpu_custom_call.1} parent=67 // pred_region
          %p436 = scmp.lt.s32.totalorder %s24, 1
          %s437 = scalar_select %p436, %s24, 1
          %s438 = smul.addr %s437, 2
          %s439 = smul.addr %s438, 8
          %s440 = scalar_lea.vmem %s0, %s439
        $region72: #{tpu_custom_call.1} parent=67 // pred_fallthru
          _
        // Predicated region
        $region73: #{tpu_custom_call.1} parent=67 // pred_check
          %p441 = pneg %p70
        $region74: #{tpu_custom_call.1} parent=67 // pred_check_branch
          %443 = sbr.rel (%p441) target = $region76
        $region75: #{tpu_custom_call.1} parent=67 // pred_region
          %p444 = scmp.lt.s32.totalorder %s24, 1
          %s445 = scalar_select %p444, %s24, 1
          %s446 = smul.addr %s445, 2
          %s447 = smul.addr %s446, 8
          %s448 = scalar_lea.vmem %s1, %s447
        $region76: #{tpu_custom_call.1} parent=67 // pred_fallthru
          _
      $region68: #{tpu_custom_call.1} parent=5 // pred_fallthru
        _
      %p449 = scmp.le.s32.totalorder 1, %s24
      %p450 = scmp.lt.s32.totalorder %s24, 3
      %p451 = pnand %p449, %p450
      %p452 = pneg %p451
      // Predicated region
      $region77: #{tpu_custom_call.1} parent=5 // pred_check
        _
      $region78: #{tpu_custom_call.1} parent=5 // pred_check_branch
        %454 = sbr.rel (%p451) target = $region80
      $region79: #{tpu_custom_call.1} parent=5 // pred_region
        %s455 = ssub.s32 %s24, 1
        %p456 = scmp.lt.s32.totalorder %s29, 1
        %s457 = scalar_select %p456, %s29, 1
        %s458 = smul.addr %s457, 2
        %s459 = smul.addr %s458, 8
        %s460 = scalar_lea.vmem %s0, %s459
        %p461 = pneg %p50
        %p462 = pneg %p47
        %p463 = scmp.lt.s32.totalorder %s29, 1
        %s464 = scalar_select %p463, %s29, 1
        %s465 = smul.addr %s464, 2
        %s466 = smul.addr %s465, 8
        %s467 = scalar_lea.vmem %s1, %s466
        %p468 = pneg %p76
        %p469 = pneg %p73
        %p470 = pneg %p97
        %p471 = pneg %p94
        %p472 = pneg %p118
        %p473 = pneg %p115
        %p474 = pneg %p139
        %p475 = pneg %p136
        %p476 = pneg %p160
        %p477 = pneg %p157
        %p478 = pneg %p181
        %p479 = pneg %p178
        %p480 = pneg %p202
        %p481 = pneg %p199
        %p482 = pneg %p223
        %p483 = pneg %p220
        %p484 = pneg %p244
        %p485 = pneg %p241
        %p486 = pneg %p265
        %p487 = pneg %p262
        %p488 = pneg %p286
        %p489 = pneg %p283
        %p490 = pneg %p307
        %p491 = pneg %p304
        %p492 = pneg %p328
        %p493 = pneg %p325
        %p494 = pneg %p349
        %p495 = pneg %p346
        %p496 = pneg %p375
        %p497 = pneg %p372
        %s498 = sand.u32 %s362, 1
        %s499 = scalar_lea.sflag [#allocation3], %s498
        %s500 = sand.u32 %s362, 1
        %s501 = smul.addr %s500, 32
        %s502 = scalar_lea.vmem [#allocation2], %s501
        %p503 = scmp.lt.s32.totalorder %s29, 1
        %s504 = scalar_select %p503, %s29, 1
        %s505 = smul.addr %s504, 2
        %s506 = smul.addr %s505, 8
        %s507 = scalar_lea.vmem %s0, %s506
        %p508 = scmp.lt.s32.totalorder %s29, 1
        %s509 = scalar_select %p508, %s29, 1
        %s510 = smul.addr %s509, 2
        %s511 = smul.addr %s510, 8
        %s512 = scalar_lea.vmem %s1, %s511
        %v514 = vld [vmem:[%s507] sm:$0xff]
        %v515 = vld [vmem:[%s507 + $0x8] sm:$0xff]
        %v516 = vld [vmem:[%s2] sm:$0xff]
        %v517 = vld [vmem:[%s3] sm:$0xff]
        %v518 = vld [vmem:[%s4] sm:$0xff]
        %v519 = vld [vmem:[%s5] sm:$0xff]
        %v520 = vadd.f32 %v514, %v515
        %521 = vadd.xlane.f32.xlu0 %v520
        %v522 = vpop.xlane.xlu0 %521
        %v523 = vmul.f32 %v514, %v514
        %v524 = vmul.f32 %v515, %v515
        %v525 = vadd.f32 %v523, %v524
        %526 = vadd.xlane.f32.xlu0 %v525
        %v527 = vpop.xlane.xlu0 %526
        %vm528 = vcmask 7168
        %v529 = vsel %vm528, %v522, %v527
        %vm530 = vcmask 64512
        %v532 = vsel %vm530, %v517, 0
        %534 = vmatprep.subr.mxu0 0.0
        %535 = vmatpush1.msra.mxu0 0.0
        %536 = vmatprep.subr.mxu0 0.0
        %537 = vmatpush1.msra.mxu0 0.0
        %538 = vmatprep.subr.mxu0 0.0
        %539 = vmatpush1.msra.mxu0 0.0
        %540 = vmatprep.subr.mxu0 0.0
        %541 = vmatpush1.msra.mxu0 0.0
        %542 = vmatprep.subr.mxu0 0.0
        %543 = vmatpush1.msra.mxu0 0.0
        %544 = vmatprep.subr.mxu0 0.0
        %545 = vmatpush1.msra.mxu0 0.0
        %546 = vmatprep.subr.mxu0 0.0
        %547 = vmatpush1.msra.mxu0 0.0
        %548 = vmatprep.subr.mxu0 0.0
        %549 = vmatpush1.msra.mxu0 0.0
        %550 = vmatprep.subr.mxu0 0.0
        %551 = vmatpush1.msra.mxu0 0.0
        %552 = vmatprep.subr.mxu0 0.0
        %553 = vmatpush1.msra.mxu0 0.0
        %554 = vmatprep.subr.mxu0 0.0
        %555 = vmatpush1.msra.mxu0 0.0
        %556 = vmatprep.subr.mxu0 0.0
        %557 = vmatpush1.msra.mxu0 0.0
        %558 = vmatprep.subr.mxu0 0.0
        %559 = vmatpush1.msra.mxu0 0.0
        %560 = vmatprep.subr.mxu0 0.0
        %561 = vmatpush1.msra.mxu0 0.0
        %562 = vmatprep.subr.mxu0 0.0
        %563 = vmatpush1.msra.mxu0 0.0
        %564 = vmatprep.subr.mxu0 0.0
        %v565 = vand.u32 %v529, 4294901760
        %566 = vmatpush1.msra.mxu0 %v565
        %567 = vmatprep.subr.mxu0 0.0
        %568 = vmatpush2.msra.mxu0 0.0
        %569 = vmatprep.subr.mxu0 0.0
        %570 = vmatpush2.msra.mxu0 0.0
        %571 = vmatprep.subr.mxu0 0.0
        %572 = vmatpush2.msra.mxu0 0.0
        %573 = vmatprep.subr.mxu0 0.0
        %574 = vmatpush2.msra.mxu0 0.0
        %575 = vmatprep.subr.mxu0 0.0
        %576 = vmatpush2.msra.mxu0 0.0
        %577 = vmatprep.subr.mxu0 0.0
        %578 = vmatpush2.msra.mxu0 0.0
        %579 = vmatprep.subr.mxu0 0.0
        %580 = vmatpush2.msra.mxu0 0.0
        %581 = vmatprep.subr.mxu0 0.0
        %582 = vmatpush2.msra.mxu0 0.0
        %583 = vmatprep.subr.mxu0 0.0
        %584 = vmatpush2.msra.mxu0 0.0
        %585 = vmatprep.subr.mxu0 0.0
        %586 = vmatpush2.msra.mxu0 0.0
        %587 = vmatprep.subr.mxu0 0.0
        %588 = vmatpush2.msra.mxu0 0.0
        %589 = vmatprep.subr.mxu0 0.0
        %590 = vmatpush2.msra.mxu0 0.0
        %591 = vmatprep.subr.mxu0 0.0
        %592 = vmatpush2.msra.mxu0 0.0
        %593 = vmatprep.subr.mxu0 0.0
        %594 = vmatpush2.msra.mxu0 0.0
        %595 = vmatprep.subr.mxu0 0.0
        %596 = vmatpush2.msra.mxu0 0.0
        %597 = vmatprep.subr.mxu0 0.0
        %598 = vmatpush2.msra.mxu0 0.0
        %599 = vmatprep.mubr.f32.mxu0 0.0
        %v600 = vand.u32 %v532, 4294901760
        %v601 = vsub.f32 %v532, %v600
        %v602 = vand.u32 %v601, 4294901760
        %v603 = vsub.f32 %v601, %v602
        %v604 = vand.u32 %v603, 4294901760
        %605 = vmatmul.mubr.f32.gmra.mxu0 %v604
        %v606 = vpop.f32.mrf.mxu0
        %v607 = vadd.f32 0.0, %v606
        %v608 = vpop.f32.mrf.mxu0
        %609 = vdwg.mxu0
        %610 = vmatprep.subr.mxu0 0.0
        %611 = vmatpush1.msra.mxu0 0.0
        %612 = vmatprep.subr.mxu0 0.0
        %613 = vmatpush1.msra.mxu0 0.0
        %614 = vmatprep.subr.mxu0 0.0
        %615 = vmatpush1.msra.mxu0 0.0
        %616 = vmatprep.subr.mxu0 0.0
        %617 = vmatpush1.msra.mxu0 0.0
        %618 = vmatprep.subr.mxu0 0.0
        %619 = vmatpush1.msra.mxu0 0.0
        %620 = vmatprep.subr.mxu0 0.0
        %621 = vmatpush1.msra.mxu0 0.0
        %622 = vmatprep.subr.mxu0 0.0
        %623 = vmatpush1.msra.mxu0 0.0
        %624 = vmatprep.subr.mxu0 0.0
        %625 = vmatpush1.msra.mxu0 0.0
        %626 = vmatprep.subr.mxu0 0.0
        %627 = vmatpush1.msra.mxu0 0.0
        %628 = vmatprep.subr.mxu0 0.0
        %629 = vmatpush1.msra.mxu0 0.0
        %630 = vmatprep.subr.mxu0 0.0
        %631 = vmatpush1.msra.mxu0 0.0
        %632 = vmatprep.subr.mxu0 0.0
        %633 = vmatpush1.msra.mxu0 0.0
        %634 = vmatprep.subr.mxu0 0.0
        %635 = vmatpush1.msra.mxu0 0.0
        %636 = vmatprep.subr.mxu0 0.0
        %637 = vmatpush1.msra.mxu0 0.0
        %638 = vmatprep.subr.mxu0 0.0
        %639 = vmatpush1.msra.mxu0 0.0
        %640 = vmatprep.subr.mxu0 0.0
        %v641 = vand.u32 %v529, 4294901760
        %v642 = vsub.f32 %v529, %v641
        %v643 = vand.u32 %v642, 4294901760
        %v644 = vsub.f32 %v642, %v643
        %v645 = vand.u32 %v644, 4294901760
        %646 = vmatpush1.msra.mxu0 %v645
        %647 = vmatprep.subr.mxu0 0.0
        %648 = vmatpush2.msra.mxu0 0.0
        %649 = vmatprep.subr.mxu0 0.0
        %650 = vmatpush2.msra.mxu0 0.0
        %651 = vmatprep.subr.mxu0 0.0
        %652 = vmatpush2.msra.mxu0 0.0
        %653 = vmatprep.subr.mxu0 0.0
        %654 = vmatpush2.msra.mxu0 0.0
        %655 = vmatprep.subr.mxu0 0.0
        %656 = vmatpush2.msra.mxu0 0.0
        %657 = vmatprep.subr.mxu0 0.0
        %658 = vmatpush2.msra.mxu0 0.0
        %659 = vmatprep.subr.mxu0 0.0
        %660 = vmatpush2.msra.mxu0 0.0
        %661 = vmatprep.subr.mxu0 0.0
        %662 = vmatpush2.msra.mxu0 0.0
        %663 = vmatprep.subr.mxu0 0.0
        %664 = vmatpush2.msra.mxu0 0.0
        %665 = vmatprep.subr.mxu0 0.0
        %666 = vmatpush2.msra.mxu0 0.0
        %667 = vmatprep.subr.mxu0 0.0
        %668 = vmatpush2.msra.mxu0 0.0
        %669 = vmatprep.subr.mxu0 0.0
        %670 = vmatpush2.msra.mxu0 0.0
        %671 = vmatprep.subr.mxu0 0.0
        %672 = vmatpush2.msra.mxu0 0.0
        %673 = vmatprep.subr.mxu0 0.0
        %674 = vmatpush2.msra.mxu0 0.0
        %675 = vmatprep.subr.mxu0 0.0
        %676 = vmatpush2.msra.mxu0 0.0
        %677 = vmatprep.subr.mxu0 0.0
        %678 = vmatpush2.msra.mxu0 0.0
        %679 = vmatprep.mubr.f32.mxu0 0.0
        %v680 = vand.u32 %v532, 4294901760
        %681 = vmatmul.mubr.f32.gmra.mxu0 %v680
        %v682 = vpop.f32.mrf.mxu0
        %v683 = vadd.f32 %v607, %v682
        %v684 = vpop.f32.mrf.mxu0
        %685 = vdwg.mxu0
        %686 = vmatprep.subr.mxu0 0.0
        %687 = vmatpush1.msra.mxu0 0.0
        %688 = vmatprep.subr.mxu0 0.0
        %689 = vmatpush1.msra.mxu0 0.0
        %690 = vmatprep.subr.mxu0 0.0
        %691 = vmatpush1.msra.mxu0 0.0
        %692 = vmatprep.subr.mxu0 0.0
        %693 = vmatpush1.msra.mxu0 0.0
        %694 = vmatprep.subr.mxu0 0.0
        %695 = vmatpush1.msra.mxu0 0.0
        %696 = vmatprep.subr.mxu0 0.0
        %697 = vmatpush1.msra.mxu0 0.0
        %698 = vmatprep.subr.mxu0 0.0
        %699 = vmatpush1.msra.mxu0 0.0
        %700 = vmatprep.subr.mxu0 0.0
        %701 = vmatpush1.msra.mxu0 0.0
        %702 = vmatprep.subr.mxu0 0.0
        %703 = vmatpush1.msra.mxu0 0.0
        %704 = vmatprep.subr.mxu0 0.0
        %705 = vmatpush1.msra.mxu0 0.0
        %706 = vmatprep.subr.mxu0 0.0
        %707 = vmatpush1.msra.mxu0 0.0
        %708 = vmatprep.subr.mxu0 0.0
        %709 = vmatpush1.msra.mxu0 0.0
        %710 = vmatprep.subr.mxu0 0.0
        %711 = vmatpush1.msra.mxu0 0.0
        %712 = vmatprep.subr.mxu0 0.0
        %713 = vmatpush1.msra.mxu0 0.0
        %714 = vmatprep.subr.mxu0 0.0
        %715 = vmatpush1.msra.mxu0 0.0
        %716 = vmatprep.subr.mxu0 0.0
        %v717 = vand.u32 %v529, 4294901760
        %v718 = vsub.f32 %v529, %v717
        %719 = vmatpush1.msra.mxu0 %v718
        %720 = vmatprep.subr.mxu0 0.0
        %721 = vmatpush2.msra.mxu0 0.0
        %722 = vmatprep.subr.mxu0 0.0
        %723 = vmatpush2.msra.mxu0 0.0
        %724 = vmatprep.subr.mxu0 0.0
        %725 = vmatpush2.msra.mxu0 0.0
        %726 = vmatprep.subr.mxu0 0.0
        %727 = vmatpush2.msra.mxu0 0.0
        %728 = vmatprep.subr.mxu0 0.0
        %729 = vmatpush2.msra.mxu0 0.0
        %730 = vmatprep.subr.mxu0 0.0
        %731 = vmatpush2.msra.mxu0 0.0
        %732 = vmatprep.subr.mxu0 0.0
        %733 = vmatpush2.msra.mxu0 0.0
        %734 = vmatprep.subr.mxu0 0.0
        %735 = vmatpush2.msra.mxu0 0.0
        %736 = vmatprep.subr.mxu0 0.0
        %737 = vmatpush2.msra.mxu0 0.0
        %738 = vmatprep.subr.mxu0 0.0
        %739 = vmatpush2.msra.mxu0 0.0
        %740 = vmatprep.subr.mxu0 0.0
        %741 = vmatpush2.msra.mxu0 0.0
        %742 = vmatprep.subr.mxu0 0.0
        %743 = vmatpush2.msra.mxu0 0.0
        %744 = vmatprep.subr.mxu0 0.0
        %745 = vmatpush2.msra.mxu0 0.0
        %746 = vmatprep.subr.mxu0 0.0
        %747 = vmatpush2.msra.mxu0 0.0
        %748 = vmatprep.subr.mxu0 0.0
        %749 = vmatpush2.msra.mxu0 0.0
        %750 = vmatprep.subr.mxu0 0.0
        %751 = vmatpush2.msra.mxu0 0.0
        %752 = vmatprep.mubr.f32.mxu0 0.0
        %v753 = vand.u32 %v532, 4294901760
        %v754 = vsub.f32 %v532, %v753
        %755 = vmatmul.mubr.f32.gmra.mxu0 %v754
        %v756 = vpop.f32.mrf.mxu0
        %v757 = vadd.f32 %v683, %v756
        %v758 = vpop.f32.mrf.mxu0
        %759 = vdwg.mxu0
        %760 = vmatprep.subr.mxu0 0.0
        %761 = vmatpush1.msra.mxu0 0.0
        %762 = vmatprep.subr.mxu0 0.0
        %763 = vmatpush1.msra.mxu0 0.0
        %764 = vmatprep.subr.mxu0 0.0
        %765 = vmatpush1.msra.mxu0 0.0
        %766 = vmatprep.subr.mxu0 0.0
        %767 = vmatpush1.msra.mxu0 0.0
        %768 = vmatprep.subr.mxu0 0.0
        %769 = vmatpush1.msra.mxu0 0.0
        %770 = vmatprep.subr.mxu0 0.0
        %771 = vmatpush1.msra.mxu0 0.0
        %772 = vmatprep.subr.mxu0 0.0
        %773 = vmatpush1.msra.mxu0 0.0
        %774 = vmatprep.subr.mxu0 0.0
        %775 = vmatpush1.msra.mxu0 0.0
        %776 = vmatprep.subr.mxu0 0.0
        %777 = vmatpush1.msra.mxu0 0.0
        %778 = vmatprep.subr.mxu0 0.0
        %779 = vmatpush1.msra.mxu0 0.0
        %780 = vmatprep.subr.mxu0 0.0
        %781 = vmatpush1.msra.mxu0 0.0
        %782 = vmatprep.subr.mxu0 0.0
        %783 = vmatpush1.msra.mxu0 0.0
        %784 = vmatprep.subr.mxu0 0.0
        %785 = vmatpush1.msra.mxu0 0.0
        %786 = vmatprep.subr.mxu0 0.0
        %787 = vmatpush1.msra.mxu0 0.0
        %788 = vmatprep.subr.mxu0 0.0
        %789 = vmatpush1.msra.mxu0 0.0
        %790 = vmatprep.subr.mxu0 0.0
        %v791 = vand.u32 %v529, 4294901760
        %792 = vmatpush1.msra.mxu0 %v791
        %793 = vmatprep.subr.mxu0 0.0
        %794 = vmatpush2.msra.mxu0 0.0
        %795 = vmatprep.subr.mxu0 0.0
        %796 = vmatpush2.msra.mxu0 0.0
        %797 = vmatprep.subr.mxu0 0.0
        %798 = vmatpush2.msra.mxu0 0.0
        %799 = vmatprep.subr.mxu0 0.0
        %800 = vmatpush2.msra.mxu0 0.0
        %801 = vmatprep.subr.mxu0 0.0
        %802 = vmatpush2.msra.mxu0 0.0
        %803 = vmatprep.subr.mxu0 0.0
        %804 = vmatpush2.msra.mxu0 0.0
        %805 = vmatprep.subr.mxu0 0.0
        %806 = vmatpush2.msra.mxu0 0.0
        %807 = vmatprep.subr.mxu0 0.0
        %808 = vmatpush2.msra.mxu0 0.0
        %809 = vmatprep.subr.mxu0 0.0
        %810 = vmatpush2.msra.mxu0 0.0
        %811 = vmatprep.subr.mxu0 0.0
        %812 = vmatpush2.msra.mxu0 0.0
        %813 = vmatprep.subr.mxu0 0.0
        %814 = vmatpush2.msra.mxu0 0.0
        %815 = vmatprep.subr.mxu0 0.0
        %816 = vmatpush2.msra.mxu0 0.0
        %817 = vmatprep.subr.mxu0 0.0
        %818 = vmatpush2.msra.mxu0 0.0
        %819 = vmatprep.subr.mxu0 0.0
        %820 = vmatpush2.msra.mxu0 0.0
        %821 = vmatprep.subr.mxu0 0.0
        %822 = vmatpush2.msra.mxu0 0.0
        %823 = vmatprep.subr.mxu0 0.0
        %824 = vmatpush2.msra.mxu0 0.0
        %825 = vmatprep.mubr.f32.mxu0 0.0
        %v826 = vand.u32 %v532, 4294901760
        %v827 = vsub.f32 %v532, %v826
        %v828 = vand.u32 %v827, 4294901760
        %829 = vmatmul.mubr.f32.gmra.mxu0 %v828
        %v830 = vpop.f32.mrf.mxu0
        %v831 = vadd.f32 %v757, %v830
        %v832 = vpop.f32.mrf.mxu0
        %833 = vdwg.mxu0
        %834 = vmatprep.subr.mxu0 0.0
        %835 = vmatpush1.msra.mxu0 0.0
        %836 = vmatprep.subr.mxu0 0.0
        %837 = vmatpush1.msra.mxu0 0.0
        %838 = vmatprep.subr.mxu0 0.0
        %839 = vmatpush1.msra.mxu0 0.0
        %840 = vmatprep.subr.mxu0 0.0
        %841 = vmatpush1.msra.mxu0 0.0
        %842 = vmatprep.subr.mxu0 0.0
        %843 = vmatpush1.msra.mxu0 0.0
        %844 = vmatprep.subr.mxu0 0.0
        %845 = vmatpush1.msra.mxu0 0.0
        %846 = vmatprep.subr.mxu0 0.0
        %847 = vmatpush1.msra.mxu0 0.0
        %848 = vmatprep.subr.mxu0 0.0
        %849 = vmatpush1.msra.mxu0 0.0
        %850 = vmatprep.subr.mxu0 0.0
        %851 = vmatpush1.msra.mxu0 0.0
        %852 = vmatprep.subr.mxu0 0.0
        %853 = vmatpush1.msra.mxu0 0.0
        %854 = vmatprep.subr.mxu0 0.0
        %855 = vmatpush1.msra.mxu0 0.0
        %856 = vmatprep.subr.mxu0 0.0
        %857 = vmatpush1.msra.mxu0 0.0
        %858 = vmatprep.subr.mxu0 0.0
        %859 = vmatpush1.msra.mxu0 0.0
        %860 = vmatprep.subr.mxu0 0.0
        %861 = vmatpush1.msra.mxu0 0.0
        %862 = vmatprep.subr.mxu0 0.0
        %863 = vmatpush1.msra.mxu0 0.0
        %864 = vmatprep.subr.mxu0 0.0
        %v865 = vand.u32 %v529, 4294901760
        %v866 = vsub.f32 %v529, %v865
        %v867 = vand.u32 %v866, 4294901760
        %868 = vmatpush1.msra.mxu0 %v867
        %869 = vmatprep.subr.mxu0 0.0
        %870 = vmatpush2.msra.mxu0 0.0
        %871 = vmatprep.subr.mxu0 0.0
        %872 = vmatpush2.msra.mxu0 0.0
        %873 = vmatprep.subr.mxu0 0.0
        %874 = vmatpush2.msra.mxu0 0.0
        %875 = vmatprep.subr.mxu0 0.0
        %876 = vmatpush2.msra.mxu0 0.0
        %877 = vmatprep.subr.mxu0 0.0
        %878 = vmatpush2.msra.mxu0 0.0
        %879 = vmatprep.subr.mxu0 0.0
        %880 = vmatpush2.msra.mxu0 0.0
        %881 = vmatprep.subr.mxu0 0.0
        %882 = vmatpush2.msra.mxu0 0.0
        %883 = vmatprep.subr.mxu0 0.0
        %884 = vmatpush2.msra.mxu0 0.0
        %885 = vmatprep.subr.mxu0 0.0
        %886 = vmatpush2.msra.mxu0 0.0
        %887 = vmatprep.subr.mxu0 0.0
        %888 = vmatpush2.msra.mxu0 0.0
        %889 = vmatprep.subr.mxu0 0.0
        %890 = vmatpush2.msra.mxu0 0.0
        %891 = vmatprep.subr.mxu0 0.0
        %892 = vmatpush2.msra.mxu0 0.0
        %893 = vmatprep.subr.mxu0 0.0
        %894 = vmatpush2.msra.mxu0 0.0
        %895 = vmatprep.subr.mxu0 0.0
        %896 = vmatpush2.msra.mxu0 0.0
        %897 = vmatprep.subr.mxu0 0.0
        %898 = vmatpush2.msra.mxu0 0.0
        %899 = vmatprep.subr.mxu0 0.0
        %900 = vmatpush2.msra.mxu0 0.0
        %901 = vmatprep.mubr.f32.mxu0 0.0
        %v902 = vand.u32 %v532, 4294901760
        %903 = vmatmul.mubr.f32.gmra.mxu0 %v902
        %v904 = vpop.f32.mrf.mxu0
        %v905 = vadd.f32 %v831, %v904
        %v906 = vpop.f32.mrf.mxu0
        %907 = vdwg.mxu0
        %908 = vmatprep.subr.mxu0 0.0
        %909 = vmatpush1.msra.mxu0 0.0
        %910 = vmatprep.subr.mxu0 0.0
        %911 = vmatpush1.msra.mxu0 0.0
        %912 = vmatprep.subr.mxu0 0.0
        %913 = vmatpush1.msra.mxu0 0.0
        %914 = vmatprep.subr.mxu0 0.0
        %915 = vmatpush1.msra.mxu0 0.0
        %916 = vmatprep.subr.mxu0 0.0
        %917 = vmatpush1.msra.mxu0 0.0
        %918 = vmatprep.subr.mxu0 0.0
        %919 = vmatpush1.msra.mxu0 0.0
        %920 = vmatprep.subr.mxu0 0.0
        %921 = vmatpush1.msra.mxu0 0.0
        %922 = vmatprep.subr.mxu0 0.0
        %923 = vmatpush1.msra.mxu0 0.0
        %924 = vmatprep.subr.mxu0 0.0
        %925 = vmatpush1.msra.mxu0 0.0
        %926 = vmatprep.subr.mxu0 0.0
        %927 = vmatpush1.msra.mxu0 0.0
        %928 = vmatprep.subr.mxu0 0.0
        %929 = vmatpush1.msra.mxu0 0.0
        %930 = vmatprep.subr.mxu0 0.0
        %931 = vmatpush1.msra.mxu0 0.0
        %932 = vmatprep.subr.mxu0 0.0
        %933 = vmatpush1.msra.mxu0 0.0
        %934 = vmatprep.subr.mxu0 0.0
        %935 = vmatpush1.msra.mxu0 0.0
        %936 = vmatprep.subr.mxu0 0.0
        %937 = vmatpush1.msra.mxu0 0.0
        %938 = vmatprep.subr.mxu0 0.0
        %v939 = vand.u32 %v529, 4294901760
        %940 = vmatpush1.msra.mxu0 %v939
        %941 = vmatprep.subr.mxu0 0.0
        %942 = vmatpush2.msra.mxu0 0.0
        %943 = vmatprep.subr.mxu0 0.0
        %944 = vmatpush2.msra.mxu0 0.0
        %945 = vmatprep.subr.mxu0 0.0
        %946 = vmatpush2.msra.mxu0 0.0
        %947 = vmatprep.subr.mxu0 0.0
        %948 = vmatpush2.msra.mxu0 0.0
        %949 = vmatprep.subr.mxu0 0.0
        %950 = vmatpush2.msra.mxu0 0.0
        %951 = vmatprep.subr.mxu0 0.0
        %952 = vmatpush2.msra.mxu0 0.0
        %953 = vmatprep.subr.mxu0 0.0
        %954 = vmatpush2.msra.mxu0 0.0
        %955 = vmatprep.subr.mxu0 0.0
        %956 = vmatpush2.msra.mxu0 0.0
        %957 = vmatprep.subr.mxu0 0.0
        %958 = vmatpush2.msra.mxu0 0.0
        %959 = vmatprep.subr.mxu0 0.0
        %960 = vmatpush2.msra.mxu0 0.0
        %961 = vmatprep.subr.mxu0 0.0
        %962 = vmatpush2.msra.mxu0 0.0
        %963 = vmatprep.subr.mxu0 0.0
        %964 = vmatpush2.msra.mxu0 0.0
        %965 = vmatprep.subr.mxu0 0.0
        %966 = vmatpush2.msra.mxu0 0.0
        %967 = vmatprep.subr.mxu0 0.0
        %968 = vmatpush2.msra.mxu0 0.0
        %969 = vmatprep.subr.mxu0 0.0
        %970 = vmatpush2.msra.mxu0 0.0
        %971 = vmatprep.subr.mxu0 0.0
        %972 = vmatpush2.msra.mxu0 0.0
        %973 = vmatprep.mubr.f32.mxu0 0.0
        %v974 = vand.u32 %v532, 4294901760
        %975 = vmatmul.mubr.f32.gmra.mxu0 %v974
        %v976 = vpop.f32.mrf.mxu0
        %v977 = vadd.f32 %v905, %v976
        %v978 = vpop.f32.mrf.mxu0
        %979 = vdwg.mxu0
        %v980 = vmul.f32 %v977, %v977
        %982 = vrot.lane.b32.xlu0 %v980, 1
        %v983 = vpop.permute.xlu0 %982
        %v985 = vsub.f32 %v977, %v983
        %v986 = vmax.f32 %v985, 0.0
        %988 = vset.pattern.permute.xlu0 0
        %989 = vperm.xlu0 %988, %v977
        %v990 = vpop.permute.xlu0 %989
        %v992 = vsub.f32 %v514, %v990
        %v993 = vsub.f32 %v515, %v990
        %v994 = vadd.f32 %v986, 1e-05
        %v995 = vrsqrt.pop %v994
        %997 = vset.pattern.permute.xlu0 1
        %998 = vperm.xlu0 %997, %v995
        %v999 = vpop.permute.xlu0 %998
        %v1001 = vmul.f32 %v992, %v999
        %v1002 = vmul.f32 %v993, %v999
        %1004 = vset.pattern.permute.xlu0 0
        %1005 = vperm.xlu0 %1004, %v518
        %v1006 = vpop.permute.xlu0 %1005
        %v1008 = vmul.f32 %v1001, %v1006
        %v1009 = vmul.f32 %v1002, %v1006
        %1011 = vset.pattern.permute.xlu0 0
        %1012 = vperm.xlu0 %1011, %v519
        %v1013 = vpop.permute.xlu0 %1012
        %v1015 = vadd.f32 %v1008, %v1013
        %v1016 = vadd.f32 %v1009, %v1013
        %v1017 = vxor.u32 %v1015, 2147483648
        %v1018 = vxor.u32 %v1016, 2147483648
        %v1019 = vmul.f32 %v1017, 1.442695
        %v1020 = vpow.pop %v1019
        %v1021 = vmul.f32 %v1018, 1.442695
        %v1022 = vpow.pop %v1021
        %v1023 = vadd.f32 %v1020, 1.0
        %v1024 = vadd.f32 %v1022, 1.0
        %v1025 = vrcp.pop %v1023
        %v1026 = vmul.f32 1.0, %v1025
        %v1027 = vrcp.pop %v1024
        %v1028 = vmul.f32 1.0, %v1027
        %v1029 = vmul.f32 %v1015, %v1026
        %v1030 = vmul.f32 %v1016, %v1028
        %v1031 = vld [vmem:[%s7] sm:$0xff]
        %v1032 = vld [vmem:[%s7 + $0x8] sm:$0xff]
        %1033 = vrot.lane.b32.xlu0 %v1029, 16
        %v1034 = vpop.permute.xlu0 %1033
        %1035 = vrot.lane.b32.xlu0 %v1030, 16
        %v1036 = vpop.permute.xlu0 %1035
        %v1037 = vlaneseq
        %v1038 = vand.u32 %v1037, 127
        %vm1039 = vcmp.lt.s32.totalorder %v1038, 16
        %v1040 = vsel %vm1039, %v1034, %v1036
        %v1041 = vsel %vm1039, %v1036, %v1034
        %v1043 = vlaneseq
        %v1044 = vshrl.u32 %v1043, 7
        %v1045 = vsub.s32 0, %v1044
        %v1046 = vrot.slane %v516, %v1045
        %v1047 = vlaneseq
        %v1048 = vshrl.u32 %v1047, 7
        %v1049 = vsub.s32 4, %v1048
        %v1050 = vrot.slane %v516, %v1049
        %v1053 = vlaneseq
        %v1054 = vshrl.u32 %v1053, 7
        %v1055 = vsub.s32 0, %v1054
        %v1056 = vrot.slane %v1046, %v1055
        %v1057 = vlaneseq
        %v1058 = vshrl.u32 %v1057, 7
        %v1059 = vsub.s32 0, %v1058
        %v1060 = vrot.slane %v1050, %v1059
        %v1061 = vmul.f32 %v1041, %v1056
        %v1062 = vmul.f32 %v1040, %v1060
        %1063 = vrot.lane.b32.xlu0 %v1061, 1
        %v1064 = vpop.permute.xlu0 %1063
        %1065 = vrot.lane.b32.xlu0 %v1062, 1
        %v1066 = vpop.permute.xlu0 %1065
        %vm1067 = vcmp.lt.s32.totalorder %v1038, 1
        %v1068 = vsel %vm1067, %v1064, %v1066
        %v1069 = vsel %vm1067, %v1066, %v1064
        %v1070 = vlaneseq
        %v1071 = vshrl.u32 %v1070, 7
        %v1072 = vsub.s32 2, %v1071
        %v1073 = vrot.slane %v516, %v1072
        %v1074 = vlaneseq
        %v1075 = vshrl.u32 %v1074, 7
        %v1076 = vsub.s32 6, %v1075
        %v1077 = vrot.slane %v516, %v1076
        %v1080 = vlaneseq
        %v1081 = vshrl.u32 %v1080, 7
        %v1082 = vsub.s32 2, %v1081
        %v1083 = vrot.slane %v1073, %v1082
        %v1084 = vlaneseq
        %v1085 = vshrl.u32 %v1084, 7
        %v1086 = vsub.s32 2, %v1085
        %v1087 = vrot.slane %v1077, %v1086
        %v1088 = vmul.f32 %v1069, %v1083
        %v1089 = vmul.f32 %v1068, %v1087
        %v1090 = vpack.c.bf16 %v1088, %v1088
        %v1091 = vpack.c.bf16 %v1089, %v1089
        %v1092 = vpack.c.bf16 %v1061, %v1061
        %v1093 = vpack.c.bf16 %v1062, %v1062
        %1094 = vrot.lane.b32.xlu0 %v1061, 127
        %v1095 = vpop.permute.xlu0 %1094
        %1096 = vrot.lane.b32.xlu0 %v1062, 127
        %v1097 = vpop.permute.xlu0 %1096
        %vm1098 = vcmp.lt.s32.totalorder %v1038, 127
        %v1099 = vsel %vm1098, %v1095, %v1097
        %v1100 = vsel %vm1098, %v1097, %v1095
        %v1101 = vlaneseq
        %v1102 = vshrl.u32 %v1101, 7
        %v1103 = vsub.s32 3, %v1102
        %v1104 = vrot.slane %v516, %v1103
        %v1105 = vlaneseq
        %v1106 = vshrl.u32 %v1105, 7
        %v1107 = vsub.s32 7, %v1106
        %v1108 = vrot.slane %v516, %v1107
        %v1111 = vlaneseq
        %v1112 = vshrl.u32 %v1111, 7
        %v1113 = vsub.s32 3, %v1112
        %v1114 = vrot.slane %v1104, %v1113
        %v1115 = vlaneseq
        %v1116 = vshrl.u32 %v1115, 7
        %v1117 = vsub.s32 3, %v1116
        %v1118 = vrot.slane %v1108, %v1117
        %v1119 = vmul.f32 %v1099, %v1114
        %v1120 = vmul.f32 %v1100, %v1118
        %v1121 = vpack.c.bf16 %v1119, %v1119
        %v1122 = vpack.c.bf16 %v1120, %v1120
        %v1125 = vrot.slane %v1092, 4
        %v1126 = vrot.slane %v1093, 4
        %vm1127 = vcmask 1043456
        %v1130 = vsel %vm1127, %v1090, %v1125
        %v1134 = vsel %vm1127, %v1091, %v1126
        %v1136 = vld [vmem:[%s6] sm:$0xf]
        %v1137 = vld [vmem:[%s6 + $0x4] sm:$0xf]
        %1138 = vrot.lane.b32.xlu0 %v1029, 1
        %v1139 = vpop.permute.xlu0 %1138
        %1140 = vrot.lane.b32.xlu0 %v1030, 1
        %v1141 = vpop.permute.xlu0 %1140
        %v1142 = vsel %vm1067, %v1139, %v1141
        %v1143 = vsel %vm1067, %v1141, %v1139
        %v1144 = vmul.f32 %v1143, %v1083
        %v1145 = vmul.f32 %v1142, %v1087
        %v1146 = vpack.c.bf16 %v1144, %v1144
        %v1147 = vpack.c.bf16 %v1145, %v1145
        %v1148 = vpack.c.bf16 %v1029, %v1029
        %v1149 = vpack.c.bf16 %v1030, %v1030
        %1150 = vrot.lane.b32.xlu0 %v1029, 127
        %v1151 = vpop.permute.xlu0 %1150
        %1152 = vrot.lane.b32.xlu0 %v1030, 127
        %v1153 = vpop.permute.xlu0 %1152
        %v1154 = vsel %vm1098, %v1151, %v1153
        %v1155 = vsel %vm1098, %v1153, %v1151
        %v1156 = vmul.f32 %v1154, %v1114
        %v1157 = vmul.f32 %v1155, %v1118
        %v1158 = vpack.c.bf16 %v1156, %v1156
        %v1159 = vpack.c.bf16 %v1157, %v1157
        %v1162 = vrot.slane %v1148, 4
        %v1163 = vrot.slane %v1149, 4
        %v1166 = vsel %vm1127, %v1146, %v1162
        %v1170 = vsel %vm1127, %v1147, %v1163
        %s1172 = scalar_lea.vmem %s6, 8
        %v1173 = vld [vmem:[%s1172] sm:$0xf]
        %v1174 = vld [vmem:[%s1172 + $0x4] sm:$0xf]
        %v1177 = vunpack.c.l.b16 %v1173
        %v1178 = vunpack.c.l.b16 %v1174
        %v1179 = vpack.c.b16 %v1178, %v1177
        %vm1180 = vcmask 195584
        %v1182 = vsel %vm1180, %v1179, 0
        %v1185 = vsel %vm1127, %v1158, 0
        %v1188 = vsel %vm1127, %v1159, 0
        %1190 = vmatprep.subr.bf16.mxu0 0
        %1191 = vmatpush1.bf16.msra.mxu0 0
        %1192 = vmatprep.subr.bf16.mxu0 0
        %1193 = vmatpush1.bf16.msra.mxu0 0
        %1194 = vmatprep.subr.bf16.mxu0 0
        %1195 = vmatpush1.bf16.msra.mxu0 0
        %1196 = vmatprep.subr.bf16.mxu0 0
        %1197 = vmatpush1.bf16.msra.mxu0 0
        %1198 = vmatprep.subr.bf16.mxu0 0
        %1199 = vmatpush1.bf16.msra.mxu0 0
        %1200 = vmatprep.subr.bf16.mxu0 0
        %1201 = vmatpush1.bf16.msra.mxu0 0
        %1202 = vmatprep.subr.bf16.mxu0 %v1188
        %1203 = vmatpush1.bf16.msra.mxu0 %v1185
        %1204 = vmatprep.subr.bf16.mxu0 %v1170
        %1205 = vmatpush1.bf16.msra.mxu0 %v1166
        %1206 = vmatprep.subr.bf16.mxu0 0
        %1207 = vmatpush2.bf16.msra.mxu0 0
        %1208 = vmatprep.subr.bf16.mxu0 0
        %1209 = vmatpush2.bf16.msra.mxu0 0
        %1210 = vmatprep.subr.bf16.mxu0 0
        %1211 = vmatpush2.bf16.msra.mxu0 0
        %1212 = vmatprep.subr.bf16.mxu0 0
        %1213 = vmatpush2.bf16.msra.mxu0 0
        %1214 = vmatprep.subr.bf16.mxu0 0
        %1215 = vmatpush2.bf16.msra.mxu0 0
        %1216 = vmatprep.subr.bf16.mxu0 0
        %1217 = vmatpush2.bf16.msra.mxu0 0
        %1218 = vmatprep.subr.bf16.mxu0 0
        %1219 = vmatpush2.bf16.msra.mxu0 0
        %1220 = vmatprep.subr.bf16.mxu0 0
        %1221 = vmatpush2.bf16.msra.mxu0 0
        %1222 = vmatprep.mubr.bf16.mxu0 0
        %1223 = vmatmul.mubr.bf16.gmra.mxu0 %v1182
        %v1224 = vpop.f32.mrf.mxu0
        %v1225 = vadd.f32 0.0, %v1224
        %v1226 = vpop.f32.mrf.mxu0
        %v1227 = vadd.f32 0.0, %v1226
        %v1228 = vpop.f32.mrf.mxu0
        %v1229 = vadd.f32 0.0, %v1228
        %v1230 = vpop.f32.mrf.mxu0
        %v1231 = vadd.f32 0.0, %v1230
        %1232 = vdwg.mxu0
        %v1235 = vunpack.c.l.b16 %v1136
        %v1236 = vunpack.c.l.b16 %v1137
        %v1237 = vpack.c.b16 %v1236, %v1235
        %v1239 = vsel %vm1180, %v1237, 0
        %v1242 = vsel %vm1127, %v1121, 0
        %v1245 = vsel %vm1127, %v1122, 0
        %1247 = vmatprep.subr.bf16.mxu0 0
        %1248 = vmatpush1.bf16.msra.mxu0 0
        %1249 = vmatprep.subr.bf16.mxu0 0
        %1250 = vmatpush1.bf16.msra.mxu0 0
        %1251 = vmatprep.subr.bf16.mxu0 0
        %1252 = vmatpush1.bf16.msra.mxu0 0
        %1253 = vmatprep.subr.bf16.mxu0 0
        %1254 = vmatpush1.bf16.msra.mxu0 0
        %1255 = vmatprep.subr.bf16.mxu0 0
        %1256 = vmatpush1.bf16.msra.mxu0 0
        %1257 = vmatprep.subr.bf16.mxu0 0
        %1258 = vmatpush1.bf16.msra.mxu0 0
        %1259 = vmatprep.subr.bf16.mxu0 %v1245
        %1260 = vmatpush1.bf16.msra.mxu0 %v1242
        %1261 = vmatprep.subr.bf16.mxu0 %v1134
        %1262 = vmatpush1.bf16.msra.mxu0 %v1130
        %1263 = vmatprep.subr.bf16.mxu0 0
        %1264 = vmatpush2.bf16.msra.mxu0 0
        %1265 = vmatprep.subr.bf16.mxu0 0
        %1266 = vmatpush2.bf16.msra.mxu0 0
        %1267 = vmatprep.subr.bf16.mxu0 0
        %1268 = vmatpush2.bf16.msra.mxu0 0
        %1269 = vmatprep.subr.bf16.mxu0 0
        %1270 = vmatpush2.bf16.msra.mxu0 0
        %1271 = vmatprep.subr.bf16.mxu0 0
        %1272 = vmatpush2.bf16.msra.mxu0 0
        %1273 = vmatprep.subr.bf16.mxu0 0
        %1274 = vmatpush2.bf16.msra.mxu0 0
        %1275 = vmatprep.subr.bf16.mxu0 0
        %1276 = vmatpush2.bf16.msra.mxu0 0
        %1277 = vmatprep.subr.bf16.mxu0 0
        %1278 = vmatpush2.bf16.msra.mxu0 0
        %1279 = vmatprep.mubr.bf16.mxu0 0
        %1280 = vmatmul.mubr.bf16.gmra.mxu0 %v1239
        %v1281 = vpop.f32.mrf.mxu0
        %v1282 = vadd.f32 %v1225, %v1281
        %v1283 = vpop.f32.mrf.mxu0
        %v1284 = vadd.f32 %v1227, %v1283
        %v1285 = vpop.f32.mrf.mxu0
        %v1286 = vadd.f32 %v1229, %v1285
        %v1287 = vpop.f32.mrf.mxu0
        %v1288 = vadd.f32 %v1231, %v1287
        %1289 = vdwg.mxu0
        %1290 = vrot.lane.b32.xlu0 %v1029, 112
        %v1291 = vpop.permute.xlu0 %1290
        %1292 = vrot.lane.b32.xlu0 %v1030, 112
        %v1293 = vpop.permute.xlu0 %1292
        %vm1294 = vcmp.lt.s32.totalorder %v1038, 112
        %v1295 = vsel %vm1294, %v1291, %v1293
        %v1296 = vsel %vm1294, %v1293, %v1291
        %v1297 = vlaneseq
        %v1298 = vshrl.u32 %v1297, 7
        %v1299 = vsub.s32 1, %v1298
        %v1300 = vrot.slane %v516, %v1299
        %v1301 = vlaneseq
        %v1302 = vshrl.u32 %v1301, 7
        %v1303 = vsub.s32 5, %v1302
        %v1304 = vrot.slane %v516, %v1303
        %v1307 = vlaneseq
        %v1308 = vshrl.u32 %v1307, 7
        %v1309 = vsub.s32 1, %v1308
        %v1310 = vrot.slane %v1300, %v1309
        %v1311 = vlaneseq
        %v1312 = vshrl.u32 %v1311, 7
        %v1313 = vsub.s32 1, %v1312
        %v1314 = vrot.slane %v1304, %v1313
        %v1315 = vmul.f32 %v1295, %v1310
        %v1316 = vmul.f32 %v1296, %v1314
        %1317 = vrot.lane.b32.xlu0 %v1315, 1
        %v1318 = vpop.permute.xlu0 %1317
        %1319 = vrot.lane.b32.xlu0 %v1316, 1
        %v1320 = vpop.permute.xlu0 %1319
        %v1321 = vsel %vm1067, %v1318, %v1320
        %v1322 = vsel %vm1067, %v1320, %v1318
        %v1323 = vmul.f32 %v1322, %v1083
        %v1324 = vmul.f32 %v1321, %v1087
        %v1325 = vpack.c.bf16 %v1323, %v1323
        %v1326 = vpack.c.bf16 %v1324, %v1324
        %v1327 = vpack.c.bf16 %v1315, %v1315
        %v1328 = vpack.c.bf16 %v1316, %v1316
        %1329 = vrot.lane.b32.xlu0 %v1315, 127
        %v1330 = vpop.permute.xlu0 %1329
        %1331 = vrot.lane.b32.xlu0 %v1316, 127
        %v1332 = vpop.permute.xlu0 %1331
        %v1333 = vsel %vm1098, %v1330, %v1332
        %v1334 = vsel %vm1098, %v1332, %v1330
        %v1335 = vmul.f32 %v1333, %v1114
        %v1336 = vmul.f32 %v1334, %v1118
        %v1337 = vpack.c.bf16 %v1335, %v1335
        %v1338 = vpack.c.bf16 %v1336, %v1336
        %v1341 = vrot.slane %v1327, 4
        %v1342 = vrot.slane %v1328, 4
        %v1345 = vsel %vm1127, %v1325, %v1341
        %v1349 = vsel %vm1127, %v1326, %v1342
        %s1351 = scalar_lea.vmem %s6, 16
        %v1352 = vld [vmem:[%s1351] sm:$0xf]
        %v1353 = vld [vmem:[%s1351 + $0x4] sm:$0xf]
        %v1356 = vunpack.c.l.b16 %v1352
        %v1357 = vunpack.c.l.b16 %v1353
        %v1358 = vpack.c.b16 %v1357, %v1356
        %v1360 = vsel %vm1180, %v1358, 0
        %v1363 = vsel %vm1127, %v1337, 0
        %v1366 = vsel %vm1127, %v1338, 0
        %1368 = vmatprep.subr.bf16.mxu0 0
        %1369 = vmatpush1.bf16.msra.mxu0 0
        %1370 = vmatprep.subr.bf16.mxu0 0
        %1371 = vmatpush1.bf16.msra.mxu0 0
        %1372 = vmatprep.subr.bf16.mxu0 0
        %1373 = vmatpush1.bf16.msra.mxu0 0
        %1374 = vmatprep.subr.bf16.mxu0 0
        %1375 = vmatpush1.bf16.msra.mxu0 0
        %1376 = vmatprep.subr.bf16.mxu0 0
        %1377 = vmatpush1.bf16.msra.mxu0 0
        %1378 = vmatprep.subr.bf16.mxu0 0
        %1379 = vmatpush1.bf16.msra.mxu0 0
        %1380 = vmatprep.subr.bf16.mxu0 %v1366
        %1381 = vmatpush1.bf16.msra.mxu0 %v1363
        %1382 = vmatprep.subr.bf16.mxu0 %v1349
        %1383 = vmatpush1.bf16.msra.mxu0 %v1345
        %1384 = vmatprep.subr.bf16.mxu0 0
        %1385 = vmatpush2.bf16.msra.mxu0 0
        %1386 = vmatprep.subr.bf16.mxu0 0
        %1387 = vmatpush2.bf16.msra.mxu0 0
        %1388 = vmatprep.subr.bf16.mxu0 0
        %1389 = vmatpush2.bf16.msra.mxu0 0
        %1390 = vmatprep.subr.bf16.mxu0 0
        %1391 = vmatpush2.bf16.msra.mxu0 0
        %1392 = vmatprep.subr.bf16.mxu0 0
        %1393 = vmatpush2.bf16.msra.mxu0 0
        %1394 = vmatprep.subr.bf16.mxu0 0
        %1395 = vmatpush2.bf16.msra.mxu0 0
        %1396 = vmatprep.subr.bf16.mxu0 0
        %1397 = vmatpush2.bf16.msra.mxu0 0
        %1398 = vmatprep.subr.bf16.mxu0 0
        %1399 = vmatpush2.bf16.msra.mxu0 0
        %1400 = vmatprep.mubr.bf16.mxu0 0
        %1401 = vmatmul.mubr.bf16.gmra.mxu0 %v1360
        %v1402 = vpop.f32.mrf.mxu0
        %v1403 = vadd.f32 0.0, %v1402
        %v1404 = vpop.f32.mrf.mxu0
        %v1405 = vadd.f32 0.0, %v1404
        %v1406 = vpop.f32.mrf.mxu0
        %v1407 = vadd.f32 0.0, %v1406
        %v1408 = vpop.f32.mrf.mxu0
        %v1409 = vadd.f32 0.0, %v1408
        %1410 = vdwg.mxu0
        %v1411 = vadd.f32 %v1282, %v1403
        %v1412 = vadd.f32 %v1284, %v1405
        %v1413 = vadd.f32 %v1286, %v1407
        %v1414 = vadd.f32 %v1288, %v1409
        %1416 = vset.pattern.permute.xlu0 0
        %1417 = vperm.xlu0 %1416, %v1031
        %v1418 = vpop.permute.xlu0 %1417
        %1421 = vset.pattern.permute.xlu0 0
        %1422 = vperm.xlu0 %1421, %v1032
        %v1423 = vpop.permute.xlu0 %1422
        %v1425 = vadd.f32 %v1411, %v1418
        %v1426 = vadd.f32 %v1412, %v1418
        %v1427 = vadd.f32 %v1413, %v1423
        %v1428 = vadd.f32 %v1414, %v1423
        %v1429 = vld [vmem:[%s512] sm:$0xff]
        %v1430 = vld [vmem:[%s512 + $0x8] sm:$0xff]
        %1432 = vset.pattern.permute.xlu0 0
        %1433 = vperm.xlu0 %1432, %v1429
        %v1434 = vpop.permute.xlu0 %1433
        %1437 = vset.pattern.permute.xlu0 0
        %1438 = vperm.xlu0 %1437, %v1430
        %v1439 = vpop.permute.xlu0 %1438
        %v1441 = vadd.f32 %v1425, %v1434
        %v1442 = vadd.f32 %v1426, %v1434
        %v1443 = vadd.f32 %v1427, %v1439
        %v1444 = vadd.f32 %v1428, %v1439
        %v1445 = vld [vmem:[%s8] sm:$0xff]
        %v1446 = vld [vmem:[%s8 + $0x8] sm:$0xff]
        %v1447 = vld [vmem:[%s9] sm:$0xff]
        %v1448 = vld [vmem:[%s9 + $0x8] sm:$0xff]
        %v1449 = vld [vmem:[%s10] sm:$0xff]
        %v1450 = vld [vmem:[%s10 + $0x8] sm:$0xff]
        %v1451 = vadd.f32 %v1441, %v1442
        %1452 = vadd.xlane.f32.xlu0 %v1451
        %v1453 = vpop.xlane.xlu0 %1452
        %v1454 = vadd.f32 %v1443, %v1444
        %1455 = vadd.xlane.f32.xlu0 %v1454
        %v1456 = vpop.xlane.xlu0 %1455
        %v1457 = vmul.f32 %v1441, %v1441
        %v1458 = vmul.f32 %v1442, %v1442
        %v1459 = vmul.f32 %v1443, %v1443
        %v1460 = vmul.f32 %v1444, %v1444
        %v1461 = vadd.f32 %v1457, %v1458
        %1462 = vadd.xlane.f32.xlu0 %v1461
        %v1463 = vpop.xlane.xlu0 %1462
        %v1464 = vadd.f32 %v1459, %v1460
        %1465 = vadd.xlane.f32.xlu0 %v1464
        %v1466 = vpop.xlane.xlu0 %1465
        %v1467 = vsel %vm528, %v1453, %v1463
        %v1468 = vsel %vm528, %v1456, %v1466
        %vm1469 = vcmask 130048
        %v1471 = vsel %vm1469, %v1445, 0
        %v1474 = vsel %vm1469, %v1446, 0
        %1476 = vmatprep.subr.mxu0 0.0
        %1477 = vmatpush1.msra.mxu0 0.0
        %1478 = vmatprep.subr.mxu0 0.0
        %1479 = vmatpush1.msra.mxu0 0.0
        %1480 = vmatprep.subr.mxu0 0.0
        %1481 = vmatpush1.msra.mxu0 0.0
        %1482 = vmatprep.subr.mxu0 0.0
        %1483 = vmatpush1.msra.mxu0 0.0
        %1484 = vmatprep.subr.mxu0 0.0
        %1485 = vmatpush1.msra.mxu0 0.0
        %1486 = vmatprep.subr.mxu0 0.0
        %1487 = vmatpush1.msra.mxu0 0.0
        %1488 = vmatprep.subr.mxu0 0.0
        %1489 = vmatpush1.msra.mxu0 0.0
        %1490 = vmatprep.subr.mxu0 0.0
        %1491 = vmatpush1.msra.mxu0 0.0
        %1492 = vmatprep.subr.mxu0 0.0
        %1493 = vmatpush1.msra.mxu0 0.0
        %1494 = vmatprep.subr.mxu0 0.0
        %1495 = vmatpush1.msra.mxu0 0.0
        %1496 = vmatprep.subr.mxu0 0.0
        %1497 = vmatpush1.msra.mxu0 0.0
        %1498 = vmatprep.subr.mxu0 0.0
        %1499 = vmatpush1.msra.mxu0 0.0
        %1500 = vmatprep.subr.mxu0 0.0
        %1501 = vmatpush1.msra.mxu0 0.0
        %1502 = vmatprep.subr.mxu0 0.0
        %1503 = vmatpush1.msra.mxu0 0.0
        %1504 = vmatprep.subr.mxu0 0.0
        %v1505 = vand.u32 %v1468, 4294901760
        %1506 = vmatpush1.msra.mxu0 %v1505
        %1507 = vmatprep.subr.mxu0 0.0
        %v1508 = vand.u32 %v1467, 4294901760
        %1509 = vmatpush1.msra.mxu0 %v1508
        %1510 = vmatprep.subr.mxu0 0.0
        %1511 = vmatpush2.msra.mxu0 0.0
        %1512 = vmatprep.subr.mxu0 0.0
        %1513 = vmatpush2.msra.mxu0 0.0
        %1514 = vmatprep.subr.mxu0 0.0
        %1515 = vmatpush2.msra.mxu0 0.0
        %1516 = vmatprep.subr.mxu0 0.0
        %1517 = vmatpush2.msra.mxu0 0.0
        %1518 = vmatprep.subr.mxu0 0.0
        %1519 = vmatpush2.msra.mxu0 0.0
        %1520 = vmatprep.subr.mxu0 0.0
        %1521 = vmatpush2.msra.mxu0 0.0
        %1522 = vmatprep.subr.mxu0 0.0
        %1523 = vmatpush2.msra.mxu0 0.0
        %1524 = vmatprep.subr.mxu0 0.0
        %1525 = vmatpush2.msra.mxu0 0.0
        %1526 = vmatprep.subr.mxu0 0.0
        %1527 = vmatpush2.msra.mxu0 0.0
        %1528 = vmatprep.subr.mxu0 0.0
        %1529 = vmatpush2.msra.mxu0 0.0
        %1530 = vmatprep.subr.mxu0 0.0
        %1531 = vmatpush2.msra.mxu0 0.0
        %1532 = vmatprep.subr.mxu0 0.0
        %1533 = vmatpush2.msra.mxu0 0.0
        %1534 = vmatprep.subr.mxu0 0.0
        %1535 = vmatpush2.msra.mxu0 0.0
        %1536 = vmatprep.subr.mxu0 0.0
        %1537 = vmatpush2.msra.mxu0 0.0
        %1538 = vmatprep.subr.mxu0 0.0
        %1539 = vmatpush2.msra.mxu0 0.0
        %1540 = vmatprep.subr.mxu0 0.0
        %1541 = vmatpush2.msra.mxu0 0.0
        %1542 = vmatprep.mubr.f32.mxu0 0.0
        %v1543 = vand.u32 %v1471, 4294901760
        %v1544 = vsub.f32 %v1471, %v1543
        %v1545 = vand.u32 %v1544, 4294901760
        %v1546 = vsub.f32 %v1544, %v1545
        %v1547 = vand.u32 %v1546, 4294901760
        %1548 = vmatmul.mubr.f32.gmra.mxu0 %v1547
        %v1549 = vpop.f32.mrf.mxu0
        %v1550 = vadd.f32 0.0, %v1549
        %v1551 = vpop.f32.mrf.mxu0
        %1552 = vmatprep.mubr.f32.mxu0 0.0
        %v1553 = vand.u32 %v1474, 4294901760
        %v1554 = vsub.f32 %v1474, %v1553
        %v1555 = vand.u32 %v1554, 4294901760
        %v1556 = vsub.f32 %v1554, %v1555
        %v1557 = vand.u32 %v1556, 4294901760
        %1558 = vmatmul.mubr.f32.gmra.mxu0 %v1557
        %v1559 = vpop.f32.mrf.mxu0
        %v1560 = vadd.f32 0.0, %v1559
        %v1561 = vpop.f32.mrf.mxu0
        %1562 = vdwg.mxu0
        %1563 = vmatprep.subr.mxu0 0.0
        %1564 = vmatpush1.msra.mxu0 0.0
        %1565 = vmatprep.subr.mxu0 0.0
        %1566 = vmatpush1.msra.mxu0 0.0
        %1567 = vmatprep.subr.mxu0 0.0
        %1568 = vmatpush1.msra.mxu0 0.0
        %1569 = vmatprep.subr.mxu0 0.0
        %1570 = vmatpush1.msra.mxu0 0.0
        %1571 = vmatprep.subr.mxu0 0.0
        %1572 = vmatpush1.msra.mxu0 0.0
        %1573 = vmatprep.subr.mxu0 0.0
        %1574 = vmatpush1.msra.mxu0 0.0
        %1575 = vmatprep.subr.mxu0 0.0
        %1576 = vmatpush1.msra.mxu0 0.0
        %1577 = vmatprep.subr.mxu0 0.0
        %1578 = vmatpush1.msra.mxu0 0.0
        %1579 = vmatprep.subr.mxu0 0.0
        %1580 = vmatpush1.msra.mxu0 0.0
        %1581 = vmatprep.subr.mxu0 0.0
        %1582 = vmatpush1.msra.mxu0 0.0
        %1583 = vmatprep.subr.mxu0 0.0
        %1584 = vmatpush1.msra.mxu0 0.0
        %1585 = vmatprep.subr.mxu0 0.0
        %1586 = vmatpush1.msra.mxu0 0.0
        %1587 = vmatprep.subr.mxu0 0.0
        %1588 = vmatpush1.msra.mxu0 0.0
        %1589 = vmatprep.subr.mxu0 0.0
        %1590 = vmatpush1.msra.mxu0 0.0
        %1591 = vmatprep.subr.mxu0 0.0
        %v1592 = vand.u32 %v1468, 4294901760
        %v1593 = vsub.f32 %v1468, %v1592
        %v1594 = vand.u32 %v1593, 4294901760
        %v1595 = vsub.f32 %v1593, %v1594
        %v1596 = vand.u32 %v1595, 4294901760
        %1597 = vmatpush1.msra.mxu0 %v1596
        %1598 = vmatprep.subr.mxu0 0.0
        %v1599 = vand.u32 %v1467, 4294901760
        %v1600 = vsub.f32 %v1467, %v1599
        %v1601 = vand.u32 %v1600, 4294901760
        %v1602 = vsub.f32 %v1600, %v1601
        %v1603 = vand.u32 %v1602, 4294901760
        %1604 = vmatpush1.msra.mxu0 %v1603
        %1605 = vmatprep.subr.mxu0 0.0
        %1606 = vmatpush2.msra.mxu0 0.0
        %1607 = vmatprep.subr.mxu0 0.0
        %1608 = vmatpush2.msra.mxu0 0.0
        %1609 = vmatprep.subr.mxu0 0.0
        %1610 = vmatpush2.msra.mxu0 0.0
        %1611 = vmatprep.subr.mxu0 0.0
        %1612 = vmatpush2.msra.mxu0 0.0
        %1613 = vmatprep.subr.mxu0 0.0
        %1614 = vmatpush2.msra.mxu0 0.0
        %1615 = vmatprep.subr.mxu0 0.0
        %1616 = vmatpush2.msra.mxu0 0.0
        %1617 = vmatprep.subr.mxu0 0.0
        %1618 = vmatpush2.msra.mxu0 0.0
        %1619 = vmatprep.subr.mxu0 0.0
        %1620 = vmatpush2.msra.mxu0 0.0
        %1621 = vmatprep.subr.mxu0 0.0
        %1622 = vmatpush2.msra.mxu0 0.0
        %1623 = vmatprep.subr.mxu0 0.0
        %1624 = vmatpush2.msra.mxu0 0.0
        %1625 = vmatprep.subr.mxu0 0.0
        %1626 = vmatpush2.msra.mxu0 0.0
        %1627 = vmatprep.subr.mxu0 0.0
        %1628 = vmatpush2.msra.mxu0 0.0
        %1629 = vmatprep.subr.mxu0 0.0
        %1630 = vmatpush2.msra.mxu0 0.0
        %1631 = vmatprep.subr.mxu0 0.0
        %1632 = vmatpush2.msra.mxu0 0.0
        %1633 = vmatprep.subr.mxu0 0.0
        %1634 = vmatpush2.msra.mxu0 0.0
        %1635 = vmatprep.subr.mxu0 0.0
        %1636 = vmatpush2.msra.mxu0 0.0
        %1637 = vmatprep.mubr.f32.mxu0 0.0
        %v1638 = vand.u32 %v1471, 4294901760
        %1639 = vmatmul.mubr.f32.gmra.mxu0 %v1638
        %v1640 = vpop.f32.mrf.mxu0
        %v1641 = vadd.f32 %v1550, %v1640
        %v1642 = vpop.f32.mrf.mxu0
        %1643 = vmatprep.mubr.f32.mxu0 0.0
        %v1644 = vand.u32 %v1474, 4294901760
        %1645 = vmatmul.mubr.f32.gmra.mxu0 %v1644
        %v1646 = vpop.f32.mrf.mxu0
        %v1647 = vadd.f32 %v1560, %v1646
        %v1648 = vpop.f32.mrf.mxu0
        %1649 = vdwg.mxu0
        %1650 = vmatprep.subr.mxu0 0.0
        %1651 = vmatpush1.msra.mxu0 0.0
        %1652 = vmatprep.subr.mxu0 0.0
        %1653 = vmatpush1.msra.mxu0 0.0
        %1654 = vmatprep.subr.mxu0 0.0
        %1655 = vmatpush1.msra.mxu0 0.0
        %1656 = vmatprep.subr.mxu0 0.0
        %1657 = vmatpush1.msra.mxu0 0.0
        %1658 = vmatprep.subr.mxu0 0.0
        %1659 = vmatpush1.msra.mxu0 0.0
        %1660 = vmatprep.subr.mxu0 0.0
        %1661 = vmatpush1.msra.mxu0 0.0
        %1662 = vmatprep.subr.mxu0 0.0
        %1663 = vmatpush1.msra.mxu0 0.0
        %1664 = vmatprep.subr.mxu0 0.0
        %1665 = vmatpush1.msra.mxu0 0.0
        %1666 = vmatprep.subr.mxu0 0.0
        %1667 = vmatpush1.msra.mxu0 0.0
        %1668 = vmatprep.subr.mxu0 0.0
        %1669 = vmatpush1.msra.mxu0 0.0
        %1670 = vmatprep.subr.mxu0 0.0
        %1671 = vmatpush1.msra.mxu0 0.0
        %1672 = vmatprep.subr.mxu0 0.0
        %1673 = vmatpush1.msra.mxu0 0.0
        %1674 = vmatprep.subr.mxu0 0.0
        %1675 = vmatpush1.msra.mxu0 0.0
        %1676 = vmatprep.subr.mxu0 0.0
        %1677 = vmatpush1.msra.mxu0 0.0
        %1678 = vmatprep.subr.mxu0 0.0
        %v1679 = vand.u32 %v1468, 4294901760
        %v1680 = vsub.f32 %v1468, %v1679
        %1681 = vmatpush1.msra.mxu0 %v1680
        %1682 = vmatprep.subr.mxu0 0.0
        %v1683 = vand.u32 %v1467, 4294901760
        %v1684 = vsub.f32 %v1467, %v1683
        %1685 = vmatpush1.msra.mxu0 %v1684
        %1686 = vmatprep.subr.mxu0 0.0
        %1687 = vmatpush2.msra.mxu0 0.0
        %1688 = vmatprep.subr.mxu0 0.0
        %1689 = vmatpush2.msra.mxu0 0.0
        %1690 = vmatprep.subr.mxu0 0.0
        %1691 = vmatpush2.msra.mxu0 0.0
        %1692 = vmatprep.subr.mxu0 0.0
        %1693 = vmatpush2.msra.mxu0 0.0
        %1694 = vmatprep.subr.mxu0 0.0
        %1695 = vmatpush2.msra.mxu0 0.0
        %1696 = vmatprep.subr.mxu0 0.0
        %1697 = vmatpush2.msra.mxu0 0.0
        %1698 = vmatprep.subr.mxu0 0.0
        %1699 = vmatpush2.msra.mxu0 0.0
        %1700 = vmatprep.subr.mxu0 0.0
        %1701 = vmatpush2.msra.mxu0 0.0
        %1702 = vmatprep.subr.mxu0 0.0
        %1703 = vmatpush2.msra.mxu0 0.0
        %1704 = vmatprep.subr.mxu0 0.0
        %1705 = vmatpush2.msra.mxu0 0.0
        %1706 = vmatprep.subr.mxu0 0.0
        %1707 = vmatpush2.msra.mxu0 0.0
        %1708 = vmatprep.subr.mxu0 0.0
        %1709 = vmatpush2.msra.mxu0 0.0
        %1710 = vmatprep.subr.mxu0 0.0
        %1711 = vmatpush2.msra.mxu0 0.0
        %1712 = vmatprep.subr.mxu0 0.0
        %1713 = vmatpush2.msra.mxu0 0.0
        %1714 = vmatprep.subr.mxu0 0.0
        %1715 = vmatpush2.msra.mxu0 0.0
        %1716 = vmatprep.subr.mxu0 0.0
        %1717 = vmatpush2.msra.mxu0 0.0
        %1718 = vmatprep.mubr.f32.mxu0 0.0
        %v1719 = vand.u32 %v1471, 4294901760
        %v1720 = vsub.f32 %v1471, %v1719
        %1721 = vmatmul.mubr.f32.gmra.mxu0 %v1720
        %v1722 = vpop.f32.mrf.mxu0
        %v1723 = vadd.f32 %v1641, %v1722
        %v1724 = vpop.f32.mrf.mxu0
        %1725 = vmatprep.mubr.f32.mxu0 0.0
        %v1726 = vand.u32 %v1474, 4294901760
        %v1727 = vsub.f32 %v1474, %v1726
        %1728 = vmatmul.mubr.f32.gmra.mxu0 %v1727
        %v1729 = vpop.f32.mrf.mxu0
        %v1730 = vadd.f32 %v1647, %v1729
        %v1731 = vpop.f32.mrf.mxu0
        %1732 = vdwg.mxu0
        %1733 = vmatprep.subr.mxu0 0.0
        %1734 = vmatpush1.msra.mxu0 0.0
        %1735 = vmatprep.subr.mxu0 0.0
        %1736 = vmatpush1.msra.mxu0 0.0
        %1737 = vmatprep.subr.mxu0 0.0
        %1738 = vmatpush1.msra.mxu0 0.0
        %1739 = vmatprep.subr.mxu0 0.0
        %1740 = vmatpush1.msra.mxu0 0.0
        %1741 = vmatprep.subr.mxu0 0.0
        %1742 = vmatpush1.msra.mxu0 0.0
        %1743 = vmatprep.subr.mxu0 0.0
        %1744 = vmatpush1.msra.mxu0 0.0
        %1745 = vmatprep.subr.mxu0 0.0
        %1746 = vmatpush1.msra.mxu0 0.0
        %1747 = vmatprep.subr.mxu0 0.0
        %1748 = vmatpush1.msra.mxu0 0.0
        %1749 = vmatprep.subr.mxu0 0.0
        %1750 = vmatpush1.msra.mxu0 0.0
        %1751 = vmatprep.subr.mxu0 0.0
        %1752 = vmatpush1.msra.mxu0 0.0
        %1753 = vmatprep.subr.mxu0 0.0
        %1754 = vmatpush1.msra.mxu0 0.0
        %1755 = vmatprep.subr.mxu0 0.0
        %1756 = vmatpush1.msra.mxu0 0.0
        %1757 = vmatprep.subr.mxu0 0.0
        %1758 = vmatpush1.msra.mxu0 0.0
        %1759 = vmatprep.subr.mxu0 0.0
        %1760 = vmatpush1.msra.mxu0 0.0
        %1761 = vmatprep.subr.mxu0 0.0
        %v1762 = vand.u32 %v1468, 4294901760
        %1763 = vmatpush1.msra.mxu0 %v1762
        %1764 = vmatprep.subr.mxu0 0.0
        %v1765 = vand.u32 %v1467, 4294901760
        %1766 = vmatpush1.msra.mxu0 %v1765
        %1767 = vmatprep.subr.mxu0 0.0
        %1768 = vmatpush2.msra.mxu0 0.0
        %1769 = vmatprep.subr.mxu0 0.0
        %1770 = vmatpush2.msra.mxu0 0.0
        %1771 = vmatprep.subr.mxu0 0.0
        %1772 = vmatpush2.msra.mxu0 0.0
        %1773 = vmatprep.subr.mxu0 0.0
        %1774 = vmatpush2.msra.mxu0 0.0
        %1775 = vmatprep.subr.mxu0 0.0
        %1776 = vmatpush2.msra.mxu0 0.0
        %1777 = vmatprep.subr.mxu0 0.0
        %1778 = vmatpush2.msra.mxu0 0.0
        %1779 = vmatprep.subr.mxu0 0.0
        %1780 = vmatpush2.msra.mxu0 0.0
        %1781 = vmatprep.subr.mxu0 0.0
        %1782 = vmatpush2.msra.mxu0 0.0
        %1783 = vmatprep.subr.mxu0 0.0
        %1784 = vmatpush2.msra.mxu0 0.0
        %1785 = vmatprep.subr.mxu0 0.0
        %1786 = vmatpush2.msra.mxu0 0.0
        %1787 = vmatprep.subr.mxu0 0.0
        %1788 = vmatpush2.msra.mxu0 0.0
        %1789 = vmatprep.subr.mxu0 0.0
        %1790 = vmatpush2.msra.mxu0 0.0
        %1791 = vmatprep.subr.mxu0 0.0
        %1792 = vmatpush2.msra.mxu0 0.0
        %1793 = vmatprep.subr.mxu0 0.0
        %1794 = vmatpush2.msra.mxu0 0.0
        %1795 = vmatprep.subr.mxu0 0.0
        %1796 = vmatpush2.msra.mxu0 0.0
        %1797 = vmatprep.subr.mxu0 0.0
        %1798 = vmatpush2.msra.mxu0 0.0
        %1799 = vmatprep.mubr.f32.mxu0 0.0
        %v1800 = vand.u32 %v1471, 4294901760
        %v1801 = vsub.f32 %v1471, %v1800
        %v1802 = vand.u32 %v1801, 4294901760
        %1803 = vmatmul.mubr.f32.gmra.mxu0 %v1802
        %v1804 = vpop.f32.mrf.mxu0
        %v1805 = vadd.f32 %v1723, %v1804
        %v1806 = vpop.f32.mrf.mxu0
        %1807 = vmatprep.mubr.f32.mxu0 0.0
        %v1808 = vand.u32 %v1474, 4294901760
        %v1809 = vsub.f32 %v1474, %v1808
        %v1810 = vand.u32 %v1809, 4294901760
        %1811 = vmatmul.mubr.f32.gmra.mxu0 %v1810
        %v1812 = vpop.f32.mrf.mxu0
        %v1813 = vadd.f32 %v1730, %v1812
        %v1814 = vpop.f32.mrf.mxu0
        %1815 = vdwg.mxu0
        %1816 = vmatprep.subr.mxu0 0.0
        %1817 = vmatpush1.msra.mxu0 0.0
        %1818 = vmatprep.subr.mxu0 0.0
        %1819 = vmatpush1.msra.mxu0 0.0
        %1820 = vmatprep.subr.mxu0 0.0
        %1821 = vmatpush1.msra.mxu0 0.0
        %1822 = vmatprep.subr.mxu0 0.0
        %1823 = vmatpush1.msra.mxu0 0.0
        %1824 = vmatprep.subr.mxu0 0.0
        %1825 = vmatpush1.msra.mxu0 0.0
        %1826 = vmatprep.subr.mxu0 0.0
        %1827 = vmatpush1.msra.mxu0 0.0
        %1828 = vmatprep.subr.mxu0 0.0
        %1829 = vmatpush1.msra.mxu0 0.0
        %1830 = vmatprep.subr.mxu0 0.0
        %1831 = vmatpush1.msra.mxu0 0.0
        %1832 = vmatprep.subr.mxu0 0.0
        %1833 = vmatpush1.msra.mxu0 0.0
        %1834 = vmatprep.subr.mxu0 0.0
        %1835 = vmatpush1.msra.mxu0 0.0
        %1836 = vmatprep.subr.mxu0 0.0
        %1837 = vmatpush1.msra.mxu0 0.0
        %1838 = vmatprep.subr.mxu0 0.0
        %1839 = vmatpush1.msra.mxu0 0.0
        %1840 = vmatprep.subr.mxu0 0.0
        %1841 = vmatpush1.msra.mxu0 0.0
        %1842 = vmatprep.subr.mxu0 0.0
        %1843 = vmatpush1.msra.mxu0 0.0
        %1844 = vmatprep.subr.mxu0 0.0
        %v1845 = vand.u32 %v1468, 4294901760
        %v1846 = vsub.f32 %v1468, %v1845
        %v1847 = vand.u32 %v1846, 4294901760
        %1848 = vmatpush1.msra.mxu0 %v1847
        %1849 = vmatprep.subr.mxu0 0.0
        %v1850 = vand.u32 %v1467, 4294901760
        %v1851 = vsub.f32 %v1467, %v1850
        %v1852 = vand.u32 %v1851, 4294901760
        %1853 = vmatpush1.msra.mxu0 %v1852
        %1854 = vmatprep.subr.mxu0 0.0
        %1855 = vmatpush2.msra.mxu0 0.0
        %1856 = vmatprep.subr.mxu0 0.0
        %1857 = vmatpush2.msra.mxu0 0.0
        %1858 = vmatprep.subr.mxu0 0.0
        %1859 = vmatpush2.msra.mxu0 0.0
        %1860 = vmatprep.subr.mxu0 0.0
        %1861 = vmatpush2.msra.mxu0 0.0
        %1862 = vmatprep.subr.mxu0 0.0
        %1863 = vmatpush2.msra.mxu0 0.0
        %1864 = vmatprep.subr.mxu0 0.0
        %1865 = vmatpush2.msra.mxu0 0.0
        %1866 = vmatprep.subr.mxu0 0.0
        %1867 = vmatpush2.msra.mxu0 0.0
        %1868 = vmatprep.subr.mxu0 0.0
        %1869 = vmatpush2.msra.mxu0 0.0
        %1870 = vmatprep.subr.mxu0 0.0
        %1871 = vmatpush2.msra.mxu0 0.0
        %1872 = vmatprep.subr.mxu0 0.0
        %1873 = vmatpush2.msra.mxu0 0.0
        %1874 = vmatprep.subr.mxu0 0.0
        %1875 = vmatpush2.msra.mxu0 0.0
        %1876 = vmatprep.subr.mxu0 0.0
        %1877 = vmatpush2.msra.mxu0 0.0
        %1878 = vmatprep.subr.mxu0 0.0
        %1879 = vmatpush2.msra.mxu0 0.0
        %1880 = vmatprep.subr.mxu0 0.0
        %1881 = vmatpush2.msra.mxu0 0.0
        %1882 = vmatprep.subr.mxu0 0.0
        %1883 = vmatpush2.msra.mxu0 0.0
        %1884 = vmatprep.subr.mxu0 0.0
        %1885 = vmatpush2.msra.mxu0 0.0
        %1886 = vmatprep.mubr.f32.mxu0 0.0
        %v1887 = vand.u32 %v1471, 4294901760
        %1888 = vmatmul.mubr.f32.gmra.mxu0 %v1887
        %v1889 = vpop.f32.mrf.mxu0
        %v1890 = vadd.f32 %v1805, %v1889
        %v1891 = vpop.f32.mrf.mxu0
        %1892 = vmatprep.mubr.f32.mxu0 0.0
        %v1893 = vand.u32 %v1474, 4294901760
        %1894 = vmatmul.mubr.f32.gmra.mxu0 %v1893
        %v1895 = vpop.f32.mrf.mxu0
        %v1896 = vadd.f32 %v1813, %v1895
        %v1897 = vpop.f32.mrf.mxu0
        %1898 = vdwg.mxu0
        %1899 = vmatprep.subr.mxu0 0.0
        %1900 = vmatpush1.msra.mxu0 0.0
        %1901 = vmatprep.subr.mxu0 0.0
        %1902 = vmatpush1.msra.mxu0 0.0
        %1903 = vmatprep.subr.mxu0 0.0
        %1904 = vmatpush1.msra.mxu0 0.0
        %1905 = vmatprep.subr.mxu0 0.0
        %1906 = vmatpush1.msra.mxu0 0.0
        %1907 = vmatprep.subr.mxu0 0.0
        %1908 = vmatpush1.msra.mxu0 0.0
        %1909 = vmatprep.subr.mxu0 0.0
        %1910 = vmatpush1.msra.mxu0 0.0
        %1911 = vmatprep.subr.mxu0 0.0
        %1912 = vmatpush1.msra.mxu0 0.0
        %1913 = vmatprep.subr.mxu0 0.0
        %1914 = vmatpush1.msra.mxu0 0.0
        %1915 = vmatprep.subr.mxu0 0.0
        %1916 = vmatpush1.msra.mxu0 0.0
        %1917 = vmatprep.subr.mxu0 0.0
        %1918 = vmatpush1.msra.mxu0 0.0
        %1919 = vmatprep.subr.mxu0 0.0
        %1920 = vmatpush1.msra.mxu0 0.0
        %1921 = vmatprep.subr.mxu0 0.0
        %1922 = vmatpush1.msra.mxu0 0.0
        %1923 = vmatprep.subr.mxu0 0.0
        %1924 = vmatpush1.msra.mxu0 0.0
        %1925 = vmatprep.subr.mxu0 0.0
        %1926 = vmatpush1.msra.mxu0 0.0
        %1927 = vmatprep.subr.mxu0 0.0
        %v1928 = vand.u32 %v1468, 4294901760
        %1929 = vmatpush1.msra.mxu0 %v1928
        %1930 = vmatprep.subr.mxu0 0.0
        %v1931 = vand.u32 %v1467, 4294901760
        %1932 = vmatpush1.msra.mxu0 %v1931
        %1933 = vmatprep.subr.mxu0 0.0
        %1934 = vmatpush2.msra.mxu0 0.0
        %1935 = vmatprep.subr.mxu0 0.0
        %1936 = vmatpush2.msra.mxu0 0.0
        %1937 = vmatprep.subr.mxu0 0.0
        %1938 = vmatpush2.msra.mxu0 0.0
        %1939 = vmatprep.subr.mxu0 0.0
        %1940 = vmatpush2.msra.mxu0 0.0
        %1941 = vmatprep.subr.mxu0 0.0
        %1942 = vmatpush2.msra.mxu0 0.0
        %1943 = vmatprep.subr.mxu0 0.0
        %1944 = vmatpush2.msra.mxu0 0.0
        %1945 = vmatprep.subr.mxu0 0.0
        %1946 = vmatpush2.msra.mxu0 0.0
        %1947 = vmatprep.subr.mxu0 0.0
        %1948 = vmatpush2.msra.mxu0 0.0
        %1949 = vmatprep.subr.mxu0 0.0
        %1950 = vmatpush2.msra.mxu0 0.0
        %1951 = vmatprep.subr.mxu0 0.0
        %1952 = vmatpush2.msra.mxu0 0.0
        %1953 = vmatprep.subr.mxu0 0.0
        %1954 = vmatpush2.msra.mxu0 0.0
        %1955 = vmatprep.subr.mxu0 0.0
        %1956 = vmatpush2.msra.mxu0 0.0
        %1957 = vmatprep.subr.mxu0 0.0
        %1958 = vmatpush2.msra.mxu0 0.0
        %1959 = vmatprep.subr.mxu0 0.0
        %1960 = vmatpush2.msra.mxu0 0.0
        %1961 = vmatprep.subr.mxu0 0.0
        %1962 = vmatpush2.msra.mxu0 0.0
        %1963 = vmatprep.subr.mxu0 0.0
        %1964 = vmatpush2.msra.mxu0 0.0
        %1965 = vmatprep.mubr.f32.mxu0 0.0
        %v1966 = vand.u32 %v1471, 4294901760
        %1967 = vmatmul.mubr.f32.gmra.mxu0 %v1966
        %v1968 = vpop.f32.mrf.mxu0
        %v1969 = vadd.f32 %v1890, %v1968
        %v1970 = vpop.f32.mrf.mxu0
        %1971 = vmatprep.mubr.f32.mxu0 0.0
        %v1972 = vand.u32 %v1474, 4294901760
        %1973 = vmatmul.mubr.f32.gmra.mxu0 %v1972
        %v1974 = vpop.f32.mrf.mxu0
        %v1975 = vadd.f32 %v1896, %v1974
        %v1976 = vpop.f32.mrf.mxu0
        %1977 = vdwg.mxu0
        %v1978 = vmul.f32 %v1969, %v1969
        %v1979 = vmul.f32 %v1975, %v1975
        %1982 = vrot.lane.b32.xlu0 %v1978, 1
        %v1983 = vpop.permute.xlu0 %1982
        %1984 = vrot.lane.b32.xlu0 %v1979, 1
        %v1985 = vpop.permute.xlu0 %1984
        %v1988 = vsub.f32 %v1969, %v1983
        %v1989 = vsub.f32 %v1975, %v1985
        %v1990 = vmax.f32 %v1988, 0.0
        %v1991 = vmax.f32 %v1989, 0.0
        %1993 = vset.pattern.permute.xlu0 0
        %1994 = vperm.xlu0 %1993, %v1969
        %v1995 = vpop.permute.xlu0 %1994
        %1998 = vset.pattern.permute.xlu0 0
        %1999 = vperm.xlu0 %1998, %v1975
        %v2000 = vpop.permute.xlu0 %1999
        %v2002 = vsub.f32 %v1441, %v1995
        %v2003 = vsub.f32 %v1442, %v1995
        %v2004 = vsub.f32 %v1443, %v2000
        %v2005 = vsub.f32 %v1444, %v2000
        %v2006 = vadd.f32 %v1990, 1e-05
        %v2007 = vadd.f32 %v1991, 1e-05
        %v2008 = vrsqrt.pop %v2006
        %v2009 = vrsqrt.pop %v2007
        %2011 = vset.pattern.permute.xlu0 1
        %2012 = vperm.xlu0 %2011, %v2008
        %v2013 = vpop.permute.xlu0 %2012
        %2016 = vset.pattern.permute.xlu0 1
        %2017 = vperm.xlu0 %2016, %v2009
        %v2018 = vpop.permute.xlu0 %2017
        %v2020 = vmul.f32 %v2002, %v2013
        %v2021 = vmul.f32 %v2003, %v2013
        %v2022 = vmul.f32 %v2004, %v2018
        %v2023 = vmul.f32 %v2005, %v2018
        %2025 = vset.pattern.permute.xlu0 0
        %2026 = vperm.xlu0 %2025, %v1447
        %v2027 = vpop.permute.xlu0 %2026
        %2030 = vset.pattern.permute.xlu0 0
        %2031 = vperm.xlu0 %2030, %v1448
        %v2032 = vpop.permute.xlu0 %2031
        %v2034 = vmul.f32 %v2020, %v2027
        %v2035 = vmul.f32 %v2021, %v2027
        %v2036 = vmul.f32 %v2022, %v2032
        %v2037 = vmul.f32 %v2023, %v2032
        %2039 = vset.pattern.permute.xlu0 0
        %2040 = vperm.xlu0 %2039, %v1449
        %v2041 = vpop.permute.xlu0 %2040
        %2044 = vset.pattern.permute.xlu0 0
        %2045 = vperm.xlu0 %2044, %v1450
        %v2046 = vpop.permute.xlu0 %2045
        %v2048 = vadd.f32 %v2034, %v2041
        %v2049 = vadd.f32 %v2035, %v2041
        %v2050 = vadd.f32 %v2036, %v2046
        %v2051 = vadd.f32 %v2037, %v2046
        %v2052 = vxor.u32 %v2048, 2147483648
        %v2053 = vxor.u32 %v2049, 2147483648
        %v2054 = vxor.u32 %v2050, 2147483648
        %v2055 = vxor.u32 %v2051, 2147483648
        %v2056 = vmul.f32 %v2052, 1.442695
        %v2057 = vpow.pop %v2056
        %v2058 = vmul.f32 %v2053, 1.442695
        %v2059 = vpow.pop %v2058
        %v2060 = vmul.f32 %v2054, 1.442695
        %v2061 = vpow.pop %v2060
        %v2062 = vmul.f32 %v2055, 1.442695
        %v2063 = vpow.pop %v2062
        %v2064 = vadd.f32 %v2057, 1.0
        %v2065 = vadd.f32 %v2059, 1.0
        %v2066 = vadd.f32 %v2061, 1.0
        %v2067 = vadd.f32 %v2063, 1.0
        %v2068 = vrcp.pop %v2064
        %v2069 = vmul.f32 1.0, %v2068
        %v2070 = vrcp.pop %v2065
        %v2071 = vmul.f32 1.0, %v2070
        %v2072 = vrcp.pop %v2066
        %v2073 = vmul.f32 1.0, %v2072
        %v2074 = vrcp.pop %v2067
        %v2075 = vmul.f32 1.0, %v2074
        %v2076 = vmul.f32 %v2048, %v2069
        %v2077 = vmul.f32 %v2049, %v2071
        %v2078 = vmul.f32 %v2050, %v2073
        %v2079 = vmul.f32 %v2051, %v2075
        %v2080 = vld [vmem:[%s12] sm:$0xff]
        %v2081 = vld [vmem:[%s12 + $0x8] sm:$0xff]
        %2082 = vrot.lane.b32.xlu0 %v2076, 16
        %v2083 = vpop.permute.xlu0 %2082
        %2084 = vrot.lane.b32.xlu0 %v2078, 16
        %v2085 = vpop.permute.xlu0 %2084
        %2086 = vrot.lane.b32.xlu0 %v2077, 16
        %v2087 = vpop.permute.xlu0 %2086
        %2088 = vrot.lane.b32.xlu0 %v2079, 16
        %v2089 = vpop.permute.xlu0 %2088
        %v2090 = vsel %vm1039, %v2083, %v2087
        %v2091 = vsel %vm1039, %v2085, %v2089
        %v2092 = vsel %vm1039, %v2087, %v2083
        %v2093 = vsel %vm1039, %v2089, %v2085
        %v2094 = vmul.f32 %v2092, %v1056
        %v2095 = vmul.f32 %v2090, %v1060
        %v2096 = vmul.f32 %v2093, %v1056
        %v2097 = vmul.f32 %v2091, %v1060
        %2098 = vrot.lane.b32.xlu0 %v2094, 1
        %v2099 = vpop.permute.xlu0 %2098
        %2100 = vrot.lane.b32.xlu0 %v2096, 1
        %v2101 = vpop.permute.xlu0 %2100
        %2102 = vrot.lane.b32.xlu0 %v2095, 1
        %v2103 = vpop.permute.xlu0 %2102
        %2104 = vrot.lane.b32.xlu0 %v2097, 1
        %v2105 = vpop.permute.xlu0 %2104
        %v2106 = vsel %vm1067, %v2099, %v2103
        %v2107 = vsel %vm1067, %v2101, %v2105
        %v2108 = vsel %vm1067, %v2103, %v2099
        %v2109 = vsel %vm1067, %v2105, %v2101
        %v2110 = vmul.f32 %v2108, %v1083
        %v2111 = vmul.f32 %v2106, %v1087
        %v2112 = vmul.f32 %v2109, %v1083
        %v2113 = vmul.f32 %v2107, %v1087
        %v2114 = vpack.c.bf16 %v2112, %v2110
        %v2115 = vpack.c.bf16 %v2113, %v2111
        %v2116 = vpack.c.bf16 %v2096, %v2094
        %v2117 = vpack.c.bf16 %v2097, %v2095
        %2118 = vrot.lane.b32.xlu0 %v2094, 127
        %v2119 = vpop.permute.xlu0 %2118
        %2120 = vrot.lane.b32.xlu0 %v2096, 127
        %v2121 = vpop.permute.xlu0 %2120
        %2122 = vrot.lane.b32.xlu0 %v2095, 127
        %v2123 = vpop.permute.xlu0 %2122
        %2124 = vrot.lane.b32.xlu0 %v2097, 127
        %v2125 = vpop.permute.xlu0 %2124
        %v2126 = vsel %vm1098, %v2119, %v2123
        %v2127 = vsel %vm1098, %v2121, %v2125
        %v2128 = vsel %vm1098, %v2123, %v2119
        %v2129 = vsel %vm1098, %v2125, %v2121
        %v2130 = vmul.f32 %v2126, %v1114
        %v2131 = vmul.f32 %v2128, %v1118
        %v2132 = vmul.f32 %v2127, %v1114
        %v2133 = vmul.f32 %v2129, %v1118
        %v2134 = vpack.c.bf16 %v2132, %v2130
        %v2135 = vpack.c.bf16 %v2133, %v2131
        %v2136 = vld [vmem:[%s11] sm:$0xf]
        %v2137 = vld [vmem:[%s11 + $0x4] sm:$0xf]
        %2138 = vrot.lane.b32.xlu0 %v2076, 1
        %v2139 = vpop.permute.xlu0 %2138
        %2140 = vrot.lane.b32.xlu0 %v2078, 1
        %v2141 = vpop.permute.xlu0 %2140
        %2142 = vrot.lane.b32.xlu0 %v2077, 1
        %v2143 = vpop.permute.xlu0 %2142
        %2144 = vrot.lane.b32.xlu0 %v2079, 1
        %v2145 = vpop.permute.xlu0 %2144
        %v2146 = vsel %vm1067, %v2139, %v2143
        %v2147 = vsel %vm1067, %v2141, %v2145
        %v2148 = vsel %vm1067, %v2143, %v2139
        %v2149 = vsel %vm1067, %v2145, %v2141
        %v2150 = vmul.f32 %v2148, %v1083
        %v2151 = vmul.f32 %v2146, %v1087
        %v2152 = vmul.f32 %v2149, %v1083
        %v2153 = vmul.f32 %v2147, %v1087
        %v2154 = vpack.c.bf16 %v2152, %v2150
        %v2155 = vpack.c.bf16 %v2153, %v2151
        %v2156 = vpack.c.bf16 %v2078, %v2076
        %v2157 = vpack.c.bf16 %v2079, %v2077
        %2158 = vrot.lane.b32.xlu0 %v2076, 127
        %v2159 = vpop.permute.xlu0 %2158
        %2160 = vrot.lane.b32.xlu0 %v2078, 127
        %v2161 = vpop.permute.xlu0 %2160
        %2162 = vrot.lane.b32.xlu0 %v2077, 127
        %v2163 = vpop.permute.xlu0 %2162
        %2164 = vrot.lane.b32.xlu0 %v2079, 127
        %v2165 = vpop.permute.xlu0 %2164
        %v2166 = vsel %vm1098, %v2159, %v2163
        %v2167 = vsel %vm1098, %v2161, %v2165
        %v2168 = vsel %vm1098, %v2163, %v2159
        %v2169 = vsel %vm1098, %v2165, %v2161
        %v2170 = vmul.f32 %v2166, %v1114
        %v2171 = vmul.f32 %v2168, %v1118
        %v2172 = vmul.f32 %v2167, %v1114
        %v2173 = vmul.f32 %v2169, %v1118
        %v2174 = vpack.c.bf16 %v2172, %v2170
        %v2175 = vpack.c.bf16 %v2173, %v2171
        %s2176 = scalar_lea.vmem %s11, 8
        %v2177 = vld [vmem:[%s2176] sm:$0xf]
        %v2178 = vld [vmem:[%s2176 + $0x4] sm:$0xf]
        %v2181 = vunpack.c.l.b16 %v2177
        %v2182 = vunpack.c.l.b16 %v2178
        %v2183 = vpack.c.b16 %v2182, %v2181
        %vm2184 = vcmask 392192
        %v2186 = vsel %vm2184, %v2183, 0
        %2188 = vmatprep.subr.bf16.mxu0 0
        %2189 = vmatpush1.bf16.msra.mxu0 0
        %2190 = vmatprep.subr.bf16.mxu0 0
        %2191 = vmatpush1.bf16.msra.mxu0 0
        %2192 = vmatprep.subr.bf16.mxu0 0
        %2193 = vmatpush1.bf16.msra.mxu0 0
        %2194 = vmatprep.subr.bf16.mxu0 0
        %2195 = vmatpush1.bf16.msra.mxu0 0
        %2196 = vmatprep.subr.bf16.mxu0 0
        %2197 = vmatpush1.bf16.msra.mxu0 0
        %2198 = vmatprep.subr.bf16.mxu0 %v2175
        %2199 = vmatpush1.bf16.msra.mxu0 %v2174
        %2200 = vmatprep.subr.bf16.mxu0 %v2157
        %2201 = vmatpush1.bf16.msra.mxu0 %v2156
        %2202 = vmatprep.subr.bf16.mxu0 %v2155
        %2203 = vmatpush1.bf16.msra.mxu0 %v2154
        %2204 = vmatprep.subr.bf16.mxu0 0
        %2205 = vmatpush2.bf16.msra.mxu0 0
        %2206 = vmatprep.subr.bf16.mxu0 0
        %2207 = vmatpush2.bf16.msra.mxu0 0
        %2208 = vmatprep.subr.bf16.mxu0 0
        %2209 = vmatpush2.bf16.msra.mxu0 0
        %2210 = vmatprep.subr.bf16.mxu0 0
        %2211 = vmatpush2.bf16.msra.mxu0 0
        %2212 = vmatprep.subr.bf16.mxu0 0
        %2213 = vmatpush2.bf16.msra.mxu0 0
        %2214 = vmatprep.subr.bf16.mxu0 0
        %2215 = vmatpush2.bf16.msra.mxu0 0
        %2216 = vmatprep.subr.bf16.mxu0 0
        %2217 = vmatpush2.bf16.msra.mxu0 0
        %2218 = vmatprep.subr.bf16.mxu0 0
        %2219 = vmatpush2.bf16.msra.mxu0 0
        %2220 = vmatprep.mubr.bf16.mxu0 0
        %2221 = vmatmul.mubr.bf16.gmra.mxu0 %v2186
        %v2222 = vpop.f32.mrf.mxu0
        %v2223 = vadd.f32 0.0, %v2222
        %v2224 = vpop.f32.mrf.mxu0
        %v2225 = vadd.f32 0.0, %v2224
        %v2226 = vpop.f32.mrf.mxu0
        %v2227 = vadd.f32 0.0, %v2226
        %v2228 = vpop.f32.mrf.mxu0
        %v2229 = vadd.f32 0.0, %v2228
        %2230 = vdwg.mxu0
        %v2233 = vunpack.c.l.b16 %v2136
        %v2234 = vunpack.c.l.b16 %v2137
        %v2235 = vpack.c.b16 %v2234, %v2233
        %v2237 = vsel %vm2184, %v2235, 0
        %2239 = vmatprep.subr.bf16.mxu0 0
        %2240 = vmatpush1.bf16.msra.mxu0 0
        %2241 = vmatprep.subr.bf16.mxu0 0
        %2242 = vmatpush1.bf16.msra.mxu0 0
        %2243 = vmatprep.subr.bf16.mxu0 0
        %2244 = vmatpush1.bf16.msra.mxu0 0
        %2245 = vmatprep.subr.bf16.mxu0 0
        %2246 = vmatpush1.bf16.msra.mxu0 0
        %2247 = vmatprep.subr.bf16.mxu0 0
        %2248 = vmatpush1.bf16.msra.mxu0 0
        %2249 = vmatprep.subr.bf16.mxu0 %v2135
        %2250 = vmatpush1.bf16.msra.mxu0 %v2134
        %2251 = vmatprep.subr.bf16.mxu0 %v2117
        %2252 = vmatpush1.bf16.msra.mxu0 %v2116
        %2253 = vmatprep.subr.bf16.mxu0 %v2115
        %2254 = vmatpush1.bf16.msra.mxu0 %v2114
        %2255 = vmatprep.subr.bf16.mxu0 0
        %2256 = vmatpush2.bf16.msra.mxu0 0
        %2257 = vmatprep.subr.bf16.mxu0 0
        %2258 = vmatpush2.bf16.msra.mxu0 0
        %2259 = vmatprep.subr.bf16.mxu0 0
        %2260 = vmatpush2.bf16.msra.mxu0 0
        %2261 = vmatprep.subr.bf16.mxu0 0
        %2262 = vmatpush2.bf16.msra.mxu0 0
        %2263 = vmatprep.subr.bf16.mxu0 0
        %2264 = vmatpush2.bf16.msra.mxu0 0
        %2265 = vmatprep.subr.bf16.mxu0 0
        %2266 = vmatpush2.bf16.msra.mxu0 0
        %2267 = vmatprep.subr.bf16.mxu0 0
        %2268 = vmatpush2.bf16.msra.mxu0 0
        %2269 = vmatprep.subr.bf16.mxu0 0
        %2270 = vmatpush2.bf16.msra.mxu0 0
        %2271 = vmatprep.mubr.bf16.mxu0 0
        %2272 = vmatmul.mubr.bf16.gmra.mxu0 %v2237
        %v2273 = vpop.f32.mrf.mxu0
        %v2274 = vadd.f32 %v2223, %v2273
        %v2275 = vpop.f32.mrf.mxu0
        %v2276 = vadd.f32 %v2225, %v2275
        %v2277 = vpop.f32.mrf.mxu0
        %v2278 = vadd.f32 %v2227, %v2277
        %v2279 = vpop.f32.mrf.mxu0
        %v2280 = vadd.f32 %v2229, %v2279
        %2281 = vdwg.mxu0
        %2282 = vrot.lane.b32.xlu0 %v2076, 112
        %v2283 = vpop.permute.xlu0 %2282
        %2284 = vrot.lane.b32.xlu0 %v2078, 112
        %v2285 = vpop.permute.xlu0 %2284
        %2286 = vrot.lane.b32.xlu0 %v2077, 112
        %v2287 = vpop.permute.xlu0 %2286
        %2288 = vrot.lane.b32.xlu0 %v2079, 112
        %v2289 = vpop.permute.xlu0 %2288
        %v2290 = vsel %vm1294, %v2283, %v2287
        %v2291 = vsel %vm1294, %v2285, %v2289
        %v2292 = vsel %vm1294, %v2287, %v2283
        %v2293 = vsel %vm1294, %v2289, %v2285
        %v2294 = vmul.f32 %v2290, %v1310
        %v2295 = vmul.f32 %v2292, %v1314
        %v2296 = vmul.f32 %v2291, %v1310
        %v2297 = vmul.f32 %v2293, %v1314
        %2298 = vrot.lane.b32.xlu0 %v2294, 1
        %v2299 = vpop.permute.xlu0 %2298
        %2300 = vrot.lane.b32.xlu0 %v2296, 1
        %v2301 = vpop.permute.xlu0 %2300
        %2302 = vrot.lane.b32.xlu0 %v2295, 1
        %v2303 = vpop.permute.xlu0 %2302
        %2304 = vrot.lane.b32.xlu0 %v2297, 1
        %v2305 = vpop.permute.xlu0 %2304
        %v2306 = vsel %vm1067, %v2299, %v2303
        %v2307 = vsel %vm1067, %v2301, %v2305
        %v2308 = vsel %vm1067, %v2303, %v2299
        %v2309 = vsel %vm1067, %v2305, %v2301
        %v2310 = vmul.f32 %v2308, %v1083
        %v2311 = vmul.f32 %v2306, %v1087
        %v2312 = vmul.f32 %v2309, %v1083
        %v2313 = vmul.f32 %v2307, %v1087
        %v2314 = vpack.c.bf16 %v2312, %v2310
        %v2315 = vpack.c.bf16 %v2313, %v2311
        %v2316 = vpack.c.bf16 %v2296, %v2294
        %v2317 = vpack.c.bf16 %v2297, %v2295
        %2318 = vrot.lane.b32.xlu0 %v2294, 127
        %v2319 = vpop.permute.xlu0 %2318
        %2320 = vrot.lane.b32.xlu0 %v2296, 127
        %v2321 = vpop.permute.xlu0 %2320
        %2322 = vrot.lane.b32.xlu0 %v2295, 127
        %v2323 = vpop.permute.xlu0 %2322
        %2324 = vrot.lane.b32.xlu0 %v2297, 127
        %v2325 = vpop.permute.xlu0 %2324
        %v2326 = vsel %vm1098, %v2319, %v2323
        %v2327 = vsel %vm1098, %v2321, %v2325
        %v2328 = vsel %vm1098, %v2323, %v2319
        %v2329 = vsel %vm1098, %v2325, %v2321
        %v2330 = vmul.f32 %v2326, %v1114
        %v2331 = vmul.f32 %v2328, %v1118
        %v2332 = vmul.f32 %v2327, %v1114
        %v2333 = vmul.f32 %v2329, %v1118
        %v2334 = vpack.c.bf16 %v2332, %v2330
        %v2335 = vpack.c.bf16 %v2333, %v2331
        %s2336 = scalar_lea.vmem %s11, 16
        %v2337 = vld [vmem:[%s2336] sm:$0xf]
        %v2338 = vld [vmem:[%s2336 + $0x4] sm:$0xf]
        %v2341 = vunpack.c.l.b16 %v2337
        %v2342 = vunpack.c.l.b16 %v2338
        %v2343 = vpack.c.b16 %v2342, %v2341
        %v2345 = vsel %vm2184, %v2343, 0
        %2347 = vmatprep.subr.bf16.mxu0 0
        %2348 = vmatpush1.bf16.msra.mxu0 0
        %2349 = vmatprep.subr.bf16.mxu0 0
        %2350 = vmatpush1.bf16.msra.mxu0 0
        %2351 = vmatprep.subr.bf16.mxu0 0
        %2352 = vmatpush1.bf16.msra.mxu0 0
        %2353 = vmatprep.subr.bf16.mxu0 0
        %2354 = vmatpush1.bf16.msra.mxu0 0
        %2355 = vmatprep.subr.bf16.mxu0 0
        %2356 = vmatpush1.bf16.msra.mxu0 0
        %2357 = vmatprep.subr.bf16.mxu0 %v2335
        %2358 = vmatpush1.bf16.msra.mxu0 %v2334
        %2359 = vmatprep.subr.bf16.mxu0 %v2317
        %2360 = vmatpush1.bf16.msra.mxu0 %v2316
        %2361 = vmatprep.subr.bf16.mxu0 %v2315
        %2362 = vmatpush1.bf16.msra.mxu0 %v2314
        %2363 = vmatprep.subr.bf16.mxu0 0
        %2364 = vmatpush2.bf16.msra.mxu0 0
        %2365 = vmatprep.subr.bf16.mxu0 0
        %2366 = vmatpush2.bf16.msra.mxu0 0
        %2367 = vmatprep.subr.bf16.mxu0 0
        %2368 = vmatpush2.bf16.msra.mxu0 0
        %2369 = vmatprep.subr.bf16.mxu0 0
        %2370 = vmatpush2.bf16.msra.mxu0 0
        %2371 = vmatprep.subr.bf16.mxu0 0
        %2372 = vmatpush2.bf16.msra.mxu0 0
        %2373 = vmatprep.subr.bf16.mxu0 0
        %2374 = vmatpush2.bf16.msra.mxu0 0
        %2375 = vmatprep.subr.bf16.mxu0 0
        %2376 = vmatpush2.bf16.msra.mxu0 0
        %2377 = vmatprep.subr.bf16.mxu0 0
        %2378 = vmatpush2.bf16.msra.mxu0 0
        %2379 = vmatprep.mubr.bf16.mxu0 0
        %2380 = vmatmul.mubr.bf16.gmra.mxu0 %v2345
        %v2381 = vpop.f32.mrf.mxu0
        %v2382 = vadd.f32 0.0, %v2381
        %v2383 = vpop.f32.mrf.mxu0
        %v2384 = vadd.f32 0.0, %v2383
        %v2385 = vpop.f32.mrf.mxu0
        %v2386 = vadd.f32 0.0, %v2385
        %v2387 = vpop.f32.mrf.mxu0
        %v2388 = vadd.f32 0.0, %v2387
        %2389 = vdwg.mxu0
        %v2390 = vadd.f32 %v2274, %v2382
        %v2391 = vadd.f32 %v2276, %v2384
        %v2392 = vadd.f32 %v2278, %v2386
        %v2393 = vadd.f32 %v2280, %v2388
        %2395 = vset.pattern.permute.xlu0 0
        %2396 = vperm.xlu0 %2395, %v2080
        %v2397 = vpop.permute.xlu0 %2396
        %2400 = vset.pattern.permute.xlu0 0
        %2401 = vperm.xlu0 %2400, %v2081
        %v2402 = vpop.permute.xlu0 %2401
        %v2404 = vadd.f32 %v2390, %v2397
        %v2405 = vadd.f32 %v2391, %v2397
        %v2406 = vadd.f32 %v2392, %v2402
        %v2407 = vadd.f32 %v2393, %v2402
        %v2408 = vld [vmem:[%s13] sm:$0xf]
        %v2409 = vld [vmem:[%s13 + $0x4] sm:$0xf]
        %v2410 = vpack.c.bf16 %v514, %v514
        %v2411 = vpack.c.bf16 %v515, %v515
        %v2412 = vld [vmem:[%s14] sm:$0xff]
        %v2413 = vld [vmem:[%s14 + $0x8] sm:$0xff]
        %2415 = vset.pattern.permute.xlu0 0
        %2416 = vperm.xlu0 %2415, %v2412
        %v2417 = vpop.permute.xlu0 %2416
        %2420 = vset.pattern.permute.xlu0 0
        %2421 = vperm.xlu0 %2420, %v2413
        %v2422 = vpop.permute.xlu0 %2421
        %v2426 = vunpack.c.l.b16 %v2408
        %v2427 = vunpack.c.l.b16 %v2409
        %v2428 = vpack.c.b16 %v2427, %v2426
        %v2430 = vsel %vm530, %v2428, 0
        %v2433 = vsel %vm1127, %v2410, 0
        %v2436 = vsel %vm1127, %v2411, 0
        %2438 = vmatprep.subr.bf16.mxu0 0
        %2439 = vmatpush1.bf16.msra.mxu0 0
        %2440 = vmatprep.subr.bf16.mxu0 0
        %2441 = vmatpush1.bf16.msra.mxu0 0
        %2442 = vmatprep.subr.bf16.mxu0 0
        %2443 = vmatpush1.bf16.msra.mxu0 0
        %2444 = vmatprep.subr.bf16.mxu0 0
        %2445 = vmatpush1.bf16.msra.mxu0 0
        %2446 = vmatprep.subr.bf16.mxu0 0
        %2447 = vmatpush1.bf16.msra.mxu0 0
        %2448 = vmatprep.subr.bf16.mxu0 0
        %2449 = vmatpush1.bf16.msra.mxu0 0
        %2450 = vmatprep.subr.bf16.mxu0 0
        %2451 = vmatpush1.bf16.msra.mxu0 0
        %2452 = vmatprep.subr.bf16.mxu0 %v2436
        %2453 = vmatpush1.bf16.msra.mxu0 %v2433
        %2454 = vmatprep.subr.bf16.mxu0 0
        %2455 = vmatpush2.bf16.msra.mxu0 0
        %2456 = vmatprep.subr.bf16.mxu0 0
        %2457 = vmatpush2.bf16.msra.mxu0 0
        %2458 = vmatprep.subr.bf16.mxu0 0
        %2459 = vmatpush2.bf16.msra.mxu0 0
        %2460 = vmatprep.subr.bf16.mxu0 0
        %2461 = vmatpush2.bf16.msra.mxu0 0
        %2462 = vmatprep.subr.bf16.mxu0 0
        %2463 = vmatpush2.bf16.msra.mxu0 0
        %2464 = vmatprep.subr.bf16.mxu0 0
        %2465 = vmatpush2.bf16.msra.mxu0 0
        %2466 = vmatprep.subr.bf16.mxu0 0
        %2467 = vmatpush2.bf16.msra.mxu0 0
        %2468 = vmatprep.subr.bf16.mxu0 0
        %2469 = vmatpush2.bf16.msra.mxu0 0
        %2470 = vmatprep.mubr.bf16.mxu0 0
        %2471 = vmatmul.mubr.bf16.gmra.mxu0 %v2430
        %v2472 = vpop.f32.mrf.mxu0
        %v2473 = vadd.f32 %v2417, %v2472
        %v2474 = vpop.f32.mrf.mxu0
        %v2475 = vadd.f32 %v2417, %v2474
        %v2476 = vpop.f32.mrf.mxu0
        %v2477 = vadd.f32 %v2422, %v2476
        %v2478 = vpop.f32.mrf.mxu0
        %v2479 = vadd.f32 %v2422, %v2478
        %2480 = vdwg.mxu0
        %v2481 = vadd.f32 %v2473, %v2404
        %v2482 = vadd.f32 %v2475, %v2405
        %v2483 = vadd.f32 %v2477, %v2406
        %v2484 = vadd.f32 %v2479, %v2407
        %2485 = vst [vmem:[%s502] sm:$0xff] %v2481
        %2486 = vst [vmem:[%s502 + $0x8] sm:$0xff] %v2482
        %2487 = vst [vmem:[%s502 + $0x10] sm:$0xff] %v2483
        %2488 = vst [vmem:[%s502 + $0x18] sm:$0xff] %v2484
        %s2489 = sand.u32 %s362, 1
        %s2490 = scalar_lea.sflag [#allocation3], %s2489
        %s2491 = sand.u32 %s362, 1
        %s2492 = smul.addr %s2491, 32
        %s2493 = scalar_lea.vmem [#allocation2], %s2492
        // Predicated region
        $region81: #{tpu_custom_call.1} parent=79 // pred_check
          %p2494 = pneg %p372
        $region82: #{tpu_custom_call.1} parent=79 // pred_check_branch
          %2496 = sbr.rel (%p2494) target = $region84
        $region83: #{tpu_custom_call.1} parent=79 // pred_region
          %s2498 = ssub.s32 512, 512
          %2499 = vsyncadd %s2490, %s2498
          %s2500 = smul.addr %s29, 4
          %s2501 = smul.addr %s2500, 128
          %s2502 = scalar_lea.hbm %s15, %s2501
          %s2503 = sshll.u32 %s2493, 4
          %s2504 = int_to_ptr.vmem [resolvable:$true] %s2503
          %2509 = dma.vmem_to_hbm [thread:$0]  %s2504, 512, %s2502, %s2490, 256, 256, 16
        $region84: #{tpu_custom_call.1} parent=79 // pred_fallthru
          _
      $region80: #{tpu_custom_call.1} parent=5 // pred_fallthru
        _
      %p2510 = scmp.le.s32.totalorder 2, %s24
      // Predicated region
      $region85: #{tpu_custom_call.1} parent=5 // pred_check
        %p2511 = pneg %p2510
      $region86: #{tpu_custom_call.1} parent=5 // pred_check_branch
        %2513 = sbr.rel (%p2511) target = $region88
      $region87: #{tpu_custom_call.1} parent=5 // pred_region
        %s2514 = ssub.s32 %s24, 2
        // Predicated region
        $region89: #{tpu_custom_call.1} parent=87 // pred_check
          %p2515 = pneg %p378
        $region90: #{tpu_custom_call.1} parent=87 // pred_check_branch
          %2517 = sbr.rel (%p2515) target = $region92
        $region91: #{tpu_custom_call.1} parent=87 // pred_region
          %s2518 = sand.u32 %s363, 1
          %s2519 = scalar_lea.sflag [#allocation3], %s2518
          %s2520 = sand.u32 %s363, 1
          %s2521 = smul.addr %s2520, 32
          %s2522 = scalar_lea.vmem [#allocation2], %s2521
          %2523 = dma.done %s2519, 512
        $region92: #{tpu_custom_call.1} parent=87 // pred_fallthru
          _
      $region88: #{tpu_custom_call.1} parent=5 // pred_fallthru
        _
    $region6: #{tpu_custom_call.1} parent=1 // loop_footer
      %s28 = sadd.s32 1, %s24
    $region7: #{tpu_custom_call.1} parent=1 // loop_footer_branch
      %23 = sbr.rel target = $region3
    $region8: #{tpu_custom_call.1} parent=1 // loop_exit
      _
    %2524 = vsyncpa [#allocation3], 1
    %s2525 = scalar_lea.sflag [#allocation3], 1
    %2526 = vsyncpa %s2525, 1

// kernel: tpu_custom_call.1
$region0: #{tpu_custom_call.1}
  #allocation0 [shape = 'u32[]', space=smem, size = 0x4, offset = 0x4, fixed_abs, tag = 'smem constant byte address 0x4 - core index']
  #allocation1 [shape = 'u32[144,128]{1,0:T(1,128)}', space=vmem, size = 0x12000, scoped, tag = 'internal scratch']
  %s0 = inlined_call_operand.vmem [shape: f32[2,8,256], index: 0, kind: input, shape index: {}]
  %s1 = inlined_call_operand.vmem [shape: f32[2,16,1], index: 1, kind: input, shape index: {}]
  %s2 = inlined_call_operand.vmem [shape: f32[4,256], index: 2, kind: input, shape index: {}]
  %s3 = inlined_call_operand.vmem [shape: f32[8,8], index: 3, kind: input, shape index: {}]
  %s4 = inlined_call_operand.vmem [shape: f32[8,1], index: 4, kind: input, shape index: {}]
  %s5 = inlined_call_operand.vmem [shape: f32[8,1], index: 5, kind: input, shape index: {}]
  %s6 = inlined_call_operand.vmem [shape: bf16[3,16,24], index: 6, kind: input, shape index: {}]
  %s7 = inlined_call_operand.vmem [shape: f32[16,1], index: 7, kind: input, shape index: {}]
  %s8 = inlined_call_operand.vmem [shape: f32[16,16], index: 8, kind: input, shape index: {}]
  %s9 = inlined_call_operand.vmem [shape: f32[16,1], index: 9, kind: input, shape index: {}]
  %s10 = inlined_call_operand.vmem [shape: f32[16,1], index: 10, kind: input, shape index: {}]
  %s11 = inlined_call_operand.vmem [shape: bf16[3,16,48], index: 11, kind: input, shape index: {}]
  %s12 = inlined_call_operand.vmem [shape: f32[16,1], index: 12, kind: input, shape index: {}]
  %s13 = inlined_call_operand.vmem [shape: bf16[16,8], index: 13, kind: input, shape index: {}]
  %s14 = inlined_call_operand.vmem [shape: f32[16,1], index: 14, kind: input, shape index: {}]
  %s15 = inlined_call_operand.hbm [shape: f32[2,16,256], index: 15, kind: output, shape index: {}]
  %s16 = sld [smem:[#allocation0]]
  $region93: #{tpu_custom_call.1} parent=0
    _
  %s18 = ssub.s32 1, %s16
  %s19 = scalar_select 0, %s18, %s16
  $region1: #{tpu_custom_call.1} parent=0
    #allocation2 [shape = 'u8[32768]{0}', space=vmem, size = 0x8000, scoped, tag = 'output window, operand 0']
    #allocation3 [shape = 's32[2]{0}', space=sflag, size = 0x8, scoped, tag = 'scoped memory for tpu_custom_call.1']
    %20 = vsyncpa [#allocation3], 0
    %s21 = scalar_lea.sflag [#allocation3], 1
    %22 = vsyncpa %s21, 0
    loop: start=0, step=1, limit=4
    $region2: #{tpu_custom_call.1} parent=1 // loop_pre_header
      _
    $region3: #{tpu_custom_call.1} parent=1 // loop_header
      %s24 = sphi 0, %s28
      %p25 = scmp.ge.s32.totalorder %s24, 4
      %s34 = sphi 0, %s36
      %s37 = sphi 0, %s34
      %s38 = sphi 0, %s37
      %s54 = sphi 0, %s38
      %s60 = sphi 0, %s62
      %s63 = sphi 0, %s60
      %s64 = sphi 0, %s63
      %s80 = sphi 0, %s64
      %s84 = sphi 0, %s84
      %s86 = sphi 0, %s84
      %s87 = sphi 0, %s86
      %s101 = sphi 0, %s87
      %s105 = sphi 0, %s105
      %s107 = sphi 0, %s105
      %s108 = sphi 0, %s107
      %s122 = sphi 0, %s108
      %s126 = sphi 0, %s126
      %s128 = sphi 0, %s126
      %s129 = sphi 0, %s128
      %s143 = sphi 0, %s129
      %s147 = sphi 0, %s147
      %s149 = sphi 0, %s147
      %s150 = sphi 0, %s149
      %s164 = sphi 0, %s150
      %s168 = sphi 0, %s168
      %s170 = sphi 0, %s168
      %s171 = sphi 0, %s170
      %s185 = sphi 0, %s171
      %s189 = sphi 0, %s189
      %s191 = sphi 0, %s189
      %s192 = sphi 0, %s191
      %s206 = sphi 0, %s192
      %s210 = sphi 0, %s210
      %s212 = sphi 0, %s210
      %s213 = sphi 0, %s212
      %s227 = sphi 0, %s213
      %s231 = sphi 0, %s231
      %s233 = sphi 0, %s231
      %s234 = sphi 0, %s233
      %s248 = sphi 0, %s234
      %s252 = sphi 0, %s252
      %s254 = sphi 0, %s252
      %s255 = sphi 0, %s254
      %s269 = sphi 0, %s255
      %s273 = sphi 0, %s273
      %s275 = sphi 0, %s273
      %s276 = sphi 0, %s275
      %s290 = sphi 0, %s276
      %s294 = sphi 0, %s294
      %s296 = sphi 0, %s294
      %s297 = sphi 0, %s296
      %s311 = sphi 0, %s297
      %s315 = sphi 0, %s315
      %s317 = sphi 0, %s315
      %s318 = sphi 0, %s317
      %s332 = sphi 0, %s318
      %s336 = sphi 0, %s336
      %s338 = sphi 0, %s336
      %s339 = sphi 0, %s338
      %s353 = sphi 0, %s339
      %s359 = sphi 0, %s361
      %s362 = sphi 0, %s359
      %s363 = sphi 0, %s362
      %s379 = sphi 0, %s363
    $region4: #{tpu_custom_call.1} parent=1 // loop_header_branch
      %27 = sbr.rel (%p25) target = $region8
    $region5: #{tpu_custom_call.1} parent=1 // loop_body
      %s29 = ssub.s32 %s24, 1
      %s30 = ssub.s32 %s24, 2
      %s31 = sadd.s32 %s24, 1
      %s32 = ssub.s32 %s24, %s31
      %p33 = scmp.eq.s32.totalorder %s32, 0
      %s35 = sadd.s32 %s34, 1
      %s36 = scalar_select %p33, %s34, %s35
      %p39 = pneg %p33
      %p40 = scmp.eq.s32.totalorder %s24, 1
      %p41 = por %p39, %p40
      %p42 = scmp.ne.s32.totalorder %s34, %s37
      %p43 = scmp.eq.s32.totalorder %s24, 0
      %p44 = por %p42, %p43
      %p45 = scmp.ne.s32.totalorder %s34, %s37
      %p46 = scmp.eq.s32.totalorder %s29, 1
      %p47 = por %p45, %p46
      %p48 = scmp.ne.s32.totalorder %s37, %s38
      %p49 = scmp.eq.s32.totalorder %s29, 0
      %p50 = por %p48, %p49
      %p51 = scmp.ne.s32.totalorder %s37, %s38
      %p52 = scmp.eq.s32.totalorder %s30, 1
      %p53 = por %p51, %p52
      %p55 = scmp.ne.s32.totalorder %s38, %s54
      %p56 = scmp.eq.s32.totalorder %s30, 0
      %p57 = por %p55, %p56
      %s58 = ssub.s32 %s24, %s31
      %p59 = scmp.eq.s32.totalorder %s58, 0
      %s61 = sadd.s32 %s60, 1
      %s62 = scalar_select %p59, %s60, %s61
      %p65 = pneg %p59
      %p66 = scmp.eq.s32.totalorder %s24, 1
      %p67 = por %p65, %p66
      %p68 = scmp.ne.s32.totalorder %s60, %s63
      %p69 = scmp.eq.s32.totalorder %s24, 0
      %p70 = por %p68, %p69
      %p71 = scmp.ne.s32.totalorder %s60, %s63
      %p72 = scmp.eq.s32.totalorder %s29, 1
      %p73 = por %p71, %p72
      %p74 = scmp.ne.s32.totalorder %s63, %s64
      %p75 = scmp.eq.s32.totalorder %s29, 0
      %p76 = por %p74, %p75
      %p77 = scmp.ne.s32.totalorder %s63, %s64
      %p78 = scmp.eq.s32.totalorder %s30, 1
      %p79 = por %p77, %p78
      %p81 = scmp.ne.s32.totalorder %s64, %s80
      %p82 = scmp.eq.s32.totalorder %s30, 0
      %p83 = por %p81, %p82
      %s85 = sadd.s32 %s84, 1
      %p88 = scmp.eq.s32.totalorder %s24, 1
      %p89 = scmp.ne.s32.totalorder %s84, %s86
      %p90 = scmp.eq.s32.totalorder %s24, 0
      %p91 = por %p89, %p90
      %p92 = scmp.ne.s32.totalorder %s84, %s86
      %p93 = scmp.eq.s32.totalorder %s29, 1
      %p94 = por %p92, %p93
      %p95 = scmp.ne.s32.totalorder %s86, %s87
      %p96 = scmp.eq.s32.totalorder %s29, 0
      %p97 = por %p95, %p96
      %p98 = scmp.ne.s32.totalorder %s86, %s87
      %p99 = scmp.eq.s32.totalorder %s30, 1
      %p100 = por %p98, %p99
      %p102 = scmp.ne.s32.totalorder %s87, %s101
      %p103 = scmp.eq.s32.totalorder %s30, 0
      %p104 = por %p102, %p103
      %s106 = sadd.s32 %s105, 1
      %p109 = scmp.eq.s32.totalorder %s24, 1
      %p110 = scmp.ne.s32.totalorder %s105, %s107
      %p111 = scmp.eq.s32.totalorder %s24, 0
      %p112 = por %p110, %p111
      %p113 = scmp.ne.s32.totalorder %s105, %s107
      %p114 = scmp.eq.s32.totalorder %s29, 1
      %p115 = por %p113, %p114
      %p116 = scmp.ne.s32.totalorder %s107, %s108
      %p117 = scmp.eq.s32.totalorder %s29, 0
      %p118 = por %p116, %p117
      %p119 = scmp.ne.s32.totalorder %s107, %s108
      %p120 = scmp.eq.s32.totalorder %s30, 1
      %p121 = por %p119, %p120
      %p123 = scmp.ne.s32.totalorder %s108, %s122
      %p124 = scmp.eq.s32.totalorder %s30, 0
      %p125 = por %p123, %p124
      %s127 = sadd.s32 %s126, 1
      %p130 = scmp.eq.s32.totalorder %s24, 1
      %p131 = scmp.ne.s32.totalorder %s126, %s128
      %p132 = scmp.eq.s32.totalorder %s24, 0
      %p133 = por %p131, %p132
      %p134 = scmp.ne.s32.totalorder %s126, %s128
      %p135 = scmp.eq.s32.totalorder %s29, 1
      %p136 = por %p134, %p135
      %p137 = scmp.ne.s32.totalorder %s128, %s129
      %p138 = scmp.eq.s32.totalorder %s29, 0
      %p139 = por %p137, %p138
      %p140 = scmp.ne.s32.totalorder %s128, %s129
      %p141 = scmp.eq.s32.totalorder %s30, 1
      %p142 = por %p140, %p141
      %p144 = scmp.ne.s32.totalorder %s129, %s143
      %p145 = scmp.eq.s32.totalorder %s30, 0
      %p146 = por %p144, %p145
      %s148 = sadd.s32 %s147, 1
      %p151 = scmp.eq.s32.totalorder %s24, 1
      %p152 = scmp.ne.s32.totalorder %s147, %s149
      %p153 = scmp.eq.s32.totalorder %s24, 0
      %p154 = por %p152, %p153
      %p155 = scmp.ne.s32.totalorder %s147, %s149
      %p156 = scmp.eq.s32.totalorder %s29, 1
      %p157 = por %p155, %p156
      %p158 = scmp.ne.s32.totalorder %s149, %s150
      %p159 = scmp.eq.s32.totalorder %s29, 0
      %p160 = por %p158, %p159
      %p161 = scmp.ne.s32.totalorder %s149, %s150
      %p162 = scmp.eq.s32.totalorder %s30, 1
      %p163 = por %p161, %p162
      %p165 = scmp.ne.s32.totalorder %s150, %s164
      %p166 = scmp.eq.s32.totalorder %s30, 0
      %p167 = por %p165, %p166
      %s169 = sadd.s32 %s168, 1
      %p172 = scmp.eq.s32.totalorder %s24, 1
      %p173 = scmp.ne.s32.totalorder %s168, %s170
      %p174 = scmp.eq.s32.totalorder %s24, 0
      %p175 = por %p173, %p174
      %p176 = scmp.ne.s32.totalorder %s168, %s170
      %p177 = scmp.eq.s32.totalorder %s29, 1
      %p178 = por %p176, %p177
      %p179 = scmp.ne.s32.totalorder %s170, %s171
      %p180 = scmp.eq.s32.totalorder %s29, 0
      %p181 = por %p179, %p180
      %p182 = scmp.ne.s32.totalorder %s170, %s171
      %p183 = scmp.eq.s32.totalorder %s30, 1
      %p184 = por %p182, %p183
      %p186 = scmp.ne.s32.totalorder %s171, %s185
      %p187 = scmp.eq.s32.totalorder %s30, 0
      %p188 = por %p186, %p187
      %s190 = sadd.s32 %s189, 1
      %p193 = scmp.eq.s32.totalorder %s24, 1
      %p194 = scmp.ne.s32.totalorder %s189, %s191
      %p195 = scmp.eq.s32.totalorder %s24, 0
      %p196 = por %p194, %p195
      %p197 = scmp.ne.s32.totalorder %s189, %s191
      %p198 = scmp.eq.s32.totalorder %s29, 1
      %p199 = por %p197, %p198
      %p200 = scmp.ne.s32.totalorder %s191, %s192
      %p201 = scmp.eq.s32.totalorder %s29, 0
      %p202 = por %p200, %p201
      %p203 = scmp.ne.s32.totalorder %s191, %s192
      %p204 = scmp.eq.s32.totalorder %s30, 1
      %p205 = por %p203, %p204
      %p207 = scmp.ne.s32.totalorder %s192, %s206
      %p208 = scmp.eq.s32.totalorder %s30, 0
      %p209 = por %p207, %p208
      %s211 = sadd.s32 %s210, 1
      %p214 = scmp.eq.s32.totalorder %s24, 1
      %p215 = scmp.ne.s32.totalorder %s210, %s212
      %p216 = scmp.eq.s32.totalorder %s24, 0
      %p217 = por %p215, %p216
      %p218 = scmp.ne.s32.totalorder %s210, %s212
      %p219 = scmp.eq.s32.totalorder %s29, 1
      %p220 = por %p218, %p219
      %p221 = scmp.ne.s32.totalorder %s212, %s213
      %p222 = scmp.eq.s32.totalorder %s29, 0
      %p223 = por %p221, %p222
      %p224 = scmp.ne.s32.totalorder %s212, %s213
      %p225 = scmp.eq.s32.totalorder %s30, 1
      %p226 = por %p224, %p225
      %p228 = scmp.ne.s32.totalorder %s213, %s227
      %p229 = scmp.eq.s32.totalorder %s30, 0
      %p230 = por %p228, %p229
      %s232 = sadd.s32 %s231, 1
      %p235 = scmp.eq.s32.totalorder %s24, 1
      %p236 = scmp.ne.s32.totalorder %s231, %s233
      %p237 = scmp.eq.s32.totalorder %s24, 0
      %p238 = por %p236, %p237
      %p239 = scmp.ne.s32.totalorder %s231, %s233
      %p240 = scmp.eq.s32.totalorder %s29, 1
      %p241 = por %p239, %p240
      %p242 = scmp.ne.s32.totalorder %s233, %s234
      %p243 = scmp.eq.s32.totalorder %s29, 0
      %p244 = por %p242, %p243
      %p245 = scmp.ne.s32.totalorder %s233, %s234
      %p246 = scmp.eq.s32.totalorder %s30, 1
      %p247 = por %p245, %p246
      %p249 = scmp.ne.s32.totalorder %s234, %s248
      %p250 = scmp.eq.s32.totalorder %s30, 0
      %p251 = por %p249, %p250
      %s253 = sadd.s32 %s252, 1
      %p256 = scmp.eq.s32.totalorder %s24, 1
      %p257 = scmp.ne.s32.totalorder %s252, %s254
      %p258 = scmp.eq.s32.totalorder %s24, 0
      %p259 = por %p257, %p258
      %p260 = scmp.ne.s32.totalorder %s252, %s254
      %p261 = scmp.eq.s32.totalorder %s29, 1
      %p262 = por %p260, %p261
      %p263 = scmp.ne.s32.totalorder %s254, %s255
      %p264 = scmp.eq.s32.totalorder %s29, 0
      %p265 = por %p263, %p264
      %p266 = scmp.ne.s32.totalorder %s254, %s255
      %p267 = scmp.eq.s32.totalorder %s30, 1
      %p268 = por %p266, %p267
      %p270 = scmp.ne.s32.totalorder %s255, %s269
      %p271 = scmp.eq.s32.totalorder %s30, 0
      %p272 = por %p270, %p271
      %s274 = sadd.s32 %s273, 1
      %p277 = scmp.eq.s32.totalorder %s24, 1
      %p278 = scmp.ne.s32.totalorder %s273, %s275
      %p279 = scmp.eq.s32.totalorder %s24, 0
      %p280 = por %p278, %p279
      %p281 = scmp.ne.s32.totalorder %s273, %s275
      %p282 = scmp.eq.s32.totalorder %s29, 1
      %p283 = por %p281, %p282
      %p284 = scmp.ne.s32.totalorder %s275, %s276
      %p285 = scmp.eq.s32.totalorder %s29, 0
      %p286 = por %p284, %p285
      %p287 = scmp.ne.s32.totalorder %s275, %s276
      %p288 = scmp.eq.s32.totalorder %s30, 1
      %p289 = por %p287, %p288
      %p291 = scmp.ne.s32.totalorder %s276, %s290
      %p292 = scmp.eq.s32.totalorder %s30, 0
      %p293 = por %p291, %p292
      %s295 = sadd.s32 %s294, 1
      %p298 = scmp.eq.s32.totalorder %s24, 1
      %p299 = scmp.ne.s32.totalorder %s294, %s296
      %p300 = scmp.eq.s32.totalorder %s24, 0
      %p301 = por %p299, %p300
      %p302 = scmp.ne.s32.totalorder %s294, %s296
      %p303 = scmp.eq.s32.totalorder %s29, 1
      %p304 = por %p302, %p303
      %p305 = scmp.ne.s32.totalorder %s296, %s297
      %p306 = scmp.eq.s32.totalorder %s29, 0
      %p307 = por %p305, %p306
      %p308 = scmp.ne.s32.totalorder %s296, %s297
      %p309 = scmp.eq.s32.totalorder %s30, 1
      %p310 = por %p308, %p309
      %p312 = scmp.ne.s32.totalorder %s297, %s311
      %p313 = scmp.eq.s32.totalorder %s30, 0
      %p314 = por %p312, %p313
      %s316 = sadd.s32 %s315, 1
      %p319 = scmp.eq.s32.totalorder %s24, 1
      %p320 = scmp.ne.s32.totalorder %s315, %s317
      %p321 = scmp.eq.s32.totalorder %s24, 0
      %p322 = por %p320, %p321
      %p323 = scmp.ne.s32.totalorder %s315, %s317
      %p324 = scmp.eq.s32.totalorder %s29, 1
      %p325 = por %p323, %p324
      %p326 = scmp.ne.s32.totalorder %s317, %s318
      %p327 = scmp.eq.s32.totalorder %s29, 0
      %p328 = por %p326, %p327
      %p329 = scmp.ne.s32.totalorder %s317, %s318
      %p330 = scmp.eq.s32.totalorder %s30, 1
      %p331 = por %p329, %p330
      %p333 = scmp.ne.s32.totalorder %s318, %s332
      %p334 = scmp.eq.s32.totalorder %s30, 0
      %p335 = por %p333, %p334
      %s337 = sadd.s32 %s336, 1
      %p340 = scmp.eq.s32.totalorder %s24, 1
      %p341 = scmp.ne.s32.totalorder %s336, %s338
      %p342 = scmp.eq.s32.totalorder %s24, 0
      %p343 = por %p341, %p342
      %p344 = scmp.ne.s32.totalorder %s336, %s338
      %p345 = scmp.eq.s32.totalorder %s29, 1
      %p346 = por %p344, %p345
      %p347 = scmp.ne.s32.totalorder %s338, %s339
      %p348 = scmp.eq.s32.totalorder %s29, 0
      %p349 = por %p347, %p348
      %p350 = scmp.ne.s32.totalorder %s338, %s339
      %p351 = scmp.eq.s32.totalorder %s30, 1
      %p352 = por %p350, %p351
      %p354 = scmp.ne.s32.totalorder %s339, %s353
      %p355 = scmp.eq.s32.totalorder %s30, 0
      %p356 = por %p354, %p355
      %s357 = ssub.s32 %s24, %s31
      %p358 = scmp.eq.s32.totalorder %s357, 0
      %s360 = sadd.s32 %s359, 1
      %s361 = scalar_select %p358, %s359, %s360
      %p364 = pneg %p358
      %p365 = scmp.eq.s32.totalorder %s24, 1
      %p366 = por %p364, %p365
      %p367 = scmp.ne.s32.totalorder %s359, %s362
      %p368 = scmp.eq.s32.totalorder %s24, 0
      %p369 = por %p367, %p368
      %p370 = scmp.ne.s32.totalorder %s359, %s362
      %p371 = scmp.eq.s32.totalorder %s29, 1
      %p372 = por %p370, %p371
      %p373 = scmp.ne.s32.totalorder %s362, %s363
      %p374 = scmp.eq.s32.totalorder %s29, 0
      %p375 = por %p373, %p374
      %p376 = scmp.ne.s32.totalorder %s362, %s363
      %p377 = scmp.eq.s32.totalorder %s30, 1
      %p378 = por %p376, %p377
      %p380 = scmp.ne.s32.totalorder %s363, %s379
      %p381 = scmp.eq.s32.totalorder %s30, 0
      %p382 = por %p380, %p381
      %p383 = scmp.le.s32.totalorder 1, %s24
      %p384 = scmp.lt.s32.totalorder %s24, 3
      %p385 = pnand %p383, %p384
      %p386 = pneg %p385
      // Predicated region
      $region9: #{tpu_custom_call.1} parent=5 // pred_check
        _
      $region10: #{tpu_custom_call.1} parent=5 // pred_check_branch
        %388 = sbr.rel (%p385) target = $region12
      $region11: #{tpu_custom_call.1} parent=5 // pred_region
        %s389 = ssub.s32 %s24, 1
        // Predicated region
        $region13: #{tpu_custom_call.1} parent=11 // pred_check
          %p390 = pneg %p97
        $region14: #{tpu_custom_call.1} parent=11 // pred_check_branch
          %392 = sbr.rel (%p390) target = $region16
        $region15: #{tpu_custom_call.1} parent=11 // pred_region
          _
        $region16: #{tpu_custom_call.1} parent=11 // pred_fallthru
          _
        // Predicated region
        $region17: #{tpu_custom_call.1} parent=11 // pred_check
          %p393 = pneg %p118
        $region18: #{tpu_custom_call.1} parent=11 // pred_check_branch
          %395 = sbr.rel (%p393) target = $region20
        $region19: #{tpu_custom_call.1} parent=11 // pred_region
          _
        $region20: #{tpu_custom_call.1} parent=11 // pred_fallthru
          _
        // Predicated region
        $region21: #{tpu_custom_call.1} parent=11 // pred_check
          %p396 = pneg %p139
        $region22: #{tpu_custom_call.1} parent=11 // pred_check_branch
          %398 = sbr.rel (%p396) target = $region24
        $region23: #{tpu_custom_call.1} parent=11 // pred_region
          _
        $region24: #{tpu_custom_call.1} parent=11 // pred_fallthru
          _
        // Predicated region
        $region25: #{tpu_custom_call.1} parent=11 // pred_check
          %p399 = pneg %p160
        $region26: #{tpu_custom_call.1} parent=11 // pred_check_branch
          %401 = sbr.rel (%p399) target = $region28
        $region27: #{tpu_custom_call.1} parent=11 // pred_region
          _
        $region28: #{tpu_custom_call.1} parent=11 // pred_fallthru
          _
        // Predicated region
        $region29: #{tpu_custom_call.1} parent=11 // pred_check
          %p402 = pneg %p181
        $region30: #{tpu_custom_call.1} parent=11 // pred_check_branch
          %404 = sbr.rel (%p402) target = $region32
        $region31: #{tpu_custom_call.1} parent=11 // pred_region
          _
        $region32: #{tpu_custom_call.1} parent=11 // pred_fallthru
          _
        // Predicated region
        $region33: #{tpu_custom_call.1} parent=11 // pred_check
          %p405 = pneg %p202
        $region34: #{tpu_custom_call.1} parent=11 // pred_check_branch
          %407 = sbr.rel (%p405) target = $region36
        $region35: #{tpu_custom_call.1} parent=11 // pred_region
          _
        $region36: #{tpu_custom_call.1} parent=11 // pred_fallthru
          _
        // Predicated region
        $region37: #{tpu_custom_call.1} parent=11 // pred_check
          %p408 = pneg %p223
        $region38: #{tpu_custom_call.1} parent=11 // pred_check_branch
          %410 = sbr.rel (%p408) target = $region40
        $region39: #{tpu_custom_call.1} parent=11 // pred_region
          _
        $region40: #{tpu_custom_call.1} parent=11 // pred_fallthru
          _
        // Predicated region
        $region41: #{tpu_custom_call.1} parent=11 // pred_check
          %p411 = pneg %p244
        $region42: #{tpu_custom_call.1} parent=11 // pred_check_branch
          %413 = sbr.rel (%p411) target = $region44
        $region43: #{tpu_custom_call.1} parent=11 // pred_region
          _
        $region44: #{tpu_custom_call.1} parent=11 // pred_fallthru
          _
        // Predicated region
        $region45: #{tpu_custom_call.1} parent=11 // pred_check
          %p414 = pneg %p265
        $region46: #{tpu_custom_call.1} parent=11 // pred_check_branch
          %416 = sbr.rel (%p414) target = $region48
        $region47: #{tpu_custom_call.1} parent=11 // pred_region
          _
        $region48: #{tpu_custom_call.1} parent=11 // pred_fallthru
          _
        // Predicated region
        $region49: #{tpu_custom_call.1} parent=11 // pred_check
          %p417 = pneg %p286
        $region50: #{tpu_custom_call.1} parent=11 // pred_check_branch
          %419 = sbr.rel (%p417) target = $region52
        $region51: #{tpu_custom_call.1} parent=11 // pred_region
          _
        $region52: #{tpu_custom_call.1} parent=11 // pred_fallthru
          _
        // Predicated region
        $region53: #{tpu_custom_call.1} parent=11 // pred_check
          %p420 = pneg %p307
        $region54: #{tpu_custom_call.1} parent=11 // pred_check_branch
          %422 = sbr.rel (%p420) target = $region56
        $region55: #{tpu_custom_call.1} parent=11 // pred_region
          _
        $region56: #{tpu_custom_call.1} parent=11 // pred_fallthru
          _
        // Predicated region
        $region57: #{tpu_custom_call.1} parent=11 // pred_check
          %p423 = pneg %p328
        $region58: #{tpu_custom_call.1} parent=11 // pred_check_branch
          %425 = sbr.rel (%p423) target = $region60
        $region59: #{tpu_custom_call.1} parent=11 // pred_region
          _
        $region60: #{tpu_custom_call.1} parent=11 // pred_fallthru
          _
        // Predicated region
        $region61: #{tpu_custom_call.1} parent=11 // pred_check
          %p426 = pneg %p349
        $region62: #{tpu_custom_call.1} parent=11 // pred_check_branch
          %428 = sbr.rel (%p426) target = $region64
        $region63: #{tpu_custom_call.1} parent=11 // pred_region
          _
        $region64: #{tpu_custom_call.1} parent=11 // pred_fallthru
          _
      $region12: #{tpu_custom_call.1} parent=5 // pred_fallthru
        _
      %p429 = scmp.lt.s32.totalorder %s24, 2
      // Predicated region
      $region65: #{tpu_custom_call.1} parent=5 // pred_check
        %p430 = pneg %p429
      $region66: #{tpu_custom_call.1} parent=5 // pred_check_branch
        %432 = sbr.rel (%p430) target = $region68
      $region67: #{tpu_custom_call.1} parent=5 // pred_region
        // Predicated region
        $region69: #{tpu_custom_call.1} parent=67 // pred_check
          %p433 = pneg %p44
        $region70: #{tpu_custom_call.1} parent=67 // pred_check_branch
          %435 = sbr.rel (%p433) target = $region72
        $region71: #{tpu_custom_call.1} parent=67 // pred_region
          %p436 = scmp.lt.s32.totalorder %s24, 1
          %s437 = scalar_select %p436, %s24, 1
          %s438 = smul.addr %s437, 2
          %s439 = smul.addr %s438, 8
          %s440 = scalar_lea.vmem %s0, %s439
        $region72: #{tpu_custom_call.1} parent=67 // pred_fallthru
          _
        // Predicated region
        $region73: #{tpu_custom_call.1} parent=67 // pred_check
          %p441 = pneg %p70
        $region74: #{tpu_custom_call.1} parent=67 // pred_check_branch
          %443 = sbr.rel (%p441) target = $region76
        $region75: #{tpu_custom_call.1} parent=67 // pred_region
          %p444 = scmp.lt.s32.totalorder %s24, 1
          %s445 = scalar_select %p444, %s24, 1
          %s446 = smul.addr %s445, 2
          %s447 = smul.addr %s446, 8
          %s448 = scalar_lea.vmem %s1, %s447
        $region76: #{tpu_custom_call.1} parent=67 // pred_fallthru
          _
      $region68: #{tpu_custom_call.1} parent=5 // pred_fallthru
        _
      %p449 = scmp.le.s32.totalorder 1, %s24
      %p450 = scmp.lt.s32.totalorder %s24, 3
      %p451 = pnand %p449, %p450
      %p452 = pneg %p451
      // Predicated region
      $region77: #{tpu_custom_call.1} parent=5 // pred_check
        _
      $region78: #{tpu_custom_call.1} parent=5 // pred_check_branch
        %454 = sbr.rel (%p451) target = $region80
      $region79: #{tpu_custom_call.1} parent=5 // pred_region
        %s455 = ssub.s32 %s24, 1
        %p456 = scmp.lt.s32.totalorder %s29, 1
        %s457 = scalar_select %p456, %s29, 1
        %s458 = smul.addr %s457, 2
        %s459 = smul.addr %s458, 8
        %s460 = scalar_lea.vmem %s0, %s459
        %p461 = pneg %p50
        %p462 = pneg %p47
        %p463 = scmp.lt.s32.totalorder %s29, 1
        %s464 = scalar_select %p463, %s29, 1
        %s465 = smul.addr %s464, 2
        %s466 = smul.addr %s465, 8
        %s467 = scalar_lea.vmem %s1, %s466
        %p468 = pneg %p76
        %p469 = pneg %p73
        %p470 = pneg %p97
        %p471 = pneg %p94
        %p472 = pneg %p118
        %p473 = pneg %p115
        %p474 = pneg %p139
        %p475 = pneg %p136
        %p476 = pneg %p160
        %p477 = pneg %p157
        %p478 = pneg %p181
        %p479 = pneg %p178
        %p480 = pneg %p202
        %p481 = pneg %p199
        %p482 = pneg %p223
        %p483 = pneg %p220
        %p484 = pneg %p244
        %p485 = pneg %p241
        %p486 = pneg %p265
        %p487 = pneg %p262
        %p488 = pneg %p286
        %p489 = pneg %p283
        %p490 = pneg %p307
        %p491 = pneg %p304
        %p492 = pneg %p328
        %p493 = pneg %p325
        %p494 = pneg %p349
        %p495 = pneg %p346
        %p496 = pneg %p375
        %p497 = pneg %p372
        %s498 = sand.u32 %s362, 1
        %s499 = scalar_lea.sflag [#allocation3], %s498
        %s500 = sand.u32 %s362, 1
        %s501 = smul.addr %s500, 32
        %s502 = scalar_lea.vmem [#allocation2], %s501
        %p503 = scmp.lt.s32.totalorder %s29, 1
        %s504 = scalar_select %p503, %s29, 1
        %s505 = smul.addr %s504, 2
        %s506 = smul.addr %s505, 8
        %s507 = scalar_lea.vmem %s0, %s506
        %p508 = scmp.lt.s32.totalorder %s29, 1
        %s509 = scalar_select %p508, %s29, 1
        %s510 = smul.addr %s509, 2
        %s511 = smul.addr %s510, 8
        %s512 = scalar_lea.vmem %s1, %s511
        %v514 = vld [vmem:[%s507] sm:$0xff]
        %v515 = vld [vmem:[%s507 + $0x8] sm:$0xff]
        %v516 = vld [vmem:[%s2] sm:$0xff]
        %v517 = vld [vmem:[%s3] sm:$0xff]
        %v518 = vld [vmem:[%s4] sm:$0xff]
        %v519 = vld [vmem:[%s5] sm:$0xff]
        %v520 = vadd.f32 %v514, %v515
        %521 = vadd.xlane.f32.xlu0 %v520
        %v522 = vpop.xlane.xlu0 %521
        %v523 = vmul.f32 %v514, %v514
        %v524 = vmul.f32 %v515, %v515
        %v525 = vadd.f32 %v523, %v524
        %526 = vadd.xlane.f32.xlu0 %v525
        %v527 = vpop.xlane.xlu0 %526
        %vm528 = vcmask 7168
        %v529 = vsel %vm528, %v522, %v527
        %vm530 = vcmask 64512
        %v532 = vsel %vm530, %v517, 0
        %534 = vmatprep.subr.mxu0 0.0
        %535 = vmatpush1.msra.mxu0 0.0
        %536 = vmatprep.subr.mxu0 0.0
        %537 = vmatpush1.msra.mxu0 0.0
        %538 = vmatprep.subr.mxu0 0.0
        %539 = vmatpush1.msra.mxu0 0.0
        %540 = vmatprep.subr.mxu0 0.0
        %541 = vmatpush1.msra.mxu0 0.0
        %542 = vmatprep.subr.mxu0 0.0
        %543 = vmatpush1.msra.mxu0 0.0
        %544 = vmatprep.subr.mxu0 0.0
        %545 = vmatpush1.msra.mxu0 0.0
        %546 = vmatprep.subr.mxu0 0.0
        %547 = vmatpush1.msra.mxu0 0.0
        %548 = vmatprep.subr.mxu0 0.0
        %549 = vmatpush1.msra.mxu0 0.0
        %550 = vmatprep.subr.mxu0 0.0
        %551 = vmatpush1.msra.mxu0 0.0
        %552 = vmatprep.subr.mxu0 0.0
        %553 = vmatpush1.msra.mxu0 0.0
        %554 = vmatprep.subr.mxu0 0.0
        %555 = vmatpush1.msra.mxu0 0.0
        %556 = vmatprep.subr.mxu0 0.0
        %557 = vmatpush1.msra.mxu0 0.0
        %558 = vmatprep.subr.mxu0 0.0
        %559 = vmatpush1.msra.mxu0 0.0
        %560 = vmatprep.subr.mxu0 0.0
        %561 = vmatpush1.msra.mxu0 0.0
        %562 = vmatprep.subr.mxu0 0.0
        %563 = vmatpush1.msra.mxu0 0.0
        %564 = vmatprep.subr.mxu0 0.0
        %v565 = vand.u32 %v529, 4294901760
        %566 = vmatpush1.msra.mxu0 %v565
        %567 = vmatprep.subr.mxu0 0.0
        %568 = vmatpush2.msra.mxu0 0.0
        %569 = vmatprep.subr.mxu0 0.0
        %570 = vmatpush2.msra.mxu0 0.0
        %571 = vmatprep.subr.mxu0 0.0
        %572 = vmatpush2.msra.mxu0 0.0
        %573 = vmatprep.subr.mxu0 0.0
        %574 = vmatpush2.msra.mxu0 0.0
        %575 = vmatprep.subr.mxu0 0.0
        %576 = vmatpush2.msra.mxu0 0.0
        %577 = vmatprep.subr.mxu0 0.0
        %578 = vmatpush2.msra.mxu0 0.0
        %579 = vmatprep.subr.mxu0 0.0
        %580 = vmatpush2.msra.mxu0 0.0
        %581 = vmatprep.subr.mxu0 0.0
        %582 = vmatpush2.msra.mxu0 0.0
        %583 = vmatprep.subr.mxu0 0.0
        %584 = vmatpush2.msra.mxu0 0.0
        %585 = vmatprep.subr.mxu0 0.0
        %586 = vmatpush2.msra.mxu0 0.0
        %587 = vmatprep.subr.mxu0 0.0
        %588 = vmatpush2.msra.mxu0 0.0
        %589 = vmatprep.subr.mxu0 0.0
        %590 = vmatpush2.msra.mxu0 0.0
        %591 = vmatprep.subr.mxu0 0.0
        %592 = vmatpush2.msra.mxu0 0.0
        %593 = vmatprep.subr.mxu0 0.0
        %594 = vmatpush2.msra.mxu0 0.0
        %595 = vmatprep.subr.mxu0 0.0
        %596 = vmatpush2.msra.mxu0 0.0
        %597 = vmatprep.subr.mxu0 0.0
        %598 = vmatpush2.msra.mxu0 0.0
        %599 = vmatprep.mubr.f32.mxu0 0.0
        %v600 = vand.u32 %v532, 4294901760
        %v601 = vsub.f32 %v532, %v600
        %v602 = vand.u32 %v601, 4294901760
        %v603 = vsub.f32 %v601, %v602
        %v604 = vand.u32 %v603, 4294901760
        %605 = vmatmul.mubr.f32.gmra.mxu0 %v604
        %v606 = vpop.f32.mrf.mxu0
        %v607 = vadd.f32 0.0, %v606
        %v608 = vpop.f32.mrf.mxu0
        %609 = vdwg.mxu0
        %610 = vmatprep.subr.mxu0 0.0
        %611 = vmatpush1.msra.mxu0 0.0
        %612 = vmatprep.subr.mxu0 0.0
        %613 = vmatpush1.msra.mxu0 0.0
        %614 = vmatprep.subr.mxu0 0.0
        %615 = vmatpush1.msra.mxu0 0.0
        %616 = vmatprep.subr.mxu0 0.0
        %617 = vmatpush1.msra.mxu0 0.0
        %618 = vmatprep.subr.mxu0 0.0
        %619 = vmatpush1.msra.mxu0 0.0
        %620 = vmatprep.subr.mxu0 0.0
        %621 = vmatpush1.msra.mxu0 0.0
        %622 = vmatprep.subr.mxu0 0.0
        %623 = vmatpush1.msra.mxu0 0.0
        %624 = vmatprep.subr.mxu0 0.0
        %625 = vmatpush1.msra.mxu0 0.0
        %626 = vmatprep.subr.mxu0 0.0
        %627 = vmatpush1.msra.mxu0 0.0
        %628 = vmatprep.subr.mxu0 0.0
        %629 = vmatpush1.msra.mxu0 0.0
        %630 = vmatprep.subr.mxu0 0.0
        %631 = vmatpush1.msra.mxu0 0.0
        %632 = vmatprep.subr.mxu0 0.0
        %633 = vmatpush1.msra.mxu0 0.0
        %634 = vmatprep.subr.mxu0 0.0
        %635 = vmatpush1.msra.mxu0 0.0
        %636 = vmatprep.subr.mxu0 0.0
        %637 = vmatpush1.msra.mxu0 0.0
        %638 = vmatprep.subr.mxu0 0.0
        %639 = vmatpush1.msra.mxu0 0.0
        %640 = vmatprep.subr.mxu0 0.0
        %v641 = vand.u32 %v529, 4294901760
        %v642 = vsub.f32 %v529, %v641
        %v643 = vand.u32 %v642, 4294901760
        %v644 = vsub.f32 %v642, %v643
        %v645 = vand.u32 %v644, 4294901760
        %646 = vmatpush1.msra.mxu0 %v645
        %647 = vmatprep.subr.mxu0 0.0
        %648 = vmatpush2.msra.mxu0 0.0
        %649 = vmatprep.subr.mxu0 0.0
        %650 = vmatpush2.msra.mxu0 0.0
        %651 = vmatprep.subr.mxu0 0.0
        %652 = vmatpush2.msra.mxu0 0.0
        %653 = vmatprep.subr.mxu0 0.0
        %654 = vmatpush2.msra.mxu0 0.0
        %655 = vmatprep.subr.mxu0 0.0
        %656 = vmatpush2.msra.mxu0 0.0
        %657 = vmatprep.subr.mxu0 0.0
        %658 = vmatpush2.msra.mxu0 0.0
        %659 = vmatprep.subr.mxu0 0.0
        %660 = vmatpush2.msra.mxu0 0.0
        %661 = vmatprep.subr.mxu0 0.0
        %662 = vmatpush2.msra.mxu0 0.0
        %663 = vmatprep.subr.mxu0 0.0
        %664 = vmatpush2.msra.mxu0 0.0
        %665 = vmatprep.subr.mxu0 0.0
        %666 = vmatpush2.msra.mxu0 0.0
        %667 = vmatprep.subr.mxu0 0.0
        %668 = vmatpush2.msra.mxu0 0.0
        %669 = vmatprep.subr.mxu0 0.0
        %670 = vmatpush2.msra.mxu0 0.0
        %671 = vmatprep.subr.mxu0 0.0
        %672 = vmatpush2.msra.mxu0 0.0
        %673 = vmatprep.subr.mxu0 0.0
        %674 = vmatpush2.msra.mxu0 0.0
        %675 = vmatprep.subr.mxu0 0.0
        %676 = vmatpush2.msra.mxu0 0.0
        %677 = vmatprep.subr.mxu0 0.0
        %678 = vmatpush2.msra.mxu0 0.0
        %679 = vmatprep.mubr.f32.mxu0 0.0
        %v680 = vand.u32 %v532, 4294901760
        %681 = vmatmul.mubr.f32.gmra.mxu0 %v680
        %v682 = vpop.f32.mrf.mxu0
        %v683 = vadd.f32 %v607, %v682
        %v684 = vpop.f32.mrf.mxu0
        %685 = vdwg.mxu0
        %686 = vmatprep.subr.mxu0 0.0
        %687 = vmatpush1.msra.mxu0 0.0
        %688 = vmatprep.subr.mxu0 0.0
        %689 = vmatpush1.msra.mxu0 0.0
        %690 = vmatprep.subr.mxu0 0.0
        %691 = vmatpush1.msra.mxu0 0.0
        %692 = vmatprep.subr.mxu0 0.0
        %693 = vmatpush1.msra.mxu0 0.0
        %694 = vmatprep.subr.mxu0 0.0
        %695 = vmatpush1.msra.mxu0 0.0
        %696 = vmatprep.subr.mxu0 0.0
        %697 = vmatpush1.msra.mxu0 0.0
        %698 = vmatprep.subr.mxu0 0.0
        %699 = vmatpush1.msra.mxu0 0.0
        %700 = vmatprep.subr.mxu0 0.0
        %701 = vmatpush1.msra.mxu0 0.0
        %702 = vmatprep.subr.mxu0 0.0
        %703 = vmatpush1.msra.mxu0 0.0
        %704 = vmatprep.subr.mxu0 0.0
        %705 = vmatpush1.msra.mxu0 0.0
        %706 = vmatprep.subr.mxu0 0.0
        %707 = vmatpush1.msra.mxu0 0.0
        %708 = vmatprep.subr.mxu0 0.0
        %709 = vmatpush1.msra.mxu0 0.0
        %710 = vmatprep.subr.mxu0 0.0
        %711 = vmatpush1.msra.mxu0 0.0
        %712 = vmatprep.subr.mxu0 0.0
        %713 = vmatpush1.msra.mxu0 0.0
        %714 = vmatprep.subr.mxu0 0.0
        %715 = vmatpush1.msra.mxu0 0.0
        %716 = vmatprep.subr.mxu0 0.0
        %v717 = vand.u32 %v529, 4294901760
        %v718 = vsub.f32 %v529, %v717
        %719 = vmatpush1.msra.mxu0 %v718
        %720 = vmatprep.subr.mxu0 0.0
        %721 = vmatpush2.msra.mxu0 0.0
        %722 = vmatprep.subr.mxu0 0.0
        %723 = vmatpush2.msra.mxu0 0.0
        %724 = vmatprep.subr.mxu0 0.0
        %725 = vmatpush2.msra.mxu0 0.0
        %726 = vmatprep.subr.mxu0 0.0
        %727 = vmatpush2.msra.mxu0 0.0
        %728 = vmatprep.subr.mxu0 0.0
        %729 = vmatpush2.msra.mxu0 0.0
        %730 = vmatprep.subr.mxu0 0.0
        %731 = vmatpush2.msra.mxu0 0.0
        %732 = vmatprep.subr.mxu0 0.0
        %733 = vmatpush2.msra.mxu0 0.0
        %734 = vmatprep.subr.mxu0 0.0
        %735 = vmatpush2.msra.mxu0 0.0
        %736 = vmatprep.subr.mxu0 0.0
        %737 = vmatpush2.msra.mxu0 0.0
        %738 = vmatprep.subr.mxu0 0.0
        %739 = vmatpush2.msra.mxu0 0.0
        %740 = vmatprep.subr.mxu0 0.0
        %741 = vmatpush2.msra.mxu0 0.0
        %742 = vmatprep.subr.mxu0 0.0
        %743 = vmatpush2.msra.mxu0 0.0
        %744 = vmatprep.subr.mxu0 0.0
        %745 = vmatpush2.msra.mxu0 0.0
        %746 = vmatprep.subr.mxu0 0.0
        %747 = vmatpush2.msra.mxu0 0.0
        %748 = vmatprep.subr.mxu0 0.0
        %749 = vmatpush2.msra.mxu0 0.0
        %750 = vmatprep.subr.mxu0 0.0
        %751 = vmatpush2.msra.mxu0 0.0
        %752 = vmatprep.mubr.f32.mxu0 0.0
        %v753 = vand.u32 %v532, 4294901760
        %v754 = vsub.f32 %v532, %v753
        %755 = vmatmul.mubr.f32.gmra.mxu0 %v754
        %v756 = vpop.f32.mrf.mxu0
        %v757 = vadd.f32 %v683, %v756
        %v758 = vpop.f32.mrf.mxu0
        %759 = vdwg.mxu0
        %760 = vmatprep.subr.mxu0 0.0
        %761 = vmatpush1.msra.mxu0 0.0
        %762 = vmatprep.subr.mxu0 0.0
        %763 = vmatpush1.msra.mxu0 0.0
        %764 = vmatprep.subr.mxu0 0.0
        %765 = vmatpush1.msra.mxu0 0.0
        %766 = vmatprep.subr.mxu0 0.0
        %767 = vmatpush1.msra.mxu0 0.0
        %768 = vmatprep.subr.mxu0 0.0
        %769 = vmatpush1.msra.mxu0 0.0
        %770 = vmatprep.subr.mxu0 0.0
        %771 = vmatpush1.msra.mxu0 0.0
        %772 = vmatprep.subr.mxu0 0.0
        %773 = vmatpush1.msra.mxu0 0.0
        %774 = vmatprep.subr.mxu0 0.0
        %775 = vmatpush1.msra.mxu0 0.0
        %776 = vmatprep.subr.mxu0 0.0
        %777 = vmatpush1.msra.mxu0 0.0
        %778 = vmatprep.subr.mxu0 0.0
        %779 = vmatpush1.msra.mxu0 0.0
        %780 = vmatprep.subr.mxu0 0.0
        %781 = vmatpush1.msra.mxu0 0.0
        %782 = vmatprep.subr.mxu0 0.0
        %783 = vmatpush1.msra.mxu0 0.0
        %784 = vmatprep.subr.mxu0 0.0
        %785 = vmatpush1.msra.mxu0 0.0
        %786 = vmatprep.subr.mxu0 0.0
        %787 = vmatpush1.msra.mxu0 0.0
        %788 = vmatprep.subr.mxu0 0.0
        %789 = vmatpush1.msra.mxu0 0.0
        %790 = vmatprep.subr.mxu0 0.0
        %v791 = vand.u32 %v529, 4294901760
        %792 = vmatpush1.msra.mxu0 %v791
        %793 = vmatprep.subr.mxu0 0.0
        %794 = vmatpush2.msra.mxu0 0.0
        %795 = vmatprep.subr.mxu0 0.0
        %796 = vmatpush2.msra.mxu0 0.0
        %797 = vmatprep.subr.mxu0 0.0
        %798 = vmatpush2.msra.mxu0 0.0
        %799 = vmatprep.subr.mxu0 0.0
        %800 = vmatpush2.msra.mxu0 0.0
        %801 = vmatprep.subr.mxu0 0.0
        %802 = vmatpush2.msra.mxu0 0.0
        %803 = vmatprep.subr.mxu0 0.0
        %804 = vmatpush2.msra.mxu0 0.0
        %805 = vmatprep.subr.mxu0 0.0
        %806 = vmatpush2.msra.mxu0 0.0
        %807 = vmatprep.subr.mxu0 0.0
        %808 = vmatpush2.msra.mxu0 0.0
        %809 = vmatprep.subr.mxu0 0.0
        %810 = vmatpush2.msra.mxu0 0.0
        %811 = vmatprep.subr.mxu0 0.0
        %812 = vmatpush2.msra.mxu0 0.0
        %813 = vmatprep.subr.mxu0 0.0
        %814 = vmatpush2.msra.mxu0 0.0
        %815 = vmatprep.subr.mxu0 0.0
        %816 = vmatpush2.msra.mxu0 0.0
        %817 = vmatprep.subr.mxu0 0.0
        %818 = vmatpush2.msra.mxu0 0.0
        %819 = vmatprep.subr.mxu0 0.0
        %820 = vmatpush2.msra.mxu0 0.0
        %821 = vmatprep.subr.mxu0 0.0
        %822 = vmatpush2.msra.mxu0 0.0
        %823 = vmatprep.subr.mxu0 0.0
        %824 = vmatpush2.msra.mxu0 0.0
        %825 = vmatprep.mubr.f32.mxu0 0.0
        %v826 = vand.u32 %v532, 4294901760
        %v827 = vsub.f32 %v532, %v826
        %v828 = vand.u32 %v827, 4294901760
        %829 = vmatmul.mubr.f32.gmra.mxu0 %v828
        %v830 = vpop.f32.mrf.mxu0
        %v831 = vadd.f32 %v757, %v830
        %v832 = vpop.f32.mrf.mxu0
        %833 = vdwg.mxu0
        %834 = vmatprep.subr.mxu0 0.0
        %835 = vmatpush1.msra.mxu0 0.0
        %836 = vmatprep.subr.mxu0 0.0
        %837 = vmatpush1.msra.mxu0 0.0
        %838 = vmatprep.subr.mxu0 0.0
        %839 = vmatpush1.msra.mxu0 0.0
        %840 = vmatprep.subr.mxu0 0.0
        %841 = vmatpush1.msra.mxu0 0.0
        %842 = vmatprep.subr.mxu0 0.0
        %843 = vmatpush1.msra.mxu0 0.0
        %844 = vmatprep.subr.mxu0 0.0
        %845 = vmatpush1.msra.mxu0 0.0
        %846 = vmatprep.subr.mxu0 0.0
        %847 = vmatpush1.msra.mxu0 0.0
        %848 = vmatprep.subr.mxu0 0.0
        %849 = vmatpush1.msra.mxu0 0.0
        %850 = vmatprep.subr.mxu0 0.0
        %851 = vmatpush1.msra.mxu0 0.0
        %852 = vmatprep.subr.mxu0 0.0
        %853 = vmatpush1.msra.mxu0 0.0
        %854 = vmatprep.subr.mxu0 0.0
        %855 = vmatpush1.msra.mxu0 0.0
        %856 = vmatprep.subr.mxu0 0.0
        %857 = vmatpush1.msra.mxu0 0.0
        %858 = vmatprep.subr.mxu0 0.0
        %859 = vmatpush1.msra.mxu0 0.0
        %860 = vmatprep.subr.mxu0 0.0
        %861 = vmatpush1.msra.mxu0 0.0
        %862 = vmatprep.subr.mxu0 0.0
        %863 = vmatpush1.msra.mxu0 0.0
        %864 = vmatprep.subr.mxu0 0.0
        %v865 = vand.u32 %v529, 4294901760
        %v866 = vsub.f32 %v529, %v865
        %v867 = vand.u32 %v866, 4294901760
        %868 = vmatpush1.msra.mxu0 %v867
        %869 = vmatprep.subr.mxu0 0.0
        %870 = vmatpush2.msra.mxu0 0.0
        %871 = vmatprep.subr.mxu0 0.0
        %872 = vmatpush2.msra.mxu0 0.0
        %873 = vmatprep.subr.mxu0 0.0
        %874 = vmatpush2.msra.mxu0 0.0
        %875 = vmatprep.subr.mxu0 0.0
        %876 = vmatpush2.msra.mxu0 0.0
        %877 = vmatprep.subr.mxu0 0.0
        %878 = vmatpush2.msra.mxu0 0.0
        %879 = vmatprep.subr.mxu0 0.0
        %880 = vmatpush2.msra.mxu0 0.0
        %881 = vmatprep.subr.mxu0 0.0
        %882 = vmatpush2.msra.mxu0 0.0
        %883 = vmatprep.subr.mxu0 0.0
        %884 = vmatpush2.msra.mxu0 0.0
        %885 = vmatprep.subr.mxu0 0.0
        %886 = vmatpush2.msra.mxu0 0.0
        %887 = vmatprep.subr.mxu0 0.0
        %888 = vmatpush2.msra.mxu0 0.0
        %889 = vmatprep.subr.mxu0 0.0
        %890 = vmatpush2.msra.mxu0 0.0
        %891 = vmatprep.subr.mxu0 0.0
        %892 = vmatpush2.msra.mxu0 0.0
        %893 = vmatprep.subr.mxu0 0.0
        %894 = vmatpush2.msra.mxu0 0.0
        %895 = vmatprep.subr.mxu0 0.0
        %896 = vmatpush2.msra.mxu0 0.0
        %897 = vmatprep.subr.mxu0 0.0
        %898 = vmatpush2.msra.mxu0 0.0
        %899 = vmatprep.subr.mxu0 0.0
        %900 = vmatpush2.msra.mxu0 0.0
        %901 = vmatprep.mubr.f32.mxu0 0.0
        %v902 = vand.u32 %v532, 4294901760
        %903 = vmatmul.mubr.f32.gmra.mxu0 %v902
        %v904 = vpop.f32.mrf.mxu0
        %v905 = vadd.f32 %v831, %v904
        %v906 = vpop.f32.mrf.mxu0
        %907 = vdwg.mxu0
        %908 = vmatprep.subr.mxu0 0.0
        %909 = vmatpush1.msra.mxu0 0.0
        %910 = vmatprep.subr.mxu0 0.0
        %911 = vmatpush1.msra.mxu0 0.0
        %912 = vmatprep.subr.mxu0 0.0
        %913 = vmatpush1.msra.mxu0 0.0
        %914 = vmatprep.subr.mxu0 0.0
        %915 = vmatpush1.msra.mxu0 0.0
        %916 = vmatprep.subr.mxu0 0.0
        %917 = vmatpush1.msra.mxu0 0.0
        %918 = vmatprep.subr.mxu0 0.0
        %919 = vmatpush1.msra.mxu0 0.0
        %920 = vmatprep.subr.mxu0 0.0
        %921 = vmatpush1.msra.mxu0 0.0
        %922 = vmatprep.subr.mxu0 0.0
        %923 = vmatpush1.msra.mxu0 0.0
        %924 = vmatprep.subr.mxu0 0.0
        %925 = vmatpush1.msra.mxu0 0.0
        %926 = vmatprep.subr.mxu0 0.0
        %927 = vmatpush1.msra.mxu0 0.0
        %928 = vmatprep.subr.mxu0 0.0
        %929 = vmatpush1.msra.mxu0 0.0
        %930 = vmatprep.subr.mxu0 0.0
        %931 = vmatpush1.msra.mxu0 0.0
        %932 = vmatprep.subr.mxu0 0.0
        %933 = vmatpush1.msra.mxu0 0.0
        %934 = vmatprep.subr.mxu0 0.0
        %935 = vmatpush1.msra.mxu0 0.0
        %936 = vmatprep.subr.mxu0 0.0
        %937 = vmatpush1.msra.mxu0 0.0
        %938 = vmatprep.subr.mxu0 0.0
        %v939 = vand.u32 %v529, 4294901760
        %940 = vmatpush1.msra.mxu0 %v939
        %941 = vmatprep.subr.mxu0 0.0
        %942 = vmatpush2.msra.mxu0 0.0
        %943 = vmatprep.subr.mxu0 0.0
        %944 = vmatpush2.msra.mxu0 0.0
        %945 = vmatprep.subr.mxu0 0.0
        %946 = vmatpush2.msra.mxu0 0.0
        %947 = vmatprep.subr.mxu0 0.0
        %948 = vmatpush2.msra.mxu0 0.0
        %949 = vmatprep.subr.mxu0 0.0
        %950 = vmatpush2.msra.mxu0 0.0
        %951 = vmatprep.subr.mxu0 0.0
        %952 = vmatpush2.msra.mxu0 0.0
        %953 = vmatprep.subr.mxu0 0.0
        %954 = vmatpush2.msra.mxu0 0.0
        %955 = vmatprep.subr.mxu0 0.0
        %956 = vmatpush2.msra.mxu0 0.0
        %957 = vmatprep.subr.mxu0 0.0
        %958 = vmatpush2.msra.mxu0 0.0
        %959 = vmatprep.subr.mxu0 0.0
        %960 = vmatpush2.msra.mxu0 0.0
        %961 = vmatprep.subr.mxu0 0.0
        %962 = vmatpush2.msra.mxu0 0.0
        %963 = vmatprep.subr.mxu0 0.0
        %964 = vmatpush2.msra.mxu0 0.0
        %965 = vmatprep.subr.mxu0 0.0
        %966 = vmatpush2.msra.mxu0 0.0
        %967 = vmatprep.subr.mxu0 0.0
        %968 = vmatpush2.msra.mxu0 0.0
        %969 = vmatprep.subr.mxu0 0.0
        %970 = vmatpush2.msra.mxu0 0.0
        %971 = vmatprep.subr.mxu0 0.0
        %972 = vmatpush2.msra.mxu0 0.0
        %973 = vmatprep.mubr.f32.mxu0 0.0
        %v974 = vand.u32 %v532, 4294901760
        %975 = vmatmul.mubr.f32.gmra.mxu0 %v974
        %v976 = vpop.f32.mrf.mxu0
        %v977 = vadd.f32 %v905, %v976
        %v978 = vpop.f32.mrf.mxu0
        %979 = vdwg.mxu0
        %v980 = vmul.f32 %v977, %v977
        %982 = vrot.lane.b32.xlu0 %v980, 1
        %v983 = vpop.permute.xlu0 %982
        %v985 = vsub.f32 %v977, %v983
        %v986 = vmax.f32 %v985, 0.0
        %988 = vset.pattern.permute.xlu0 0
        %989 = vperm.xlu0 %988, %v977
        %v990 = vpop.permute.xlu0 %989
        %v992 = vsub.f32 %v514, %v990
        %v993 = vsub.f32 %v515, %v990
        %v994 = vadd.f32 %v986, 1e-05
        %v995 = vrsqrt.pop %v994
        %997 = vset.pattern.permute.xlu0 1
        %998 = vperm.xlu0 %997, %v995
        %v999 = vpop.permute.xlu0 %998
        %v1001 = vmul.f32 %v992, %v999
        %v1002 = vmul.f32 %v993, %v999
        %1004 = vset.pattern.permute.xlu0 0
        %1005 = vperm.xlu0 %1004, %v518
        %v1006 = vpop.permute.xlu0 %1005
        %v1008 = vmul.f32 %v1001, %v1006
        %v1009 = vmul.f32 %v1002, %v1006
        %1011 = vset.pattern.permute.xlu0 0
        %1012 = vperm.xlu0 %1011, %v519
        %v1013 = vpop.permute.xlu0 %1012
        %v1015 = vadd.f32 %v1008, %v1013
        %v1016 = vadd.f32 %v1009, %v1013
        %v1017 = vxor.u32 %v1015, 2147483648
        %v1018 = vxor.u32 %v1016, 2147483648
        %v1019 = vmul.f32 %v1017, 1.442695
        %v1020 = vpow.pop %v1019
        %v1021 = vmul.f32 %v1018, 1.442695
        %v1022 = vpow.pop %v1021
        %v1023 = vadd.f32 %v1020, 1.0
        %v1024 = vadd.f32 %v1022, 1.0
        %v1025 = vrcp.pop %v1023
        %v1026 = vmul.f32 1.0, %v1025
        %v1027 = vrcp.pop %v1024
        %v1028 = vmul.f32 1.0, %v1027
        %v1029 = vmul.f32 %v1015, %v1026
        %v1030 = vmul.f32 %v1016, %v1028
        %v1031 = vld [vmem:[%s7] sm:$0xff]
        %v1032 = vld [vmem:[%s7 + $0x8] sm:$0xff]
        %1033 = vrot.lane.b32.xlu0 %v1029, 16
        %v1034 = vpop.permute.xlu0 %1033
        %1035 = vrot.lane.b32.xlu0 %v1030, 16
        %v1036 = vpop.permute.xlu0 %1035
        %v1037 = vlaneseq
        %v1038 = vand.u32 %v1037, 127
        %vm1039 = vcmp.lt.s32.totalorder %v1038, 16
        %v1040 = vsel %vm1039, %v1034, %v1036
        %v1041 = vsel %vm1039, %v1036, %v1034
        %v1043 = vlaneseq
        %v1044 = vshrl.u32 %v1043, 7
        %v1045 = vsub.s32 0, %v1044
        %v1046 = vrot.slane %v516, %v1045
        %v1047 = vlaneseq
        %v1048 = vshrl.u32 %v1047, 7
        %v1049 = vsub.s32 4, %v1048
        %v1050 = vrot.slane %v516, %v1049
        %v1053 = vlaneseq
        %v1054 = vshrl.u32 %v1053, 7
        %v1055 = vsub.s32 0, %v1054
        %v1056 = vrot.slane %v1046, %v1055
        %v1057 = vlaneseq
        %v1058 = vshrl.u32 %v1057, 7
        %v1059 = vsub.s32 0, %v1058
        %v1060 = vrot.slane %v1050, %v1059
        %v1061 = vmul.f32 %v1041, %v1056
        %v1062 = vmul.f32 %v1040, %v1060
        %1063 = vrot.lane.b32.xlu0 %v1061, 1
        %v1064 = vpop.permute.xlu0 %1063
        %1065 = vrot.lane.b32.xlu0 %v1062, 1
        %v1066 = vpop.permute.xlu0 %1065
        %vm1067 = vcmp.lt.s32.totalorder %v1038, 1
        %v1068 = vsel %vm1067, %v1064, %v1066
        %v1069 = vsel %vm1067, %v1066, %v1064
        %v1070 = vlaneseq
        %v1071 = vshrl.u32 %v1070, 7
        %v1072 = vsub.s32 2, %v1071
        %v1073 = vrot.slane %v516, %v1072
        %v1074 = vlaneseq
        %v1075 = vshrl.u32 %v1074, 7
        %v1076 = vsub.s32 6, %v1075
        %v1077 = vrot.slane %v516, %v1076
        %v1080 = vlaneseq
        %v1081 = vshrl.u32 %v1080, 7
        %v1082 = vsub.s32 2, %v1081
        %v1083 = vrot.slane %v1073, %v1082
        %v1084 = vlaneseq
        %v1085 = vshrl.u32 %v1084, 7
        %v1086 = vsub.s32 2, %v1085
        %v1087 = vrot.slane %v1077, %v1086
        %v1088 = vmul.f32 %v1069, %v1083
        %v1089 = vmul.f32 %v1068, %v1087
        %v1090 = vpack.c.bf16 %v1088, %v1088
        %v1091 = vpack.c.bf16 %v1089, %v1089
        %v1092 = vpack.c.bf16 %v1061, %v1061
        %v1093 = vpack.c.bf16 %v1062, %v1062
        %1094 = vrot.lane.b32.xlu0 %v1061, 127
        %v1095 = vpop.permute.xlu0 %1094
        %1096 = vrot.lane.b32.xlu0 %v1062, 127
        %v1097 = vpop.permute.xlu0 %1096
        %vm1098 = vcmp.lt.s32.totalorder %v1038, 127
        %v1099 = vsel %vm1098, %v1095, %v1097
        %v1100 = vsel %vm1098, %v1097, %v1095
        %v1101 = vlaneseq
        %v1102 = vshrl.u32 %v1101, 7
        %v1103 = vsub.s32 3, %v1102
        %v1104 = vrot.slane %v516, %v1103
        %v1105 = vlaneseq
        %v1106 = vshrl.u32 %v1105, 7
        %v1107 = vsub.s32 7, %v1106
        %v1108 = vrot.slane %v516, %v1107
        %v1111 = vlaneseq
        %v1112 = vshrl.u32 %v1111, 7
        %v1113 = vsub.s32 3, %v1112
        %v1114 = vrot.slane %v1104, %v1113
        %v1115 = vlaneseq
        %v1116 = vshrl.u32 %v1115, 7
        %v1117 = vsub.s32 3, %v1116
        %v1118 = vrot.slane %v1108, %v1117
        %v1119 = vmul.f32 %v1099, %v1114
        %v1120 = vmul.f32 %v1100, %v1118
        %v1121 = vpack.c.bf16 %v1119, %v1119
        %v1122 = vpack.c.bf16 %v1120, %v1120
        %v1125 = vrot.slane %v1092, 4
        %v1126 = vrot.slane %v1093, 4
        %vm1127 = vcmask 1043456
        %v1130 = vsel %vm1127, %v1090, %v1125
        %v1134 = vsel %vm1127, %v1091, %v1126
        %v1136 = vld [vmem:[%s6] sm:$0xf]
        %v1137 = vld [vmem:[%s6 + $0x4] sm:$0xf]
        %1138 = vrot.lane.b32.xlu0 %v1029, 1
        %v1139 = vpop.permute.xlu0 %1138
        %1140 = vrot.lane.b32.xlu0 %v1030, 1
        %v1141 = vpop.permute.xlu0 %1140
        %v1142 = vsel %vm1067, %v1139, %v1141
        %v1143 = vsel %vm1067, %v1141, %v1139
        %v1144 = vmul.f32 %v1143, %v1083
        %v1145 = vmul.f32 %v1142, %v1087
        %v1146 = vpack.c.bf16 %v1144, %v1144
        %v1147 = vpack.c.bf16 %v1145, %v1145
        %v1148 = vpack.c.bf16 %v1029, %v1029
        %v1149 = vpack.c.bf16 %v1030, %v1030
        %1150 = vrot.lane.b32.xlu0 %v1029, 127
        %v1151 = vpop.permute.xlu0 %1150
        %1152 = vrot.lane.b32.xlu0 %v1030, 127
        %v1153 = vpop.permute.xlu0 %1152
        %v1154 = vsel %vm1098, %v1151, %v1153
        %v1155 = vsel %vm1098, %v1153, %v1151
        %v1156 = vmul.f32 %v1154, %v1114
        %v1157 = vmul.f32 %v1155, %v1118
        %v1158 = vpack.c.bf16 %v1156, %v1156
        %v1159 = vpack.c.bf16 %v1157, %v1157
        %v1162 = vrot.slane %v1148, 4
        %v1163 = vrot.slane %v1149, 4
        %v1166 = vsel %vm1127, %v1146, %v1162
        %v1170 = vsel %vm1127, %v1147, %v1163
        %s1172 = scalar_lea.vmem %s6, 8
        %v1173 = vld [vmem:[%s1172] sm:$0xf]
        %v1174 = vld [vmem:[%s1172 + $0x4] sm:$0xf]
        %v1177 = vunpack.c.l.b16 %v1173
        %v1178 = vunpack.c.l.b16 %v1174
        %v1179 = vpack.c.b16 %v1178, %v1177
        %vm1180 = vcmask 195584
        %v1182 = vsel %vm1180, %v1179, 0
        %v1185 = vsel %vm1127, %v1158, 0
        %v1188 = vsel %vm1127, %v1159, 0
        %1190 = vmatprep.subr.bf16.mxu0 0
        %1191 = vmatpush1.bf16.msra.mxu0 0
        %1192 = vmatprep.subr.bf16.mxu0 0
        %1193 = vmatpush1.bf16.msra.mxu0 0
        %1194 = vmatprep.subr.bf16.mxu0 0
        %1195 = vmatpush1.bf16.msra.mxu0 0
        %1196 = vmatprep.subr.bf16.mxu0 0
        %1197 = vmatpush1.bf16.msra.mxu0 0
        %1198 = vmatprep.subr.bf16.mxu0 0
        %1199 = vmatpush1.bf16.msra.mxu0 0
        %1200 = vmatprep.subr.bf16.mxu0 0
        %1201 = vmatpush1.bf16.msra.mxu0 0
        %1202 = vmatprep.subr.bf16.mxu0 %v1188
        %1203 = vmatpush1.bf16.msra.mxu0 %v1185
        %1204 = vmatprep.subr.bf16.mxu0 %v1170
        %1205 = vmatpush1.bf16.msra.mxu0 %v1166
        %1206 = vmatprep.subr.bf16.mxu0 0
        %1207 = vmatpush2.bf16.msra.mxu0 0
        %1208 = vmatprep.subr.bf16.mxu0 0
        %1209 = vmatpush2.bf16.msra.mxu0 0
        %1210 = vmatprep.subr.bf16.mxu0 0
        %1211 = vmatpush2.bf16.msra.mxu0 0
        %1212 = vmatprep.subr.bf16.mxu0 0
        %1213 = vmatpush2.bf16.msra.mxu0 0
        %1214 = vmatprep.subr.bf16.mxu0 0
        %1215 = vmatpush2.bf16.msra.mxu0 0
        %1216 = vmatprep.subr.bf16.mxu0 0
        %1217 = vmatpush2.bf16.msra.mxu0 0
        %1218 = vmatprep.subr.bf16.mxu0 0
        %1219 = vmatpush2.bf16.msra.mxu0 0
        %1220 = vmatprep.subr.bf16.mxu0 0
        %1221 = vmatpush2.bf16.msra.mxu0 0
        %1222 = vmatprep.mubr.bf16.mxu0 0
        %1223 = vmatmul.mubr.bf16.gmra.mxu0 %v1182
        %v1224 = vpop.f32.mrf.mxu0
        %v1225 = vadd.f32 0.0, %v1224
        %v1226 = vpop.f32.mrf.mxu0
        %v1227 = vadd.f32 0.0, %v1226
        %v1228 = vpop.f32.mrf.mxu0
        %v1229 = vadd.f32 0.0, %v1228
        %v1230 = vpop.f32.mrf.mxu0
        %v1231 = vadd.f32 0.0, %v1230
        %1232 = vdwg.mxu0
        %v1235 = vunpack.c.l.b16 %v1136
        %v1236 = vunpack.c.l.b16 %v1137
        %v1237 = vpack.c.b16 %v1236, %v1235
        %v1239 = vsel %vm1180, %v1237, 0
        %v1242 = vsel %vm1127, %v1121, 0
        %v1245 = vsel %vm1127, %v1122, 0
        %1247 = vmatprep.subr.bf16.mxu0 0
        %1248 = vmatpush1.bf16.msra.mxu0 0
        %1249 = vmatprep.subr.bf16.mxu0 0
        %1250 = vmatpush1.bf16.msra.mxu0 0
        %1251 = vmatprep.subr.bf16.mxu0 0
        %1252 = vmatpush1.bf16.msra.mxu0 0
        %1253 = vmatprep.subr.bf16.mxu0 0
        %1254 = vmatpush1.bf16.msra.mxu0 0
        %1255 = vmatprep.subr.bf16.mxu0 0
        %1256 = vmatpush1.bf16.msra.mxu0 0
        %1257 = vmatprep.subr.bf16.mxu0 0
        %1258 = vmatpush1.bf16.msra.mxu0 0
        %1259 = vmatprep.subr.bf16.mxu0 %v1245
        %1260 = vmatpush1.bf16.msra.mxu0 %v1242
        %1261 = vmatprep.subr.bf16.mxu0 %v1134
        %1262 = vmatpush1.bf16.msra.mxu0 %v1130
        %1263 = vmatprep.subr.bf16.mxu0 0
        %1264 = vmatpush2.bf16.msra.mxu0 0
        %1265 = vmatprep.subr.bf16.mxu0 0
        %1266 = vmatpush2.bf16.msra.mxu0 0
        %1267 = vmatprep.subr.bf16.mxu0 0
        %1268 = vmatpush2.bf16.msra.mxu0 0
        %1269 = vmatprep.subr.bf16.mxu0 0
        %1270 = vmatpush2.bf16.msra.mxu0 0
        %1271 = vmatprep.subr.bf16.mxu0 0
        %1272 = vmatpush2.bf16.msra.mxu0 0
        %1273 = vmatprep.subr.bf16.mxu0 0
        %1274 = vmatpush2.bf16.msra.mxu0 0
        %1275 = vmatprep.subr.bf16.mxu0 0
        %1276 = vmatpush2.bf16.msra.mxu0 0
        %1277 = vmatprep.subr.bf16.mxu0 0
        %1278 = vmatpush2.bf16.msra.mxu0 0
        %1279 = vmatprep.mubr.bf16.mxu0 0
        %1280 = vmatmul.mubr.bf16.gmra.mxu0 %v1239
        %v1281 = vpop.f32.mrf.mxu0
        %v1282 = vadd.f32 %v1225, %v1281
        %v1283 = vpop.f32.mrf.mxu0
        %v1284 = vadd.f32 %v1227, %v1283
        %v1285 = vpop.f32.mrf.mxu0
        %v1286 = vadd.f32 %v1229, %v1285
        %v1287 = vpop.f32.mrf.mxu0
        %v1288 = vadd.f32 %v1231, %v1287
        %1289 = vdwg.mxu0
        %1290 = vrot.lane.b32.xlu0 %v1029, 112
        %v1291 = vpop.permute.xlu0 %1290
        %1292 = vrot.lane.b32.xlu0 %v1030, 112
        %v1293 = vpop.permute.xlu0 %1292
        %vm1294 = vcmp.lt.s32.totalorder %v1038, 112
        %v1295 = vsel %vm1294, %v1291, %v1293
        %v1296 = vsel %vm1294, %v1293, %v1291
        %v1297 = vlaneseq
        %v1298 = vshrl.u32 %v1297, 7
        %v1299 = vsub.s32 1, %v1298
        %v1300 = vrot.slane %v516, %v1299
        %v1301 = vlaneseq
        %v1302 = vshrl.u32 %v1301, 7
        %v1303 = vsub.s32 5, %v1302
        %v1304 = vrot.slane %v516, %v1303
        %v1307 = vlaneseq
        %v1308 = vshrl.u32 %v1307, 7
        %v1309 = vsub.s32 1, %v1308
        %v1310 = vrot.slane %v1300, %v1309
        %v1311 = vlaneseq
        %v1312 = vshrl.u32 %v1311, 7
        %v1313 = vsub.s32 1, %v1312
        %v1314 = vrot.slane %v1304, %v1313
        %v1315 = vmul.f32 %v1295, %v1310
        %v1316 = vmul.f32 %v1296, %v1314
        %1317 = vrot.lane.b32.xlu0 %v1315, 1
        %v1318 = vpop.permute.xlu0 %1317
        %1319 = vrot.lane.b32.xlu0 %v1316, 1
        %v1320 = vpop.permute.xlu0 %1319
        %v1321 = vsel %vm1067, %v1318, %v1320
        %v1322 = vsel %vm1067, %v1320, %v1318
        %v1323 = vmul.f32 %v1322, %v1083
        %v1324 = vmul.f32 %v1321, %v1087
        %v1325 = vpack.c.bf16 %v1323, %v1323
        %v1326 = vpack.c.bf16 %v1324, %v1324
        %v1327 = vpack.c.bf16 %v1315, %v1315
        %v1328 = vpack.c.bf16 %v1316, %v1316
        %1329 = vrot.lane.b32.xlu0 %v1315, 127
        %v1330 = vpop.permute.xlu0 %1329
        %1331 = vrot.lane.b32.xlu0 %v1316, 127
        %v1332 = vpop.permute.xlu0 %1331
        %v1333 = vsel %vm1098, %v1330, %v1332
        %v1334 = vsel %vm1098, %v1332, %v1330
        %v1335 = vmul.f32 %v1333, %v1114
        %v1336 = vmul.f32 %v1334, %v1118
        %v1337 = vpack.c.bf16 %v1335, %v1335
        %v1338 = vpack.c.bf16 %v1336, %v1336
        %v1341 = vrot.slane %v1327, 4
        %v1342 = vrot.slane %v1328, 4
        %v1345 = vsel %vm1127, %v1325, %v1341
        %v1349 = vsel %vm1127, %v1326, %v1342
        %s1351 = scalar_lea.vmem %s6, 16
        %v1352 = vld [vmem:[%s1351] sm:$0xf]
        %v1353 = vld [vmem:[%s1351 + $0x4] sm:$0xf]
        %v1356 = vunpack.c.l.b16 %v1352
        %v1357 = vunpack.c.l.b16 %v1353
        %v1358 = vpack.c.b16 %v1357, %v1356
        %v1360 = vsel %vm1180, %v1358, 0
        %v1363 = vsel %vm1127, %v1337, 0
        %v1366 = vsel %vm1127, %v1338, 0
        %1368 = vmatprep.subr.bf16.mxu0 0
        %1369 = vmatpush1.bf16.msra.mxu0 0
        %1370 = vmatprep.subr.bf16.mxu0 0
        %1371 = vmatpush1.bf16.msra.mxu0 0
        %1372 = vmatprep.subr.bf16.mxu0 0
        %1373 = vmatpush1.bf16.msra.mxu0 0
        %1374 = vmatprep.subr.bf16.mxu0 0
        %1375 = vmatpush1.bf16.msra.mxu0 0
        %1376 = vmatprep.subr.bf16.mxu0 0
        %1377 = vmatpush1.bf16.msra.mxu0 0
        %1378 = vmatprep.subr.bf16.mxu0 0
        %1379 = vmatpush1.bf16.msra.mxu0 0
        %1380 = vmatprep.subr.bf16.mxu0 %v1366
        %1381 = vmatpush1.bf16.msra.mxu0 %v1363
        %1382 = vmatprep.subr.bf16.mxu0 %v1349
        %1383 = vmatpush1.bf16.msra.mxu0 %v1345
        %1384 = vmatprep.subr.bf16.mxu0 0
        %1385 = vmatpush2.bf16.msra.mxu0 0
        %1386 = vmatprep.subr.bf16.mxu0 0
        %1387 = vmatpush2.bf16.msra.mxu0 0
        %1388 = vmatprep.subr.bf16.mxu0 0
        %1389 = vmatpush2.bf16.msra.mxu0 0
        %1390 = vmatprep.subr.bf16.mxu0 0
        %1391 = vmatpush2.bf16.msra.mxu0 0
        %1392 = vmatprep.subr.bf16.mxu0 0
        %1393 = vmatpush2.bf16.msra.mxu0 0
        %1394 = vmatprep.subr.bf16.mxu0 0
        %1395 = vmatpush2.bf16.msra.mxu0 0
        %1396 = vmatprep.subr.bf16.mxu0 0
        %1397 = vmatpush2.bf16.msra.mxu0 0
        %1398 = vmatprep.subr.bf16.mxu0 0
        %1399 = vmatpush2.bf16.msra.mxu0 0
        %1400 = vmatprep.mubr.bf16.mxu0 0
        %1401 = vmatmul.mubr.bf16.gmra.mxu0 %v1360
        %v1402 = vpop.f32.mrf.mxu0
        %v1403 = vadd.f32 0.0, %v1402
        %v1404 = vpop.f32.mrf.mxu0
        %v1405 = vadd.f32 0.0, %v1404
        %v1406 = vpop.f32.mrf.mxu0
        %v1407 = vadd.f32 0.0, %v1406
        %v1408 = vpop.f32.mrf.mxu0
        %v1409 = vadd.f32 0.0, %v1408
        %1410 = vdwg.mxu0
        %v1411 = vadd.f32 %v1282, %v1403
        %v1412 = vadd.f32 %v1284, %v1405
        %v1413 = vadd.f32 %v1286, %v1407
        %v1414 = vadd.f32 %v1288, %v1409
        %1416 = vset.pattern.permute.xlu0 0
        %1417 = vperm.xlu0 %1416, %v1031
        %v1418 = vpop.permute.xlu0 %1417
        %1421 = vset.pattern.permute.xlu0 0
        %1422 = vperm.xlu0 %1421, %v1032
        %v1423 = vpop.permute.xlu0 %1422
        %v1425 = vadd.f32 %v1411, %v1418
        %v1426 = vadd.f32 %v1412, %v1418
        %v1427 = vadd.f32 %v1413, %v1423
        %v1428 = vadd.f32 %v1414, %v1423
        %v1429 = vld [vmem:[%s512] sm:$0xff]
        %v1430 = vld [vmem:[%s512 + $0x8] sm:$0xff]
        %1432 = vset.pattern.permute.xlu0 0
        %1433 = vperm.xlu0 %1432, %v1429
        %v1434 = vpop.permute.xlu0 %1433
        %1437 = vset.pattern.permute.xlu0 0
        %1438 = vperm.xlu0 %1437, %v1430
        %v1439 = vpop.permute.xlu0 %1438
        %v1441 = vadd.f32 %v1425, %v1434
        %v1442 = vadd.f32 %v1426, %v1434
        %v1443 = vadd.f32 %v1427, %v1439
        %v1444 = vadd.f32 %v1428, %v1439
        %v1445 = vld [vmem:[%s8] sm:$0xff]
        %v1446 = vld [vmem:[%s8 + $0x8] sm:$0xff]
        %v1447 = vld [vmem:[%s9] sm:$0xff]
        %v1448 = vld [vmem:[%s9 + $0x8] sm:$0xff]
        %v1449 = vld [vmem:[%s10] sm:$0xff]
        %v1450 = vld [vmem:[%s10 + $0x8] sm:$0xff]
        %v1451 = vadd.f32 %v1441, %v1442
        %1452 = vadd.xlane.f32.xlu0 %v1451
        %v1453 = vpop.xlane.xlu0 %1452
        %v1454 = vadd.f32 %v1443, %v1444
        %1455 = vadd.xlane.f32.xlu0 %v1454
        %v1456 = vpop.xlane.xlu0 %1455
        %v1457 = vmul.f32 %v1441, %v1441
        %v1458 = vmul.f32 %v1442, %v1442
        %v1459 = vmul.f32 %v1443, %v1443
        %v1460 = vmul.f32 %v1444, %v1444
        %v1461 = vadd.f32 %v1457, %v1458
        %1462 = vadd.xlane.f32.xlu0 %v1461
        %v1463 = vpop.xlane.xlu0 %1462
        %v1464 = vadd.f32 %v1459, %v1460
        %1465 = vadd.xlane.f32.xlu0 %v1464
        %v1466 = vpop.xlane.xlu0 %1465
        %v1467 = vsel %vm528, %v1453, %v1463
        %v1468 = vsel %vm528, %v1456, %v1466
        %vm1469 = vcmask 130048
        %v1471 = vsel %vm1469, %v1445, 0
        %v1474 = vsel %vm1469, %v1446, 0
        %1476 = vmatprep.subr.mxu0 0.0
        %1477 = vmatpush1.msra.mxu0 0.0
        %1478 = vmatprep.subr.mxu0 0.0
        %1479 = vmatpush1.msra.mxu0 0.0
        %1480 = vmatprep.subr.mxu0 0.0
        %1481 = vmatpush1.msra.mxu0 0.0
        %1482 = vmatprep.subr.mxu0 0.0
        %1483 = vmatpush1.msra.mxu0 0.0
        %1484 = vmatprep.subr.mxu0 0.0
        %1485 = vmatpush1.msra.mxu0 0.0
        %1486 = vmatprep.subr.mxu0 0.0
        %1487 = vmatpush1.msra.mxu0 0.0
        %1488 = vmatprep.subr.mxu0 0.0
        %1489 = vmatpush1.msra.mxu0 0.0
        %1490 = vmatprep.subr.mxu0 0.0
        %1491 = vmatpush1.msra.mxu0 0.0
        %1492 = vmatprep.subr.mxu0 0.0
        %1493 = vmatpush1.msra.mxu0 0.0
        %1494 = vmatprep.subr.mxu0 0.0
        %1495 = vmatpush1.msra.mxu0 0.0
        %1496 = vmatprep.subr.mxu0 0.0
        %1497 = vmatpush1.msra.mxu0 0.0
        %1498 = vmatprep.subr.mxu0 0.0
        %1499 = vmatpush1.msra.mxu0 0.0
        %1500 = vmatprep.subr.mxu0 0.0
        %1501 = vmatpush1.msra.mxu0 0.0
        %1502 = vmatprep.subr.mxu0 0.0
        %1503 = vmatpush1.msra.mxu0 0.0
        %1504 = vmatprep.subr.mxu0 0.0
        %v1505 = vand.u32 %v1468, 4294901760
        %1506 = vmatpush1.msra.mxu0 %v1505
        %1507 = vmatprep.subr.mxu0 0.0
        %v1508 = vand.u32 %v1467, 4294901760
        %1509 = vmatpush1.msra.mxu0 %v1508
        %1510 = vmatprep.subr.mxu0 0.0
        %1511 = vmatpush2.msra.mxu0 0.0
        %1512 = vmatprep.subr.mxu0 0.0
        %1513 = vmatpush2.msra.mxu0 0.0
        %1514 = vmatprep.subr.mxu0 0.0
        %1515 = vmatpush2.msra.mxu0 0.0
        %1516 = vmatprep.subr.mxu0 0.0
        %1517 = vmatpush2.msra.mxu0 0.0
        %1518 = vmatprep.subr.mxu0 0.0
        %1519 = vmatpush2.msra.mxu0 0.0
        %1520 = vmatprep.subr.mxu0 0.0
        %1521 = vmatpush2.msra.mxu0 0.0
        %1522 = vmatprep.subr.mxu0 0.0
        %1523 = vmatpush2.msra.mxu0 0.0
        %1524 = vmatprep.subr.mxu0 0.0
        %1525 = vmatpush2.msra.mxu0 0.0
        %1526 = vmatprep.subr.mxu0 0.0
        %1527 = vmatpush2.msra.mxu0 0.0
        %1528 = vmatprep.subr.mxu0 0.0
        %1529 = vmatpush2.msra.mxu0 0.0
        %1530 = vmatprep.subr.mxu0 0.0
        %1531 = vmatpush2.msra.mxu0 0.0
        %1532 = vmatprep.subr.mxu0 0.0
        %1533 = vmatpush2.msra.mxu0 0.0
        %1534 = vmatprep.subr.mxu0 0.0
        %1535 = vmatpush2.msra.mxu0 0.0
        %1536 = vmatprep.subr.mxu0 0.0
        %1537 = vmatpush2.msra.mxu0 0.0
        %1538 = vmatprep.subr.mxu0 0.0
        %1539 = vmatpush2.msra.mxu0 0.0
        %1540 = vmatprep.subr.mxu0 0.0
        %1541 = vmatpush2.msra.mxu0 0.0
        %1542 = vmatprep.mubr.f32.mxu0 0.0
        %v1543 = vand.u32 %v1471, 4294901760
        %v1544 = vsub.f32 %v1471, %v1543
        %v1545 = vand.u32 %v1544, 4294901760
        %v1546 = vsub.f32 %v1544, %v1545
        %v1547 = vand.u32 %v1546, 4294901760
        %1548 = vmatmul.mubr.f32.gmra.mxu0 %v1547
        %v1549 = vpop.f32.mrf.mxu0
        %v1550 = vadd.f32 0.0, %v1549
        %v1551 = vpop.f32.mrf.mxu0
        %1552 = vmatprep.mubr.f32.mxu0 0.0
        %v1553 = vand.u32 %v1474, 4294901760
        %v1554 = vsub.f32 %v1474, %v1553
        %v1555 = vand.u32 %v1554, 4294901760
        %v1556 = vsub.f32 %v1554, %v1555
        %v1557 = vand.u32 %v1556, 4294901760
        %1558 = vmatmul.mubr.f32.gmra.mxu0 %v1557
        %v1559 = vpop.f32.mrf.mxu0
        %v1560 = vadd.f32 0.0, %v1559
        %v1561 = vpop.f32.mrf.mxu0
        %1562 = vdwg.mxu0
        %1563 = vmatprep.subr.mxu0 0.0
        %1564 = vmatpush1.msra.mxu0 0.0
        %1565 = vmatprep.subr.mxu0 0.0
        %1566 = vmatpush1.msra.mxu0 0.0
        %1567 = vmatprep.subr.mxu0 0.0
        %1568 = vmatpush1.msra.mxu0 0.0
        %1569 = vmatprep.subr.mxu0 0.0
        %1570 = vmatpush1.msra.mxu0 0.0
        %1571 = vmatprep.subr.mxu0 0.0
        %1572 = vmatpush1.msra.mxu0 0.0
        %1573 = vmatprep.subr.mxu0 0.0
        %1574 = vmatpush1.msra.mxu0 0.0
        %1575 = vmatprep.subr.mxu0 0.0
        %1576 = vmatpush1.msra.mxu0 0.0
        %1577 = vmatprep.subr.mxu0 0.0
        %1578 = vmatpush1.msra.mxu0 0.0
        %1579 = vmatprep.subr.mxu0 0.0
        %1580 = vmatpush1.msra.mxu0 0.0
        %1581 = vmatprep.subr.mxu0 0.0
        %1582 = vmatpush1.msra.mxu0 0.0
        %1583 = vmatprep.subr.mxu0 0.0
        %1584 = vmatpush1.msra.mxu0 0.0
        %1585 = vmatprep.subr.mxu0 0.0
        %1586 = vmatpush1.msra.mxu0 0.0
        %1587 = vmatprep.subr.mxu0 0.0
        %1588 = vmatpush1.msra.mxu0 0.0
        %1589 = vmatprep.subr.mxu0 0.0
        %1590 = vmatpush1.msra.mxu0 0.0
        %1591 = vmatprep.subr.mxu0 0.0
        %v1592 = vand.u32 %v1468, 4294901760
        %v1593 = vsub.f32 %v1468, %v1592
        %v1594 = vand.u32 %v1593, 4294901760
        %v1595 = vsub.f32 %v1593, %v1594
        %v1596 = vand.u32 %v1595, 4294901760
        %1597 = vmatpush1.msra.mxu0 %v1596
        %1598 = vmatprep.subr.mxu0 0.0
        %v1599 = vand.u32 %v1467, 4294901760
        %v1600 = vsub.f32 %v1467, %v1599
        %v1601 = vand.u32 %v1600, 4294901760
        %v1602 = vsub.f32 %v1600, %v1601
        %v1603 = vand.u32 %v1602, 4294901760
        %1604 = vmatpush1.msra.mxu0 %v1603
        %1605 = vmatprep.subr.mxu0 0.0
        %1606 = vmatpush2.msra.mxu0 0.0
        %1607 = vmatprep.subr.mxu0 0.0
        %1608 = vmatpush2.msra.mxu0 0.0
        %1609 = vmatprep.subr.mxu0 0.0
        %1610 = vmatpush2.msra.mxu0 0.0
        %1611 = vmatprep.subr.mxu0 0.0
        %1612 = vmatpush2.msra.mxu0 0.0
        %1613 = vmatprep.subr.mxu0 0.0
        %1614 = vmatpush2.msra.mxu0 0.0
        %1615 = vmatprep.subr.mxu0 0.0
        %1616 = vmatpush2.msra.mxu0 0.0
        %1617 = vmatprep.subr.mxu0 0.0
        %1618 = vmatpush2.msra.mxu0 0.0
        %1619 = vmatprep.subr.mxu0 0.0
        %1620 = vmatpush2.msra.mxu0 0.0
        %1621 = vmatprep.subr.mxu0 0.0
        %1622 = vmatpush2.msra.mxu0 0.0
        %1623 = vmatprep.subr.mxu0 0.0
        %1624 = vmatpush2.msra.mxu0 0.0
        %1625 = vmatprep.subr.mxu0 0.0
        %1626 = vmatpush2.msra.mxu0 0.0
        %1627 = vmatprep.subr.mxu0 0.0
        %1628 = vmatpush2.msra.mxu0 0.0
        %1629 = vmatprep.subr.mxu0 0.0
        %1630 = vmatpush2.msra.mxu0 0.0
        %1631 = vmatprep.subr.mxu0 0.0
        %1632 = vmatpush2.msra.mxu0 0.0
        %1633 = vmatprep.subr.mxu0 0.0
        %1634 = vmatpush2.msra.mxu0 0.0
        %1635 = vmatprep.subr.mxu0 0.0
        %1636 = vmatpush2.msra.mxu0 0.0
        %1637 = vmatprep.mubr.f32.mxu0 0.0
        %v1638 = vand.u32 %v1471, 4294901760
        %1639 = vmatmul.mubr.f32.gmra.mxu0 %v1638
        %v1640 = vpop.f32.mrf.mxu0
        %v1641 = vadd.f32 %v1550, %v1640
        %v1642 = vpop.f32.mrf.mxu0
        %1643 = vmatprep.mubr.f32.mxu0 0.0
        %v1644 = vand.u32 %v1474, 4294901760
        %1645 = vmatmul.mubr.f32.gmra.mxu0 %v1644
        %v1646 = vpop.f32.mrf.mxu0
        %v1647 = vadd.f32 %v1560, %v1646
        %v1648 = vpop.f32.mrf.mxu0
        %1649 = vdwg.mxu0
        %1650 = vmatprep.subr.mxu0 0.0
        %1651 = vmatpush1.msra.mxu0 0.0
        %1652 = vmatprep.subr.mxu0 0.0
        %1653 = vmatpush1.msra.mxu0 0.0
        %1654 = vmatprep.subr.mxu0 0.0
        %1655 = vmatpush1.msra.mxu0 0.0
        %1656 = vmatprep.subr.mxu0 0.0
        %1657 = vmatpush1.msra.mxu0 0.0
        %1658 = vmatprep.subr.mxu0 0.0
        %1659 = vmatpush1.msra.mxu0 0.0
        %1660 = vmatprep.subr.mxu0 0.0
        %1661 = vmatpush1.msra.mxu0 0.0
        %1662 = vmatprep.subr.mxu0 0.0
        %1663 = vmatpush1.msra.mxu0 0.0
        %1664 = vmatprep.subr.mxu0 0.0
        %1665 = vmatpush1.msra.mxu0 0.0
        %1666 = vmatprep.subr.mxu0 0.0
        %1667 = vmatpush1.msra.mxu0 0.0
        %1668 = vmatprep.subr.mxu0 0.0
        %1669 = vmatpush1.msra.mxu0 0.0
        %1670 = vmatprep.subr.mxu0 0.0
        %1671 = vmatpush1.msra.mxu0 0.0
        %1672 = vmatprep.subr.mxu0 0.0
        %1673 = vmatpush1.msra.mxu0 0.0
        %1674 = vmatprep.subr.mxu0 0.0
        %1675 = vmatpush1.msra.mxu0 0.0
        %1676 = vmatprep.subr.mxu0 0.0
        %1677 = vmatpush1.msra.mxu0 0.0
        %1678 = vmatprep.subr.mxu0 0.0
        %v1679 = vand.u32 %v1468, 4294901760
        %v1680 = vsub.f32 %v1468, %v1679
        %1681 = vmatpush1.msra.mxu0 %v1680
        %1682 = vmatprep.subr.mxu0 0.0
        %v1683 = vand.u32 %v1467, 4294901760
        %v1684 = vsub.f32 %v1467, %v1683
        %1685 = vmatpush1.msra.mxu0 %v1684
        %1686 = vmatprep.subr.mxu0 0.0
        %1687 = vmatpush2.msra.mxu0 0.0
        %1688 = vmatprep.subr.mxu0 0.0
        %1689 = vmatpush2.msra.mxu0 0.0
        %1690 = vmatprep.subr.mxu0 0.0
        %1691 = vmatpush2.msra.mxu0 0.0
        %1692 = vmatprep.subr.mxu0 0.0
        %1693 = vmatpush2.msra.mxu0 0.0
        %1694 = vmatprep.subr.mxu0 0.0
        %1695 = vmatpush2.msra.mxu0 0.0
        %1696 = vmatprep.subr.mxu0 0.0
        %1697 = vmatpush2.msra.mxu0 0.0
        %1698 = vmatprep.subr.mxu0 0.0
        %1699 = vmatpush2.msra.mxu0 0.0
        %1700 = vmatprep.subr.mxu0 0.0
        %1701 = vmatpush2.msra.mxu0 0.0
        %1702 = vmatprep.subr.mxu0 0.0
        %1703 = vmatpush2.msra.mxu0 0.0
        %1704 = vmatprep.subr.mxu0 0.0
        %1705 = vmatpush2.msra.mxu0 0.0
        %1706 = vmatprep.subr.mxu0 0.0
        %1707 = vmatpush2.msra.mxu0 0.0
        %1708 = vmatprep.subr.mxu0 0.0
        %1709 = vmatpush2.msra.mxu0 0.0
        %1710 = vmatprep.subr.mxu0 0.0
        %1711 = vmatpush2.msra.mxu0 0.0
        %1712 = vmatprep.subr.mxu0 0.0
        %1713 = vmatpush2.msra.mxu0 0.0
        %1714 = vmatprep.subr.mxu0 0.0
        %1715 = vmatpush2.msra.mxu0 0.0
        %1716 = vmatprep.subr.mxu0 0.0
        %1717 = vmatpush2.msra.mxu0 0.0
        %1718 = vmatprep.mubr.f32.mxu0 0.0
        %v1719 = vand.u32 %v1471, 4294901760
        %v1720 = vsub.f32 %v1471, %v1719
        %1721 = vmatmul.mubr.f32.gmra.mxu0 %v1720
        %v1722 = vpop.f32.mrf.mxu0
        %v1723 = vadd.f32 %v1641, %v1722
        %v1724 = vpop.f32.mrf.mxu0
        %1725 = vmatprep.mubr.f32.mxu0 0.0
        %v1726 = vand.u32 %v1474, 4294901760
        %v1727 = vsub.f32 %v1474, %v1726
        %1728 = vmatmul.mubr.f32.gmra.mxu0 %v1727
        %v1729 = vpop.f32.mrf.mxu0
        %v1730 = vadd.f32 %v1647, %v1729
        %v1731 = vpop.f32.mrf.mxu0
        %1732 = vdwg.mxu0
        %1733 = vmatprep.subr.mxu0 0.0
        %1734 = vmatpush1.msra.mxu0 0.0
        %1735 = vmatprep.subr.mxu0 0.0
        %1736 = vmatpush1.msra.mxu0 0.0
        %1737 = vmatprep.subr.mxu0 0.0
        %1738 = vmatpush1.msra.mxu0 0.0
        %1739 = vmatprep.subr.mxu0 0.0
        %1740 = vmatpush1.msra.mxu0 0.0
        %1741 = vmatprep.subr.mxu0 0.0
        %1742 = vmatpush1.msra.mxu0 0.0
        %1743 = vmatprep.subr.mxu0 0.0
        %1744 = vmatpush1.msra.mxu0 0.0
        %1745 = vmatprep.subr.mxu0 0.0
        %1746 = vmatpush1.msra.mxu0 0.0
        %1747 = vmatprep.subr.mxu0 0.0
        %1748 = vmatpush1.msra.mxu0 0.0
        %1749 = vmatprep.subr.mxu0 0.0
        %1750 = vmatpush1.msra.mxu0 0.0
        %1751 = vmatprep.subr.mxu0 0.0
        %1752 = vmatpush1.msra.mxu0 0.0
        %1753 = vmatprep.subr.mxu0 0.0
        %1754 = vmatpush1.msra.mxu0 0.0
        %1755 = vmatprep.subr.mxu0 0.0
        %1756 = vmatpush1.msra.mxu0 0.0
        %1757 = vmatprep.subr.mxu0 0.0
        %1758 = vmatpush1.msra.mxu0 0.0
        %1759 = vmatprep.subr.mxu0 0.0
        %1760 = vmatpush1.msra.mxu0 0.0
        %1761 = vmatprep.subr.mxu0 0.0
        %v1762 = vand.u32 %v1468, 4294901760
        %1763 = vmatpush1.msra.mxu0 %v1762
        %1764 = vmatprep.subr.mxu0 0.0
        %v1765 = vand.u32 %v1467, 4294901760
        %1766 = vmatpush1.msra.mxu0 %v1765
        %1767 = vmatprep.subr.mxu0 0.0
        %1768 = vmatpush2.msra.mxu0 0.0
        %1769 = vmatprep.subr.mxu0 0.0
        %1770 = vmatpush2.msra.mxu0 0.0
        %1771 = vmatprep.subr.mxu0 0.0
        %1772 = vmatpush2.msra.mxu0 0.0
        %1773 = vmatprep.subr.mxu0 0.0
        %1774 = vmatpush2.msra.mxu0 0.0
        %1775 = vmatprep.subr.mxu0 0.0
        %1776 = vmatpush2.msra.mxu0 0.0
        %1777 = vmatprep.subr.mxu0 0.0
        %1778 = vmatpush2.msra.mxu0 0.0
        %1779 = vmatprep.subr.mxu0 0.0
        %1780 = vmatpush2.msra.mxu0 0.0
        %1781 = vmatprep.subr.mxu0 0.0
        %1782 = vmatpush2.msra.mxu0 0.0
        %1783 = vmatprep.subr.mxu0 0.0
        %1784 = vmatpush2.msra.mxu0 0.0
        %1785 = vmatprep.subr.mxu0 0.0
        %1786 = vmatpush2.msra.mxu0 0.0
        %1787 = vmatprep.subr.mxu0 0.0
        %1788 = vmatpush2.msra.mxu0 0.0
        %1789 = vmatprep.subr.mxu0 0.0
        %1790 = vmatpush2.msra.mxu0 0.0
        %1791 = vmatprep.subr.mxu0 0.0
        %1792 = vmatpush2.msra.mxu0 0.0
        %1793 = vmatprep.subr.mxu0 0.0
        %1794 = vmatpush2.msra.mxu0 0.0
        %1795 = vmatprep.subr.mxu0 0.0
        %1796 = vmatpush2.msra.mxu0 0.0
        %1797 = vmatprep.subr.mxu0 0.0
        %1798 = vmatpush2.msra.mxu0 0.0
        %1799 = vmatprep.mubr.f32.mxu0 0.0
        %v1800 = vand.u32 %v1471, 4294901760
        %v1801 = vsub.f32 %v1471, %v1800
        %v1802 = vand.u32 %v1801, 4294901760
        %1803 = vmatmul.mubr.f32.gmra.mxu0 %v1802
        %v1804 = vpop.f32.mrf.mxu0
        %v1805 = vadd.f32 %v1723, %v1804
        %v1806 = vpop.f32.mrf.mxu0
        %1807 = vmatprep.mubr.f32.mxu0 0.0
        %v1808 = vand.u32 %v1474, 4294901760
        %v1809 = vsub.f32 %v1474, %v1808
        %v1810 = vand.u32 %v1809, 4294901760
        %1811 = vmatmul.mubr.f32.gmra.mxu0 %v1810
        %v1812 = vpop.f32.mrf.mxu0
        %v1813 = vadd.f32 %v1730, %v1812
        %v1814 = vpop.f32.mrf.mxu0
        %1815 = vdwg.mxu0
        %1816 = vmatprep.subr.mxu0 0.0
        %1817 = vmatpush1.msra.mxu0 0.0
        %1818 = vmatprep.subr.mxu0 0.0
        %1819 = vmatpush1.msra.mxu0 0.0
        %1820 = vmatprep.subr.mxu0 0.0
        %1821 = vmatpush1.msra.mxu0 0.0
        %1822 = vmatprep.subr.mxu0 0.0
        %1823 = vmatpush1.msra.mxu0 0.0
        %1824 = vmatprep.subr.mxu0 0.0
        %1825 = vmatpush1.msra.mxu0 0.0
        %1826 = vmatprep.subr.mxu0 0.0
        %1827 = vmatpush1.msra.mxu0 0.0
        %1828 = vmatprep.subr.mxu0 0.0
        %1829 = vmatpush1.msra.mxu0 0.0
        %1830 = vmatprep.subr.mxu0 0.0
        %1831 = vmatpush1.msra.mxu0 0.0
        %1832 = vmatprep.subr.mxu0 0.0
        %1833 = vmatpush1.msra.mxu0 0.0
        %1834 = vmatprep.subr.mxu0 0.0
        %1835 = vmatpush1.msra.mxu0 0.0
        %1836 = vmatprep.subr.mxu0 0.0
        %1837 = vmatpush1.msra.mxu0 0.0
        %1838 = vmatprep.subr.mxu0 0.0
        %1839 = vmatpush1.msra.mxu0 0.0
        %1840 = vmatprep.subr.mxu0 0.0
        %1841 = vmatpush1.msra.mxu0 0.0
        %1842 = vmatprep.subr.mxu0 0.0
        %1843 = vmatpush1.msra.mxu0 0.0
        %1844 = vmatprep.subr.mxu0 0.0
        %v1845 = vand.u32 %v1468, 4294901760
        %v1846 = vsub.f32 %v1468, %v1845
        %v1847 = vand.u32 %v1846, 4294901760
        %1848 = vmatpush1.msra.mxu0 %v1847
        %1849 = vmatprep.subr.mxu0 0.0
        %v1850 = vand.u32 %v1467, 4294901760
        %v1851 = vsub.f32 %v1467, %v1850
        %v1852 = vand.u32 %v1851, 4294901760
        %1853 = vmatpush1.msra.mxu0 %v1852
        %1854 = vmatprep.subr.mxu0 0.0
        %1855 = vmatpush2.msra.mxu0 0.0
        %1856 = vmatprep.subr.mxu0 0.0
        %1857 = vmatpush2.msra.mxu0 0.0
        %1858 = vmatprep.subr.mxu0 0.0
        %1859 = vmatpush2.msra.mxu0 0.0
        %1860 = vmatprep.subr.mxu0 0.0
        %1861 = vmatpush2.msra.mxu0 0.0
        %1862 = vmatprep.subr.mxu0 0.0
        %1863 = vmatpush2.msra.mxu0 0.0
        %1864 = vmatprep.subr.mxu0 0.0
        %1865 = vmatpush2.msra.mxu0 0.0
        %1866 = vmatprep.subr.mxu0 0.0
        %1867 = vmatpush2.msra.mxu0 0.0
        %1868 = vmatprep.subr.mxu0 0.0
        %1869 = vmatpush2.msra.mxu0 0.0
        %1870 = vmatprep.subr.mxu0 0.0
        %1871 = vmatpush2.msra.mxu0 0.0
        %1872 = vmatprep.subr.mxu0 0.0
        %1873 = vmatpush2.msra.mxu0 0.0
        %1874 = vmatprep.subr.mxu0 0.0
        %1875 = vmatpush2.msra.mxu0 0.0
        %1876 = vmatprep.subr.mxu0 0.0
        %1877 = vmatpush2.msra.mxu0 0.0
        %1878 = vmatprep.subr.mxu0 0.0
        %1879 = vmatpush2.msra.mxu0 0.0
        %1880 = vmatprep.subr.mxu0 0.0
        %1881 = vmatpush2.msra.mxu0 0.0
        %1882 = vmatprep.subr.mxu0 0.0
        %1883 = vmatpush2.msra.mxu0 0.0
        %1884 = vmatprep.subr.mxu0 0.0
        %1885 = vmatpush2.msra.mxu0 0.0
        %1886 = vmatprep.mubr.f32.mxu0 0.0
        %v1887 = vand.u32 %v1471, 4294901760
        %1888 = vmatmul.mubr.f32.gmra.mxu0 %v1887
        %v1889 = vpop.f32.mrf.mxu0
        %v1890 = vadd.f32 %v1805, %v1889
        %v1891 = vpop.f32.mrf.mxu0
        %1892 = vmatprep.mubr.f32.mxu0 0.0
        %v1893 = vand.u32 %v1474, 4294901760
        %1894 = vmatmul.mubr.f32.gmra.mxu0 %v1893
        %v1895 = vpop.f32.mrf.mxu0
        %v1896 = vadd.f32 %v1813, %v1895
        %v1897 = vpop.f32.mrf.mxu0
        %1898 = vdwg.mxu0
        %1899 = vmatprep.subr.mxu0 0.0
        %1900 = vmatpush1.msra.mxu0 0.0
        %1901 = vmatprep.subr.mxu0 0.0
        %1902 = vmatpush1.msra.mxu0 0.0
        %1903 = vmatprep.subr.mxu0 0.0
        %1904 = vmatpush1.msra.mxu0 0.0
        %1905 = vmatprep.subr.mxu0 0.0
        %1906 = vmatpush1.msra.mxu0 0.0
        %1907 = vmatprep.subr.mxu0 0.0
        %1908 = vmatpush1.msra.mxu0 0.0
        %1909 = vmatprep.subr.mxu0 0.0
        %1910 = vmatpush1.msra.mxu0 0.0
        %1911 = vmatprep.subr.mxu0 0.0
        %1912 = vmatpush1.msra.mxu0 0.0
        %1913 = vmatprep.subr.mxu0 0.0
        %1914 = vmatpush1.msra.mxu0 0.0
        %1915 = vmatprep.subr.mxu0 0.0
        %1916 = vmatpush1.msra.mxu0 0.0
        %1917 = vmatprep.subr.mxu0 0.0
        %1918 = vmatpush1.msra.mxu0 0.0
        %1919 = vmatprep.subr.mxu0 0.0
        %1920 = vmatpush1.msra.mxu0 0.0
        %1921 = vmatprep.subr.mxu0 0.0
        %1922 = vmatpush1.msra.mxu0 0.0
        %1923 = vmatprep.subr.mxu0 0.0
        %1924 = vmatpush1.msra.mxu0 0.0
        %1925 = vmatprep.subr.mxu0 0.0
        %1926 = vmatpush1.msra.mxu0 0.0
        %1927 = vmatprep.subr.mxu0 0.0
        %v1928 = vand.u32 %v1468, 4294901760
        %1929 = vmatpush1.msra.mxu0 %v1928
        %1930 = vmatprep.subr.mxu0 0.0
        %v1931 = vand.u32 %v1467, 4294901760
        %1932 = vmatpush1.msra.mxu0 %v1931
        %1933 = vmatprep.subr.mxu0 0.0
        %1934 = vmatpush2.msra.mxu0 0.0
        %1935 = vmatprep.subr.mxu0 0.0
        %1936 = vmatpush2.msra.mxu0 0.0
        %1937 = vmatprep.subr.mxu0 0.0
        %1938 = vmatpush2.msra.mxu0 0.0
        %1939 = vmatprep.subr.mxu0 0.0
        %1940 = vmatpush2.msra.mxu0 0.0
        %1941 = vmatprep.subr.mxu0 0.0
        %1942 = vmatpush2.msra.mxu0 0.0
        %1943 = vmatprep.subr.mxu0 0.0
        %1944 = vmatpush2.msra.mxu0 0.0
        %1945 = vmatprep.subr.mxu0 0.0
        %1946 = vmatpush2.msra.mxu0 0.0
        %1947 = vmatprep.subr.mxu0 0.0
        %1948 = vmatpush2.msra.mxu0 0.0
        %1949 = vmatprep.subr.mxu0 0.0
        %1950 = vmatpush2.msra.mxu0 0.0
        %1951 = vmatprep.subr.mxu0 0.0
        %1952 = vmatpush2.msra.mxu0 0.0
        %1953 = vmatprep.subr.mxu0 0.0
        %1954 = vmatpush2.msra.mxu0 0.0
        %1955 = vmatprep.subr.mxu0 0.0
        %1956 = vmatpush2.msra.mxu0 0.0
        %1957 = vmatprep.subr.mxu0 0.0
        %1958 = vmatpush2.msra.mxu0 0.0
        %1959 = vmatprep.subr.mxu0 0.0
        %1960 = vmatpush2.msra.mxu0 0.0
        %1961 = vmatprep.subr.mxu0 0.0
        %1962 = vmatpush2.msra.mxu0 0.0
        %1963 = vmatprep.subr.mxu0 0.0
        %1964 = vmatpush2.msra.mxu0 0.0
        %1965 = vmatprep.mubr.f32.mxu0 0.0
        %v1966 = vand.u32 %v1471, 4294901760
        %1967 = vmatmul.mubr.f32.gmra.mxu0 %v1966
        %v1968 = vpop.f32.mrf.mxu0
        %v1969 = vadd.f32 %v1890, %v1968
        %v1970 = vpop.f32.mrf.mxu0
        %1971 = vmatprep.mubr.f32.mxu0 0.0
        %v1972 = vand.u32 %v1474, 4294901760
        %1973 = vmatmul.mubr.f32.gmra.mxu0 %v1972
        %v1974 = vpop.f32.mrf.mxu0
        %v1975 = vadd.f32 %v1896, %v1974
        %v1976 = vpop.f32.mrf.mxu0
        %1977 = vdwg.mxu0
        %v1978 = vmul.f32 %v1969, %v1969
        %v1979 = vmul.f32 %v1975, %v1975
        %1982 = vrot.lane.b32.xlu0 %v1978, 1
        %v1983 = vpop.permute.xlu0 %1982
        %1984 = vrot.lane.b32.xlu0 %v1979, 1
        %v1985 = vpop.permute.xlu0 %1984
        %v1988 = vsub.f32 %v1969, %v1983
        %v1989 = vsub.f32 %v1975, %v1985
        %v1990 = vmax.f32 %v1988, 0.0
        %v1991 = vmax.f32 %v1989, 0.0
        %1993 = vset.pattern.permute.xlu0 0
        %1994 = vperm.xlu0 %1993, %v1969
        %v1995 = vpop.permute.xlu0 %1994
        %1998 = vset.pattern.permute.xlu0 0
        %1999 = vperm.xlu0 %1998, %v1975
        %v2000 = vpop.permute.xlu0 %1999
        %v2002 = vsub.f32 %v1441, %v1995
        %v2003 = vsub.f32 %v1442, %v1995
        %v2004 = vsub.f32 %v1443, %v2000
        %v2005 = vsub.f32 %v1444, %v2000
        %v2006 = vadd.f32 %v1990, 1e-05
        %v2007 = vadd.f32 %v1991, 1e-05
        %v2008 = vrsqrt.pop %v2006
        %v2009 = vrsqrt.pop %v2007
        %2011 = vset.pattern.permute.xlu0 1
        %2012 = vperm.xlu0 %2011, %v2008
        %v2013 = vpop.permute.xlu0 %2012
        %2016 = vset.pattern.permute.xlu0 1
        %2017 = vperm.xlu0 %2016, %v2009
        %v2018 = vpop.permute.xlu0 %2017
        %v2020 = vmul.f32 %v2002, %v2013
        %v2021 = vmul.f32 %v2003, %v2013
        %v2022 = vmul.f32 %v2004, %v2018
        %v2023 = vmul.f32 %v2005, %v2018
        %2025 = vset.pattern.permute.xlu0 0
        %2026 = vperm.xlu0 %2025, %v1447
        %v2027 = vpop.permute.xlu0 %2026
        %2030 = vset.pattern.permute.xlu0 0
        %2031 = vperm.xlu0 %2030, %v1448
        %v2032 = vpop.permute.xlu0 %2031
        %v2034 = vmul.f32 %v2020, %v2027
        %v2035 = vmul.f32 %v2021, %v2027
        %v2036 = vmul.f32 %v2022, %v2032
        %v2037 = vmul.f32 %v2023, %v2032
        %2039 = vset.pattern.permute.xlu0 0
        %2040 = vperm.xlu0 %2039, %v1449
        %v2041 = vpop.permute.xlu0 %2040
        %2044 = vset.pattern.permute.xlu0 0
        %2045 = vperm.xlu0 %2044, %v1450
        %v2046 = vpop.permute.xlu0 %2045
        %v2048 = vadd.f32 %v2034, %v2041
        %v2049 = vadd.f32 %v2035, %v2041
        %v2050 = vadd.f32 %v2036, %v2046
        %v2051 = vadd.f32 %v2037, %v2046
        %v2052 = vxor.u32 %v2048, 2147483648
        %v2053 = vxor.u32 %v2049, 2147483648
        %v2054 = vxor.u32 %v2050, 2147483648
        %v2055 = vxor.u32 %v2051, 2147483648
        %v2056 = vmul.f32 %v2052, 1.442695
        %v2057 = vpow.pop %v2056
        %v2058 = vmul.f32 %v2053, 1.442695
        %v2059 = vpow.pop %v2058
        %v2060 = vmul.f32 %v2054, 1.442695
        %v2061 = vpow.pop %v2060
        %v2062 = vmul.f32 %v2055, 1.442695
        %v2063 = vpow.pop %v2062
        %v2064 = vadd.f32 %v2057, 1.0
        %v2065 = vadd.f32 %v2059, 1.0
        %v2066 = vadd.f32 %v2061, 1.0
        %v2067 = vadd.f32 %v2063, 1.0
        %v2068 = vrcp.pop %v2064
        %v2069 = vmul.f32 1.0, %v2068
        %v2070 = vrcp.pop %v2065
        %v2071 = vmul.f32 1.0, %v2070
        %v2072 = vrcp.pop %v2066
        %v2073 = vmul.f32 1.0, %v2072
        %v2074 = vrcp.pop %v2067
        %v2075 = vmul.f32 1.0, %v2074
        %v2076 = vmul.f32 %v2048, %v2069
        %v2077 = vmul.f32 %v2049, %v2071
        %v2078 = vmul.f32 %v2050, %v2073
        %v2079 = vmul.f32 %v2051, %v2075
        %v2080 = vld [vmem:[%s12] sm:$0xff]
        %v2081 = vld [vmem:[%s12 + $0x8] sm:$0xff]
        %2082 = vrot.lane.b32.xlu0 %v2076, 16
        %v2083 = vpop.permute.xlu0 %2082
        %2084 = vrot.lane.b32.xlu0 %v2078, 16
        %v2085 = vpop.permute.xlu0 %2084
        %2086 = vrot.lane.b32.xlu0 %v2077, 16
        %v2087 = vpop.permute.xlu0 %2086
        %2088 = vrot.lane.b32.xlu0 %v2079, 16
        %v2089 = vpop.permute.xlu0 %2088
        %v2090 = vsel %vm1039, %v2083, %v2087
        %v2091 = vsel %vm1039, %v2085, %v2089
        %v2092 = vsel %vm1039, %v2087, %v2083
        %v2093 = vsel %vm1039, %v2089, %v2085
        %v2094 = vmul.f32 %v2092, %v1056
        %v2095 = vmul.f32 %v2090, %v1060
        %v2096 = vmul.f32 %v2093, %v1056
        %v2097 = vmul.f32 %v2091, %v1060
        %2098 = vrot.lane.b32.xlu0 %v2094, 1
        %v2099 = vpop.permute.xlu0 %2098
        %2100 = vrot.lane.b32.xlu0 %v2096, 1
        %v2101 = vpop.permute.xlu0 %2100
        %2102 = vrot.lane.b32.xlu0 %v2095, 1
        %v2103 = vpop.permute.xlu0 %2102
        %2104 = vrot.lane.b32.xlu0 %v2097, 1
        %v2105 = vpop.permute.xlu0 %2104
        %v2106 = vsel %vm1067, %v2099, %v2103
        %v2107 = vsel %vm1067, %v2101, %v2105
        %v2108 = vsel %vm1067, %v2103, %v2099
        %v2109 = vsel %vm1067, %v2105, %v2101
        %v2110 = vmul.f32 %v2108, %v1083
        %v2111 = vmul.f32 %v2106, %v1087
        %v2112 = vmul.f32 %v2109, %v1083
        %v2113 = vmul.f32 %v2107, %v1087
        %v2114 = vpack.c.bf16 %v2112, %v2110
        %v2115 = vpack.c.bf16 %v2113, %v2111
        %v2116 = vpack.c.bf16 %v2096, %v2094
        %v2117 = vpack.c.bf16 %v2097, %v2095
        %2118 = vrot.lane.b32.xlu0 %v2094, 127
        %v2119 = vpop.permute.xlu0 %2118
        %2120 = vrot.lane.b32.xlu0 %v2096, 127
        %v2121 = vpop.permute.xlu0 %2120
        %2122 = vrot.lane.b32.xlu0 %v2095, 127
        %v2123 = vpop.permute.xlu0 %2122
        %2124 = vrot.lane.b32.xlu0 %v2097, 127
        %v2125 = vpop.permute.xlu0 %2124
        %v2126 = vsel %vm1098, %v2119, %v2123
        %v2127 = vsel %vm1098, %v2121, %v2125
        %v2128 = vsel %vm1098, %v2123, %v2119
        %v2129 = vsel %vm1098, %v2125, %v2121
        %v2130 = vmul.f32 %v2126, %v1114
        %v2131 = vmul.f32 %v2128, %v1118
        %v2132 = vmul.f32 %v2127, %v1114
        %v2133 = vmul.f32 %v2129, %v1118
        %v2134 = vpack.c.bf16 %v2132, %v2130
        %v2135 = vpack.c.bf16 %v2133, %v2131
        %v2136 = vld [vmem:[%s11] sm:$0xf]
        %v2137 = vld [vmem:[%s11 + $0x4] sm:$0xf]
        %2138 = vrot.lane.b32.xlu0 %v2076, 1
        %v2139 = vpop.permute.xlu0 %2138
        %2140 = vrot.lane.b32.xlu0 %v2078, 1
        %v2141 = vpop.permute.xlu0 %2140
        %2142 = vrot.lane.b32.xlu0 %v2077, 1
        %v2143 = vpop.permute.xlu0 %2142
        %2144 = vrot.lane.b32.xlu0 %v2079, 1
        %v2145 = vpop.permute.xlu0 %2144
        %v2146 = vsel %vm1067, %v2139, %v2143
        %v2147 = vsel %vm1067, %v2141, %v2145
        %v2148 = vsel %vm1067, %v2143, %v2139
        %v2149 = vsel %vm1067, %v2145, %v2141
        %v2150 = vmul.f32 %v2148, %v1083
        %v2151 = vmul.f32 %v2146, %v1087
        %v2152 = vmul.f32 %v2149, %v1083
        %v2153 = vmul.f32 %v2147, %v1087
        %v2154 = vpack.c.bf16 %v2152, %v2150
        %v2155 = vpack.c.bf16 %v2153, %v2151
        %v2156 = vpack.c.bf16 %v2078, %v2076
        %v2157 = vpack.c.bf16 %v2079, %v2077
        %2158 = vrot.lane.b32.xlu0 %v2076, 127
        %v2159 = vpop.permute.xlu0 %2158
        %2160 = vrot.lane.b32.xlu0 %v2078, 127
        %v2161 = vpop.permute.xlu0 %2160
        %2162 = vrot.lane.b32.xlu0 %v2077, 127
        %v2163 = vpop.permute.xlu0 %2162
        %2164 = vrot.lane.b32.xlu0 %v2079, 127
        %v2165 = vpop.permute.xlu0 %2164
        %v2166 = vsel %vm1098, %v2159, %v2163
        %v2167 = vsel %vm1098, %v2161, %v2165
        %v2168 = vsel %vm1098, %v2163, %v2159
        %v2169 = vsel %vm1098, %v2165, %v2161
        %v2170 = vmul.f32 %v2166, %v1114
        %v2171 = vmul.f32 %v2168, %v1118
        %v2172 = vmul.f32 %v2167, %v1114
        %v2173 = vmul.f32 %v2169, %v1118
        %v2174 = vpack.c.bf16 %v2172, %v2170
        %v2175 = vpack.c.bf16 %v2173, %v2171
        %s2176 = scalar_lea.vmem %s11, 8
        %v2177 = vld [vmem:[%s2176] sm:$0xf]
        %v2178 = vld [vmem:[%s2176 + $0x4] sm:$0xf]
        %v2181 = vunpack.c.l.b16 %v2177
        %v2182 = vunpack.c.l.b16 %v2178
        %v2183 = vpack.c.b16 %v2182, %v2181
        %vm2184 = vcmask 392192
        %v2186 = vsel %vm2184, %v2183, 0
        %2188 = vmatprep.subr.bf16.mxu0 0
        %2189 = vmatpush1.bf16.msra.mxu0 0
        %2190 = vmatprep.subr.bf16.mxu0 0
        %2191 = vmatpush1.bf16.msra.mxu0 0
        %2192 = vmatprep.subr.bf16.mxu0 0
        %2193 = vmatpush1.bf16.msra.mxu0 0
        %2194 = vmatprep.subr.bf16.mxu0 0
        %2195 = vmatpush1.bf16.msra.mxu0 0
        %2196 = vmatprep.subr.bf16.mxu0 0
        %2197 = vmatpush1.bf16.msra.mxu0 0
        %2198 = vmatprep.subr.bf16.mxu0 %v2175
        %2199 = vmatpush1.bf16.msra.mxu0 %v2174
        %2200 = vmatprep.subr.bf16.mxu0 %v2157
        %2201 = vmatpush1.bf16.msra.mxu0 %v2156
        %2202 = vmatprep.subr.bf16.mxu0 %v2155
        %2203 = vmatpush1.bf16.msra.mxu0 %v2154
        %2204 = vmatprep.subr.bf16.mxu0 0
        %2205 = vmatpush2.bf16.msra.mxu0 0
        %2206 = vmatprep.subr.bf16.mxu0 0
        %2207 = vmatpush2.bf16.msra.mxu0 0
        %2208 = vmatprep.subr.bf16.mxu0 0
        %2209 = vmatpush2.bf16.msra.mxu0 0
        %2210 = vmatprep.subr.bf16.mxu0 0
        %2211 = vmatpush2.bf16.msra.mxu0 0
        %2212 = vmatprep.subr.bf16.mxu0 0
        %2213 = vmatpush2.bf16.msra.mxu0 0
        %2214 = vmatprep.subr.bf16.mxu0 0
        %2215 = vmatpush2.bf16.msra.mxu0 0
        %2216 = vmatprep.subr.bf16.mxu0 0
        %2217 = vmatpush2.bf16.msra.mxu0 0
        %2218 = vmatprep.subr.bf16.mxu0 0
        %2219 = vmatpush2.bf16.msra.mxu0 0
        %2220 = vmatprep.mubr.bf16.mxu0 0
        %2221 = vmatmul.mubr.bf16.gmra.mxu0 %v2186
        %v2222 = vpop.f32.mrf.mxu0
        %v2223 = vadd.f32 0.0, %v2222
        %v2224 = vpop.f32.mrf.mxu0
        %v2225 = vadd.f32 0.0, %v2224
        %v2226 = vpop.f32.mrf.mxu0
        %v2227 = vadd.f32 0.0, %v2226
        %v2228 = vpop.f32.mrf.mxu0
        %v2229 = vadd.f32 0.0, %v2228
        %2230 = vdwg.mxu0
        %v2233 = vunpack.c.l.b16 %v2136
        %v2234 = vunpack.c.l.b16 %v2137
        %v2235 = vpack.c.b16 %v2234, %v2233
        %v2237 = vsel %vm2184, %v2235, 0
        %2239 = vmatprep.subr.bf16.mxu0 0
        %2240 = vmatpush1.bf16.msra.mxu0 0
        %2241 = vmatprep.subr.bf16.mxu0 0
        %2242 = vmatpush1.bf16.msra.mxu0 0
        %2243 = vmatprep.subr.bf16.mxu0 0
        %2244 = vmatpush1.bf16.msra.mxu0 0
        %2245 = vmatprep.subr.bf16.mxu0 0
        %2246 = vmatpush1.bf16.msra.mxu0 0
        %2247 = vmatprep.subr.bf16.mxu0 0
        %2248 = vmatpush1.bf16.msra.mxu0 0
        %2249 = vmatprep.subr.bf16.mxu0 %v2135
        %2250 = vmatpush1.bf16.msra.mxu0 %v2134
        %2251 = vmatprep.subr.bf16.mxu0 %v2117
        %2252 = vmatpush1.bf16.msra.mxu0 %v2116
        %2253 = vmatprep.subr.bf16.mxu0 %v2115
        %2254 = vmatpush1.bf16.msra.mxu0 %v2114
        %2255 = vmatprep.subr.bf16.mxu0 0
        %2256 = vmatpush2.bf16.msra.mxu0 0
        %2257 = vmatprep.subr.bf16.mxu0 0
        %2258 = vmatpush2.bf16.msra.mxu0 0
        %2259 = vmatprep.subr.bf16.mxu0 0
        %2260 = vmatpush2.bf16.msra.mxu0 0
        %2261 = vmatprep.subr.bf16.mxu0 0
        %2262 = vmatpush2.bf16.msra.mxu0 0
        %2263 = vmatprep.subr.bf16.mxu0 0
        %2264 = vmatpush2.bf16.msra.mxu0 0
        %2265 = vmatprep.subr.bf16.mxu0 0
        %2266 = vmatpush2.bf16.msra.mxu0 0
        %2267 = vmatprep.subr.bf16.mxu0 0
        %2268 = vmatpush2.bf16.msra.mxu0 0
        %2269 = vmatprep.subr.bf16.mxu0 0
        %2270 = vmatpush2.bf16.msra.mxu0 0
        %2271 = vmatprep.mubr.bf16.mxu0 0
        %2272 = vmatmul.mubr.bf16.gmra.mxu0 %v2237
        %v2273 = vpop.f32.mrf.mxu0
        %v2274 = vadd.f32 %v2223, %v2273
        %v2275 = vpop.f32.mrf.mxu0
        %v2276 = vadd.f32 %v2225, %v2275
        %v2277 = vpop.f32.mrf.mxu0
        %v2278 = vadd.f32 %v2227, %v2277
        %v2279 = vpop.f32.mrf.mxu0
        %v2280 = vadd.f32 %v2229, %v2279
        %2281 = vdwg.mxu0
        %2282 = vrot.lane.b32.xlu0 %v2076, 112
        %v2283 = vpop.permute.xlu0 %2282
        %2284 = vrot.lane.b32.xlu0 %v2078, 112
        %v2285 = vpop.permute.xlu0 %2284
        %2286 = vrot.lane.b32.xlu0 %v2077, 112
        %v2287 = vpop.permute.xlu0 %2286
        %2288 = vrot.lane.b32.xlu0 %v2079, 112
        %v2289 = vpop.permute.xlu0 %2288
        %v2290 = vsel %vm1294, %v2283, %v2287
        %v2291 = vsel %vm1294, %v2285, %v2289
        %v2292 = vsel %vm1294, %v2287, %v2283
        %v2293 = vsel %vm1294, %v2289, %v2285
        %v2294 = vmul.f32 %v2290, %v1310
        %v2295 = vmul.f32 %v2292, %v1314
        %v2296 = vmul.f32 %v2291, %v1310
        %v2297 = vmul.f32 %v2293, %v1314
        %2298 = vrot.lane.b32.xlu0 %v2294, 1
        %v2299 = vpop.permute.xlu0 %2298
        %2300 = vrot.lane.b32.xlu0 %v2296, 1
        %v2301 = vpop.permute.xlu0 %2300
        %2302 = vrot.lane.b32.xlu0 %v2295, 1
        %v2303 = vpop.permute.xlu0 %2302
        %2304 = vrot.lane.b32.xlu0 %v2297, 1
        %v2305 = vpop.permute.xlu0 %2304
        %v2306 = vsel %vm1067, %v2299, %v2303
        %v2307 = vsel %vm1067, %v2301, %v2305
        %v2308 = vsel %vm1067, %v2303, %v2299
        %v2309 = vsel %vm1067, %v2305, %v2301
        %v2310 = vmul.f32 %v2308, %v1083
        %v2311 = vmul.f32 %v2306, %v1087
        %v2312 = vmul.f32 %v2309, %v1083
        %v2313 = vmul.f32 %v2307, %v1087
        %v2314 = vpack.c.bf16 %v2312, %v2310
        %v2315 = vpack.c.bf16 %v2313, %v2311
        %v2316 = vpack.c.bf16 %v2296, %v2294
        %v2317 = vpack.c.bf16 %v2297, %v2295
        %2318 = vrot.lane.b32.xlu0 %v2294, 127
        %v2319 = vpop.permute.xlu0 %2318
        %2320 = vrot.lane.b32.xlu0 %v2296, 127
        %v2321 = vpop.permute.xlu0 %2320
        %2322 = vrot.lane.b32.xlu0 %v2295, 127
        %v2323 = vpop.permute.xlu0 %2322
        %2324 = vrot.lane.b32.xlu0 %v2297, 127
        %v2325 = vpop.permute.xlu0 %2324
        %v2326 = vsel %vm1098, %v2319, %v2323
        %v2327 = vsel %vm1098, %v2321, %v2325
        %v2328 = vsel %vm1098, %v2323, %v2319
        %v2329 = vsel %vm1098, %v2325, %v2321
        %v2330 = vmul.f32 %v2326, %v1114
        %v2331 = vmul.f32 %v2328, %v1118
        %v2332 = vmul.f32 %v2327, %v1114
        %v2333 = vmul.f32 %v2329, %v1118
        %v2334 = vpack.c.bf16 %v2332, %v2330
        %v2335 = vpack.c.bf16 %v2333, %v2331
        %s2336 = scalar_lea.vmem %s11, 16
        %v2337 = vld [vmem:[%s2336] sm:$0xf]
        %v2338 = vld [vmem:[%s2336 + $0x4] sm:$0xf]
        %v2341 = vunpack.c.l.b16 %v2337
        %v2342 = vunpack.c.l.b16 %v2338
        %v2343 = vpack.c.b16 %v2342, %v2341
        %v2345 = vsel %vm2184, %v2343, 0
        %2347 = vmatprep.subr.bf16.mxu0 0
        %2348 = vmatpush1.bf16.msra.mxu0 0
        %2349 = vmatprep.subr.bf16.mxu0 0
        %2350 = vmatpush1.bf16.msra.mxu0 0
        %2351 = vmatprep.subr.bf16.mxu0 0
        %2352 = vmatpush1.bf16.msra.mxu0 0
        %2353 = vmatprep.subr.bf16.mxu0 0
        %2354 = vmatpush1.bf16.msra.mxu0 0
        %2355 = vmatprep.subr.bf16.mxu0 0
        %2356 = vmatpush1.bf16.msra.mxu0 0
        %2357 = vmatprep.subr.bf16.mxu0 %v2335
        %2358 = vmatpush1.bf16.msra.mxu0 %v2334
        %2359 = vmatprep.subr.bf16.mxu0 %v2317
        %2360 = vmatpush1.bf16.msra.mxu0 %v2316
        %2361 = vmatprep.subr.bf16.mxu0 %v2315
        %2362 = vmatpush1.bf16.msra.mxu0 %v2314
        %2363 = vmatprep.subr.bf16.mxu0 0
        %2364 = vmatpush2.bf16.msra.mxu0 0
        %2365 = vmatprep.subr.bf16.mxu0 0
        %2366 = vmatpush2.bf16.msra.mxu0 0
        %2367 = vmatprep.subr.bf16.mxu0 0
        %2368 = vmatpush2.bf16.msra.mxu0 0
        %2369 = vmatprep.subr.bf16.mxu0 0
        %2370 = vmatpush2.bf16.msra.mxu0 0
        %2371 = vmatprep.subr.bf16.mxu0 0
        %2372 = vmatpush2.bf16.msra.mxu0 0
        %2373 = vmatprep.subr.bf16.mxu0 0
        %2374 = vmatpush2.bf16.msra.mxu0 0
        %2375 = vmatprep.subr.bf16.mxu0 0
        %2376 = vmatpush2.bf16.msra.mxu0 0
        %2377 = vmatprep.subr.bf16.mxu0 0
        %2378 = vmatpush2.bf16.msra.mxu0 0
        %2379 = vmatprep.mubr.bf16.mxu0 0
        %2380 = vmatmul.mubr.bf16.gmra.mxu0 %v2345
        %v2381 = vpop.f32.mrf.mxu0
        %v2382 = vadd.f32 0.0, %v2381
        %v2383 = vpop.f32.mrf.mxu0
        %v2384 = vadd.f32 0.0, %v2383
        %v2385 = vpop.f32.mrf.mxu0
        %v2386 = vadd.f32 0.0, %v2385
        %v2387 = vpop.f32.mrf.mxu0
        %v2388 = vadd.f32 0.0, %v2387
        %2389 = vdwg.mxu0
        %v2390 = vadd.f32 %v2274, %v2382
        %v2391 = vadd.f32 %v2276, %v2384
        %v2392 = vadd.f32 %v2278, %v2386
        %v2393 = vadd.f32 %v2280, %v2388
        %2395 = vset.pattern.permute.xlu0 0
        %2396 = vperm.xlu0 %2395, %v2080
        %v2397 = vpop.permute.xlu0 %2396
        %2400 = vset.pattern.permute.xlu0 0
        %2401 = vperm.xlu0 %2400, %v2081
        %v2402 = vpop.permute.xlu0 %2401
        %v2404 = vadd.f32 %v2390, %v2397
        %v2405 = vadd.f32 %v2391, %v2397
        %v2406 = vadd.f32 %v2392, %v2402
        %v2407 = vadd.f32 %v2393, %v2402
        %v2408 = vld [vmem:[%s13] sm:$0xf]
        %v2409 = vld [vmem:[%s13 + $0x4] sm:$0xf]
        %v2410 = vpack.c.bf16 %v514, %v514
        %v2411 = vpack.c.bf16 %v515, %v515
        %v2412 = vld [vmem:[%s14] sm:$0xff]
        %v2413 = vld [vmem:[%s14 + $0x8] sm:$0xff]
        %2415 = vset.pattern.permute.xlu0 0
        %2416 = vperm.xlu0 %2415, %v2412
        %v2417 = vpop.permute.xlu0 %2416
        %2420 = vset.pattern.permute.xlu0 0
        %2421 = vperm.xlu0 %2420, %v2413
        %v2422 = vpop.permute.xlu0 %2421
        %v2426 = vunpack.c.l.b16 %v2408
        %v2427 = vunpack.c.l.b16 %v2409
        %v2428 = vpack.c.b16 %v2427, %v2426
        %v2430 = vsel %vm530, %v2428, 0
        %v2433 = vsel %vm1127, %v2410, 0
        %v2436 = vsel %vm1127, %v2411, 0
        %2438 = vmatprep.subr.bf16.mxu0 0
        %2439 = vmatpush1.bf16.msra.mxu0 0
        %2440 = vmatprep.subr.bf16.mxu0 0
        %2441 = vmatpush1.bf16.msra.mxu0 0
        %2442 = vmatprep.subr.bf16.mxu0 0
        %2443 = vmatpush1.bf16.msra.mxu0 0
        %2444 = vmatprep.subr.bf16.mxu0 0
        %2445 = vmatpush1.bf16.msra.mxu0 0
        %2446 = vmatprep.subr.bf16.mxu0 0
        %2447 = vmatpush1.bf16.msra.mxu0 0
        %2448 = vmatprep.subr.bf16.mxu0 0
        %2449 = vmatpush1.bf16.msra.mxu0 0
        %2450 = vmatprep.subr.bf16.mxu0 0
        %2451 = vmatpush1.bf16.msra.mxu0 0
        %2452 = vmatprep.subr.bf16.mxu0 %v2436
        %2453 = vmatpush1.bf16.msra.mxu0 %v2433
        %2454 = vmatprep.subr.bf16.mxu0 0
        %2455 = vmatpush2.bf16.msra.mxu0 0
        %2456 = vmatprep.subr.bf16.mxu0 0
        %2457 = vmatpush2.bf16.msra.mxu0 0
        %2458 = vmatprep.subr.bf16.mxu0 0
        %2459 = vmatpush2.bf16.msra.mxu0 0
        %2460 = vmatprep.subr.bf16.mxu0 0
        %2461 = vmatpush2.bf16.msra.mxu0 0
        %2462 = vmatprep.subr.bf16.mxu0 0
        %2463 = vmatpush2.bf16.msra.mxu0 0
        %2464 = vmatprep.subr.bf16.mxu0 0
        %2465 = vmatpush2.bf16.msra.mxu0 0
        %2466 = vmatprep.subr.bf16.mxu0 0
        %2467 = vmatpush2.bf16.msra.mxu0 0
        %2468 = vmatprep.subr.bf16.mxu0 0
        %2469 = vmatpush2.bf16.msra.mxu0 0
        %2470 = vmatprep.mubr.bf16.mxu0 0
        %2471 = vmatmul.mubr.bf16.gmra.mxu0 %v2430
        %v2472 = vpop.f32.mrf.mxu0
        %v2473 = vadd.f32 %v2417, %v2472
        %v2474 = vpop.f32.mrf.mxu0
        %v2475 = vadd.f32 %v2417, %v2474
        %v2476 = vpop.f32.mrf.mxu0
        %v2477 = vadd.f32 %v2422, %v2476
        %v2478 = vpop.f32.mrf.mxu0
        %v2479 = vadd.f32 %v2422, %v2478
        %2480 = vdwg.mxu0
        %v2481 = vadd.f32 %v2473, %v2404
        %v2482 = vadd.f32 %v2475, %v2405
        %v2483 = vadd.f32 %v2477, %v2406
        %v2484 = vadd.f32 %v2479, %v2407
        %2485 = vst [vmem:[%s502] sm:$0xff] %v2481
        %2486 = vst [vmem:[%s502 + $0x8] sm:$0xff] %v2482
        %2487 = vst [vmem:[%s502 + $0x10] sm:$0xff] %v2483
        %2488 = vst [vmem:[%s502 + $0x18] sm:$0xff] %v2484
        %s2489 = sand.u32 %s362, 1
        %s2490 = scalar_lea.sflag [#allocation3], %s2489
        %s2491 = sand.u32 %s362, 1
        %s2492 = smul.addr %s2491, 32
        %s2493 = scalar_lea.vmem [#allocation2], %s2492
        // Predicated region
        $region81: #{tpu_custom_call.1} parent=79 // pred_check
          %p2494 = pneg %p372
        $region82: #{tpu_custom_call.1} parent=79 // pred_check_branch
          %2496 = sbr.rel (%p2494) target = $region84
        $region83: #{tpu_custom_call.1} parent=79 // pred_region
          %s2498 = ssub.s32 512, 512
          %2499 = vsyncadd %s2490, %s2498
          %s2500 = smul.addr %s29, 4
          %s2501 = smul.addr %s2500, 128
          %s2502 = scalar_lea.hbm %s15, %s2501
          %s2503 = sshll.u32 %s2493, 4
          %s2504 = int_to_ptr.vmem [resolvable:$true] %s2503
          %2509 = dma.vmem_to_hbm [thread:$0]  %s2504, 512, %s2502, %s2490, 256, 256, 16
        $region84: #{tpu_custom_call.1} parent=79 // pred_fallthru
          _
      $region80: #{tpu_custom_call.1} parent=5 // pred_fallthru
        _
      %p2510 = scmp.le.s32.totalorder 2, %s24
      // Predicated region
      $region85: #{tpu_custom_call.1} parent=5 // pred_check
        %p2511 = pneg %p2510
      $region86: #{tpu_custom_call.1} parent=5 // pred_check_branch
        %2513 = sbr.rel (%p2511) target = $region88
      $region87: #{tpu_custom_call.1} parent=5 // pred_region
        %s2514 = ssub.s32 %s24, 2
        // Predicated region
        $region89: #{tpu_custom_call.1} parent=87 // pred_check
          %p2515 = pneg %p378
        $region90: #{tpu_custom_call.1} parent=87 // pred_check_branch
          %2517 = sbr.rel (%p2515) target = $region92
        $region91: #{tpu_custom_call.1} parent=87 // pred_region
          %s2518 = sand.u32 %s363, 1
          %s2519 = scalar_lea.sflag [#allocation3], %s2518
          %s2520 = sand.u32 %s363, 1
          %s2521 = smul.addr %s2520, 32
          %s2522 = scalar_lea.vmem [#allocation2], %s2521
          %2523 = dma.done %s2519, 512
        $region92: #{tpu_custom_call.1} parent=87 // pred_fallthru
          _
      $region88: #{tpu_custom_call.1} parent=5 // pred_fallthru
        _
    $region6: #{tpu_custom_call.1} parent=1 // loop_footer
      %s28 = sadd.s32 1, %s24
    $region7: #{tpu_custom_call.1} parent=1 // loop_footer_branch
      %23 = sbr.rel target = $region3
    $region8: #{tpu_custom_call.1} parent=1 // loop_exit
      _
    %2524 = vsyncpa [#allocation3], 1
    %s2525 = scalar_lea.sflag [#allocation3], 1
    %2526 = vsyncpa %s2525, 1

</llo_original>
